<compile_context>
chip_gen: v7x
topology: tpu7x:2x2x1
jax: 0.10.0
libtpu: 0.0.40
codegen_flags: <defaults>
</compile_context>

<pallas_src>
import functools

import jax
import jax.numpy as jnp
from jax.experimental import pallas as pl
from jax.experimental.pallas import tpu as pltpu

LANE = 128      # lane width: src / contraction dim padding
SUBLANE = 8     # f32 sublane width: dst-row padding


def _round_up(n, m):
    return ((n + m - 1) // m) * m


# ----------------------------- Pallas kernel --------------------------------
def _rgcn_fused_kernel(num_layers, num_rel, emb_dim, n_dst,
                       x_ref, adj_ref, w_ref, b_ref, out_ref, x_scr, h_ref):
    """All RGCN layers fused; every operand is resident in VMEM (no grid).

    x_ref:   (Ns, D)            node features, rows >= N are zero padding
    adj_ref: (R, Nd, Ns)        dense adjacency per relation, A_r[dst, src]
    w_ref:   (L, (R+1)*D, D)    per layer: vstack([W_root, W_1, ..., W_R])
    b_ref:   (L, 1, D)          per-layer bias (f32)
    out_ref: (Nd, D)            f32 output
    x_scr:   (Ns, D)            carried features (rows >= Nd stay zero forever)
    h_ref:   (Nd, (R+1)*D)      stacked features [x | A_1@x | ... | A_R@x]
    """
    D = emb_dim
    R = num_rel

    x_scr[...] = x_ref[...]

    # L is small (3): static unroll.  Switch to lax.fori_loop with a dynamic
    # w_ref[l] index if num_layers grows beyond ~4.
    for l in range(num_layers):
        # Root-term columns, then each relation's aggregation matmul lands
        # directly in its scratch column block (no (R*Nd, D) temporary).
        h_ref[:, :D] = x_scr[:n_dst, :]
        for r in range(R):
            h_ref[:, (r + 1) * D:(r + 2) * D] = jnp.dot(
                adj_ref[r], x_scr[...],
                preferred_element_type=jnp.float32).astype(h_ref.dtype)

        # One (R+1)*D-wide-contraction transform; root transform + bias fused.
        out = jnp.dot(h_ref[...], w_ref[l],
                      preferred_element_type=jnp.float32) + b_ref[l]

        # leaky_relu(negative_slope=0.01)
        act = jnp.maximum(out, 0.01 * out)

        if l == num_layers - 1:
            out_ref[...] = act.astype(out_ref.dtype)
        else:
            x_scr[:n_dst, :] = act.astype(x_scr.dtype)


# ------------------------- Host-side preparation -----------------------------
def prepare_rgcn_params(params, compute_dtype=jnp.bfloat16):
    """Hoisted once per parameter set: stack per-layer weights for the fused
    wide-contraction matmul and cast to the MXU compute dtype."""
    D = params["node2emb"].shape[1]
    w_all = jnp.stack(
        [jnp.concatenate([lyr["root"][None], lyr["weight"]], axis=0).reshape(-1, D)
         for lyr in params["layers"]], axis=0).astype(compute_dtype)   # (L,(R+1)*D,D)
    b_all = jnp.stack([lyr["bias"].reshape(1, D) for lyr in params["layers"]],
                      axis=0).astype(jnp.float32)                      # (L,1,D)
    return {"node2emb": params["node2emb"], "w_all": w_all, "b_all": b_all}


def build_stacked_adjacency(edge_index, edge_type, num_nodes, num_edge_types,
                            compute_dtype=jnp.bfloat16):
    """Hoisted once per static graph: dense per-relation adjacency A_r[dst, src].
    dst rows padded to a sublane multiple, src cols padded to a lane multiple.
    (PyG convention: edge_index[0]=source, edge_index[1]=target; aggr='add'.)"""
    n_dst = max(_round_up(num_nodes, SUBLANE), SUBLANE)
    n_src = max(_round_up(num_nodes, LANE), LANE)
    src, dst = edge_index[0], edge_index[1]
    adj = jnp.zeros((num_edge_types, n_dst, n_src), jnp.float32)
    adj = adj.at[edge_type, dst, src].add(1.0)
    # NOTE: edge multiplicities are exact in bf16 only up to 256 per (r,dst,src).
    return adj.astype(compute_dtype)


def rgcn_forward_pallas(prep, node_type, adj_stacked):
    """Full RGCN forward (embedding lookup + all conv layers) in one pallas_call."""
    num_nodes = node_type.shape[0]
    emb = prep["node2emb"]
    w_all, b_all = prep["w_all"], prep["b_all"]
    cdtype = w_all.dtype
    D = emb.shape[1]
    L = w_all.shape[0]
    R, n_dst, n_src = adj_stacked.shape
    adj_stacked = adj_stacked.astype(cdtype)

    # Glue (plain JAX): embedding lookup, zero-padded to n_src rows.
    x0 = emb[node_type].astype(cdtype)
    x0 = jnp.zeros((n_src, D), cdtype).at[:num_nodes].set(x0)

    kernel = functools.partial(_rgcn_fused_kernel, L, R, D, n_dst)
    vmem = pl.BlockSpec(memory_space=pltpu.MemorySpace.VMEM)
    out = pl.pallas_call(
        kernel,
        out_shape=jax.ShapeDtypeStruct((n_dst, D), jnp.float32),
        in_specs=[vmem, vmem, vmem, vmem],
        out_specs=vmem,
        scratch_shapes=[pltpu.VMEM((n_src, D), cdtype),
                        pltpu.VMEM((n_dst, (R + 1) * D), cdtype)],
    )(x0, adj_stacked, w_all, b_all)
    return out[:num_nodes]


# ------------------------------- Params --------------------------------------
def init_rgcn_params(key, num_node_types, num_edge_types, emb_dim, num_layers):
    keys = jax.random.split(key, 1 + 3 * num_layers)
    params = {"node2emb": jax.random.normal(keys[0], (num_node_types, emb_dim),
                                            dtype=jnp.float32)}
    scale = 1.0 / jnp.sqrt(jnp.float32(emb_dim))
    layers = []
    for l in range(num_layers):
        kw, kr, kb = keys[1 + 3 * l: 4 + 3 * l]
        layers.append({
            "weight": scale * jax.random.normal(
                kw, (num_edge_types, emb_dim, emb_dim), dtype=jnp.float32),
            "root": scale * jax.random.normal(
                kr, (emb_dim, emb_dim), dtype=jnp.float32),
            "bias": 0.01 * jax.random.normal(kb, (emb_dim,), dtype=jnp.float32),
        })
    params["layers"] = layers
    return params


# ------------------------------- Reference ----------------------------------
def rgcn_forward_ref(params, node_type, edge_index, edge_type, num_edge_types):
    num_nodes = node_type.shape[0]
    x = params["node2emb"][node_type]
    src, dst = edge_index[0], edge_index[1]
    adj = jnp.zeros((num_edge_types, num_nodes, num_nodes),
                    jnp.float32).at[edge_type, dst, src].add(1.0)
    for layer in params["layers"]:
        out = x @ layer["root"] + layer["bias"]
        out = out + jnp.einsum("rnm,md,rde->ne", adj, x, layer["weight"])
        x = jnp.where(out >= 0, out, 0.01 * out)
    return x


# --------------------------------- Main --------------------------------------
if __name__ == "__main__":
    NUM_NODE_TYPES = 8
    NUM_EDGE_TYPES = 4
    EMB_DIM = 128
    NUM_LAYERS = 3
    NUM_NODES = 64
    NUM_EDGES = 256

    key = jax.random.PRNGKey(0)
    k_param, k_nt, k_ei, k_et = jax.random.split(key, 4)

    params = init_rgcn_params(k_param, NUM_NODE_TYPES, NUM_EDGE_TYPES,
                              EMB_DIM, NUM_LAYERS)

    node_type = jax.random.randint(k_nt, (NUM_NODES,), 0, NUM_NODE_TYPES)
    edge_index = jax.random.randint(k_ei, (2, NUM_EDGES), 0, NUM_NODES)
    edge_type = jax.random.randint(k_et, (NUM_EDGES,), 0, NUM_EDGE_TYPES)

    ref = rgcn_forward_ref(params, node_type, edge_index, edge_type,
                           NUM_EDGE_TYPES)

    fwd = jax.jit(rgcn_forward_pallas)

    # f32 path: bit-comparable to the f32 reference.
    prep_f32 = prepare_rgcn_params(params, compute_dtype=jnp.float32)
    adj_f32 = build_stacked_adjacency(edge_index, edge_type, NUM_NODES,
                                      NUM_EDGE_TYPES, compute_dtype=jnp.float32)
    out_f32 = jax.block_until_ready(fwd(prep_f32, node_type, adj_f32))
    assert out_f32.shape == (NUM_NODES, EMB_DIM)
    assert jnp.allclose(out_f32, ref, rtol=1e-4, atol=1e-4), "f32 mismatch vs reference"

    # bf16 MXU path (default / fast): ~3x MXU throughput, f32 accumulation.
    assert float(adj_f32.max()) <= 256.0, "edge multiplicity not exact in bf16"
    prep_bf16 = prepare_rgcn_params(params, compute_dtype=jnp.bfloat16)
    adj_bf16 = adj_f32.astype(jnp.bfloat16)
    out_bf16 = jax.block_until_ready(fwd(prep_bf16, node_type, adj_bf16))
    assert out_bf16.shape == (NUM_NODES, EMB_DIM)
    assert jnp.allclose(out_bf16.astype(jnp.float32), ref, rtol=1e-1, atol=2e-1), \
        "bf16 mismatch vs reference"

    print("KERNEL_OK")
</pallas_src>

<mosaic_0001>
module attributes {stable_mosaic.version = 11 : i64} {
  func.func @_rgcn_fused_kernel(%arg0: memref<128x128xf32, #tpu.memory_space<vmem>>, %arg1: memref<4x64x128xf32, #tpu.memory_space<vmem>>, %arg2: memref<3x640x128xf32, #tpu.memory_space<vmem>>, %arg3: memref<3x1x128xf32, #tpu.memory_space<vmem>>, %arg4: memref<64x128xf32, #tpu.memory_space<vmem>>, %arg5: memref<128x128xf32, #tpu.memory_space<vmem>>, %arg6: memref<64x640xf32, #tpu.memory_space<vmem>>) attributes {dimension_semantics = [], scalar_prefetch = 0 : i64, scratch_operands = 2 : i64, tpu.core_type = #tpu.core_type<tc>} {
    %c0 = arith.constant 0 : index
    %c0_0 = arith.constant 0 : index
    %0 = vector.load %arg0[%c0, %c0_0] : memref<128x128xf32, #tpu.memory_space<vmem>>, vector<128x128xf32>
    %c0_1 = arith.constant 0 : index
    %c0_2 = arith.constant 0 : index
    %1 = vector.load %arg5[%c0_1, %c0_2] : memref<128x128xf32, #tpu.memory_space<vmem>>, vector<128x128xf32>
    tpu.vector_store %arg5[%c0_1, %c0_2], %0 {strides = array<i32>} : memref<128x128xf32, #tpu.memory_space<vmem>>, vector<128x128xf32>,
    %c0_3 = arith.constant 0 : index
    %c0_4 = arith.constant 0 : index
    %2 = vector.load %arg5[%c0_3, %c0_4] : memref<128x128xf32, #tpu.memory_space<vmem>>, vector<64x128xf32>
    %c0_5 = arith.constant 0 : index
    %c0_6 = arith.constant 0 : index
    %3 = vector.load %arg6[%c0_5, %c0_6] : memref<64x640xf32, #tpu.memory_space<vmem>>, vector<64x128xf32>
    tpu.vector_store %arg6[%c0_5, %c0_6], %2 {strides = array<i32>} : memref<64x640xf32, #tpu.memory_space<vmem>>, vector<64x128xf32>,
    %c0_7 = arith.constant 0 : index
    %c0_8 = arith.constant 0 : index
    %c0_9 = arith.constant 0 : index
    %4 = vector.load %arg1[%c0_7, %c0_8, %c0_9] : memref<4x64x128xf32, #tpu.memory_space<vmem>>, vector<1x64x128xf32>
    %5 = vector.shape_cast %4 : vector<1x64x128xf32> to vector<64x128xf32>
    %c0_10 = arith.constant 0 : index
    %c0_11 = arith.constant 0 : index
    %6 = vector.load %arg5[%c0_10, %c0_11] : memref<128x128xf32, #tpu.memory_space<vmem>>, vector<128x128xf32>
    %cst = arith.constant dense<0.000000e+00> : vector<64x128xf32>
    %7 = tpu.matmul %5, %6, %cst {dimension_numbers = #tpu.dot_dimension_numbers<[1], [0], [0], [1], [0, 0, 1, 1], [], []>} : vector<64x128xf32>, vector<128x128xf32>, vector<64x128xf32> -> vector<64x128xf32>
    %c0_12 = arith.constant 0 : index
    %c128 = arith.constant 128 : index
    %8 = vector.load %arg6[%c0_12, %c128] : memref<64x640xf32, #tpu.memory_space<vmem>>, vector<64x128xf32>
    tpu.vector_store %arg6[%c0_12, %c128], %7 {strides = array<i32>} : memref<64x640xf32, #tpu.memory_space<vmem>>, vector<64x128xf32>,
    %c1 = arith.constant 1 : index
    %c0_13 = arith.constant 0 : index
    %c0_14 = arith.constant 0 : index
    %9 = vector.load %arg1[%c1, %c0_13, %c0_14] : memref<4x64x128xf32, #tpu.memory_space<vmem>>, vector<1x64x128xf32>
    %10 = vector.shape_cast %9 : vector<1x64x128xf32> to vector<64x128xf32>
    %c0_15 = arith.constant 0 : index
    %c0_16 = arith.constant 0 : index
    %11 = vector.load %arg5[%c0_15, %c0_16] : memref<128x128xf32, #tpu.memory_space<vmem>>, vector<128x128xf32>
    %cst_17 = arith.constant dense<0.000000e+00> : vector<64x128xf32>
    %12 = tpu.matmul %10, %11, %cst_17 {dimension_numbers = #tpu.dot_dimension_numbers<[1], [0], [0], [1], [0, 0, 1, 1], [], []>} : vector<64x128xf32>, vector<128x128xf32>, vector<64x128xf32> -> vector<64x128xf32>
    %c0_18 = arith.constant 0 : index
    %c256 = arith.constant 256 : index
    %13 = vector.load %arg6[%c0_18, %c256] : memref<64x640xf32, #tpu.memory_space<vmem>>, vector<64x128xf32>
    tpu.vector_store %arg6[%c0_18, %c256], %12 {strides = array<i32>} : memref<64x640xf32, #tpu.memory_space<vmem>>, vector<64x128xf32>,
    %c2 = arith.constant 2 : index
    %c0_19 = arith.constant 0 : index
    %c0_20 = arith.constant 0 : index
    %14 = vector.load %arg1[%c2, %c0_19, %c0_20] : memref<4x64x128xf32, #tpu.memory_space<vmem>>, vector<1x64x128xf32>
    %15 = vector.shape_cast %14 : vector<1x64x128xf32> to vector<64x128xf32>
    %c0_21 = arith.constant 0 : index
    %c0_22 = arith.constant 0 : index
    %16 = vector.load %arg5[%c0_21, %c0_22] : memref<128x128xf32, #tpu.memory_space<vmem>>, vector<128x128xf32>
    %cst_23 = arith.constant dense<0.000000e+00> : vector<64x128xf32>
    %17 = tpu.matmul %15, %16, %cst_23 {dimension_numbers = #tpu.dot_dimension_numbers<[1], [0], [0], [1], [0, 0, 1, 1], [], []>} : vector<64x128xf32>, vector<128x128xf32>, vector<64x128xf32> -> vector<64x128xf32>
    %c0_24 = arith.constant 0 : index
    %c384 = arith.constant 384 : index
    %18 = vector.load %arg6[%c0_24, %c384] : memref<64x640xf32, #tpu.memory_space<vmem>>, vector<64x128xf32>
    tpu.vector_store %arg6[%c0_24, %c384], %17 {strides = array<i32>} : memref<64x640xf32, #tpu.memory_space<vmem>>, vector<64x128xf32>,
    %c3 = arith.constant 3 : index
    %c0_25 = arith.constant 0 : index
    %c0_26 = arith.constant 0 : index
    %19 = vector.load %arg1[%c3, %c0_25, %c0_26] : memref<4x64x128xf32, #tpu.memory_space<vmem>>, vector<1x64x128xf32>
    %20 = vector.shape_cast %19 : vector<1x64x128xf32> to vector<64x128xf32>
    %c0_27 = arith.constant 0 : index
    %c0_28 = arith.constant 0 : index
    %21 = vector.load %arg5[%c0_27, %c0_28] : memref<128x128xf32, #tpu.memory_space<vmem>>, vector<128x128xf32>
    %cst_29 = arith.constant dense<0.000000e+00> : vector<64x128xf32>
    %22 = tpu.matmul %20, %21, %cst_29 {dimension_numbers = #tpu.dot_dimension_numbers<[1], [0], [0], [1], [0, 0, 1, 1], [], []>} : vector<64x128xf32>, vector<128x128xf32>, vector<64x128xf32> -> vector<64x128xf32>
    %c0_30 = arith.constant 0 : index
    %c512 = arith.constant 512 : index
    %23 = vector.load %arg6[%c0_30, %c512] : memref<64x640xf32, #tpu.memory_space<vmem>>, vector<64x128xf32>
    tpu.vector_store %arg6[%c0_30, %c512], %22 {strides = array<i32>} : memref<64x640xf32, #tpu.memory_space<vmem>>, vector<64x128xf32>,
    %c0_31 = arith.constant 0 : index
    %c0_32 = arith.constant 0 : index
    %24 = vector.load %arg6[%c0_31, %c0_32] : memref<64x640xf32, #tpu.memory_space<vmem>>, vector<64x640xf32>
    %c0_33 = arith.constant 0 : index
    %c0_34 = arith.constant 0 : index
    %c0_35 = arith.constant 0 : index
    %25 = vector.load %arg2[%c0_33, %c0_34, %c0_35] : memref<3x640x128xf32, #tpu.memory_space<vmem>>, vector<1x640x128xf32>
    %26 = vector.shape_cast %25 : vector<1x640x128xf32> to vector<640x128xf32>
    %cst_36 = arith.constant dense<0.000000e+00> : vector<64x128xf32>
    %27 = tpu.matmul %24, %26, %cst_36 {dimension_numbers = #tpu.dot_dimension_numbers<[1], [0], [0], [1], [0, 0, 1, 1], [], []>} : vector<64x640xf32>, vector<640x128xf32>, vector<64x128xf32> -> vector<64x128xf32>
    %c0_37 = arith.constant 0 : index
    %c0_38 = arith.constant 0 : index
    %c0_39 = arith.constant 0 : index
    %28 = vector.load %arg3[%c0_37, %c0_38, %c0_39] : memref<3x1x128xf32, #tpu.memory_space<vmem>>, vector<1x1x128xf32>
    %29 = vector.shape_cast %28 : vector<1x1x128xf32> to vector<1x128xf32>
    %30 = vector.broadcast %29 : vector<1x128xf32> to vector<64x128xf32>
    %31 = arith.addf %27, %30 : vector<64x128xf32>
    %cst_40 = arith.constant 0.00999999977 : f32
    %32 = vector.broadcast %cst_40 : f32 to vector<64x128xf32>
    %33 = arith.mulf %32, %31 : vector<64x128xf32>
    %34 = arith.maximumf %31, %33 : vector<64x128xf32>
    %c0_41 = arith.constant 0 : index
    %c0_42 = arith.constant 0 : index
    %35 = vector.load %arg5[%c0_41, %c0_42] : memref<128x128xf32, #tpu.memory_space<vmem>>, vector<64x128xf32>
    tpu.vector_store %arg5[%c0_41, %c0_42], %34 {strides = array<i32>} : memref<128x128xf32, #tpu.memory_space<vmem>>, vector<64x128xf32>,
    %c0_43 = arith.constant 0 : index
    %c0_44 = arith.constant 0 : index
    %36 = vector.load %arg5[%c0_43, %c0_44] : memref<128x128xf32, #tpu.memory_space<vmem>>, vector<64x128xf32>
    %c0_45 = arith.constant 0 : index
    %c0_46 = arith.constant 0 : index
    %37 = vector.load %arg6[%c0_45, %c0_46] : memref<64x640xf32, #tpu.memory_space<vmem>>, vector<64x128xf32>
    tpu.vector_store %arg6[%c0_45, %c0_46], %36 {strides = array<i32>} : memref<64x640xf32, #tpu.memory_space<vmem>>, vector<64x128xf32>,
    %c0_47 = arith.constant 0 : index
    %c0_48 = arith.constant 0 : index
    %c0_49 = arith.constant 0 : index
    %38 = vector.load %arg1[%c0_47, %c0_48, %c0_49] : memref<4x64x128xf32, #tpu.memory_space<vmem>>, vector<1x64x128xf32>
    %39 = vector.shape_cast %38 : vector<1x64x128xf32> to vector<64x128xf32>
    %c0_50 = arith.constant 0 : index
    %c0_51 = arith.constant 0 : index
    %40 = vector.load %arg5[%c0_50, %c0_51] : memref<128x128xf32, #tpu.memory_space<vmem>>, vector<128x128xf32>
    %cst_52 = arith.constant dense<0.000000e+00> : vector<64x128xf32>
    %41 = tpu.matmul %39, %40, %cst_52 {dimension_numbers = #tpu.dot_dimension_numbers<[1], [0], [0], [1], [0, 0, 1, 1], [], []>} : vector<64x128xf32>, vector<128x128xf32>, vector<64x128xf32> -> vector<64x128xf32>
    %c0_53 = arith.constant 0 : index
    %c128_54 = arith.constant 128 : index
    %42 = vector.load %arg6[%c0_53, %c128_54] : memref<64x640xf32, #tpu.memory_space<vmem>>, vector<64x128xf32>
    tpu.vector_store %arg6[%c0_53, %c128_54], %41 {strides = array<i32>} : memref<64x640xf32, #tpu.memory_space<vmem>>, vector<64x128xf32>,
    %c1_55 = arith.constant 1 : index
    %c0_56 = arith.constant 0 : index
    %c0_57 = arith.constant 0 : index
    %43 = vector.load %arg1[%c1_55, %c0_56, %c0_57] : memref<4x64x128xf32, #tpu.memory_space<vmem>>, vector<1x64x128xf32>
    %44 = vector.shape_cast %43 : vector<1x64x128xf32> to vector<64x128xf32>
    %c0_58 = arith.constant 0 : index
    %c0_59 = arith.constant 0 : index
    %45 = vector.load %arg5[%c0_58, %c0_59] : memref<128x128xf32, #tpu.memory_space<vmem>>, vector<128x128xf32>
    %cst_60 = arith.constant dense<0.000000e+00> : vector<64x128xf32>
    %46 = tpu.matmul %44, %45, %cst_60 {dimension_numbers = #tpu.dot_dimension_numbers<[1], [0], [0], [1], [0, 0, 1, 1], [], []>} : vector<64x128xf32>, vector<128x128xf32>, vector<64x128xf32> -> vector<64x128xf32>
    %c0_61 = arith.constant 0 : index
    %c256_62 = arith.constant 256 : index
    %47 = vector.load %arg6[%c0_61, %c256_62] : memref<64x640xf32, #tpu.memory_space<vmem>>, vector<64x128xf32>
    tpu.vector_store %arg6[%c0_61, %c256_62], %46 {strides = array<i32>} : memref<64x640xf32, #tpu.memory_space<vmem>>, vector<64x128xf32>,
    %c2_63 = arith.constant 2 : index
    %c0_64 = arith.constant 0 : index
    %c0_65 = arith.constant 0 : index
    %48 = vector.load %arg1[%c2_63, %c0_64, %c0_65] : memref<4x64x128xf32, #tpu.memory_space<vmem>>, vector<1x64x128xf32>
    %49 = vector.shape_cast %48 : vector<1x64x128xf32> to vector<64x128xf32>
    %c0_66 = arith.constant 0 : index
    %c0_67 = arith.constant 0 : index
    %50 = vector.load %arg5[%c0_66, %c0_67] : memref<128x128xf32, #tpu.memory_space<vmem>>, vector<128x128xf32>
    %cst_68 = arith.constant dense<0.000000e+00> : vector<64x128xf32>
    %51 = tpu.matmul %49, %50, %cst_68 {dimension_numbers = #tpu.dot_dimension_numbers<[1], [0], [0], [1], [0, 0, 1, 1], [], []>} : vector<64x128xf32>, vector<128x128xf32>, vector<64x128xf32> -> vector<64x128xf32>
    %c0_69 = arith.constant 0 : index
    %c384_70 = arith.constant 384 : index
    %52 = vector.load %arg6[%c0_69, %c384_70] : memref<64x640xf32, #tpu.memory_space<vmem>>, vector<64x128xf32>
    tpu.vector_store %arg6[%c0_69, %c384_70], %51 {strides = array<i32>} : memref<64x640xf32, #tpu.memory_space<vmem>>, vector<64x128xf32>,
    %c3_71 = arith.constant 3 : index
    %c0_72 = arith.constant 0 : index
    %c0_73 = arith.constant 0 : index
    %53 = vector.load %arg1[%c3_71, %c0_72, %c0_73] : memref<4x64x128xf32, #tpu.memory_space<vmem>>, vector<1x64x128xf32>
    %54 = vector.shape_cast %53 : vector<1x64x128xf32> to vector<64x128xf32>
    %c0_74 = arith.constant 0 : index
    %c0_75 = arith.constant 0 : index
    %55 = vector.load %arg5[%c0_74, %c0_75] : memref<128x128xf32, #tpu.memory_space<vmem>>, vector<128x128xf32>
    %cst_76 = arith.constant dense<0.000000e+00> : vector<64x128xf32>
    %56 = tpu.matmul %54, %55, %cst_76 {dimension_numbers = #tpu.dot_dimension_numbers<[1], [0], [0], [1], [0, 0, 1, 1], [], []>} : vector<64x128xf32>, vector<128x128xf32>, vector<64x128xf32> -> vector<64x128xf32>
    %c0_77 = arith.constant 0 : index
    %c512_78 = arith.constant 512 : index
    %57 = vector.load %arg6[%c0_77, %c512_78] : memref<64x640xf32, #tpu.memory_space<vmem>>, vector<64x128xf32>
    tpu.vector_store %arg6[%c0_77, %c512_78], %56 {strides = array<i32>} : memref<64x640xf32, #tpu.memory_space<vmem>>, vector<64x128xf32>,
    %c0_79 = arith.constant 0 : index
    %c0_80 = arith.constant 0 : index
    %58 = vector.load %arg6[%c0_79, %c0_80] : memref<64x640xf32, #tpu.memory_space<vmem>>, vector<64x640xf32>
    %c1_81 = arith.constant 1 : index
    %c0_82 = arith.constant 0 : index
    %c0_83 = arith.constant 0 : index
    %59 = vector.load %arg2[%c1_81, %c0_82, %c0_83] : memref<3x640x128xf32, #tpu.memory_space<vmem>>, vector<1x640x128xf32>
    %60 = vector.shape_cast %59 : vector<1x640x128xf32> to vector<640x128xf32>
    %cst_84 = arith.constant dense<0.000000e+00> : vector<64x128xf32>
    %61 = tpu.matmul %58, %60, %cst_84 {dimension_numbers = #tpu.dot_dimension_numbers<[1], [0], [0], [1], [0, 0, 1, 1], [], []>} : vector<64x640xf32>, vector<640x128xf32>, vector<64x128xf32> -> vector<64x128xf32>
    %c1_85 = arith.constant 1 : index
    %c0_86 = arith.constant 0 : index
    %c0_87 = arith.constant 0 : index
    %62 = vector.load %arg3[%c1_85, %c0_86, %c0_87] : memref<3x1x128xf32, #tpu.memory_space<vmem>>, vector<1x1x128xf32>
    %63 = vector.shape_cast %62 : vector<1x1x128xf32> to vector<1x128xf32>
    %64 = vector.broadcast %63 : vector<1x128xf32> to vector<64x128xf32>
    %65 = arith.addf %61, %64 : vector<64x128xf32>
    %cst_88 = arith.constant 0.00999999977 : f32
    %66 = vector.broadcast %cst_88 : f32 to vector<64x128xf32>
    %67 = arith.mulf %66, %65 : vector<64x128xf32>
    %68 = arith.maximumf %65, %67 : vector<64x128xf32>
    %c0_89 = arith.constant 0 : index
    %c0_90 = arith.constant 0 : index
    %69 = vector.load %arg5[%c0_89, %c0_90] : memref<128x128xf32, #tpu.memory_space<vmem>>, vector<64x128xf32>
    tpu.vector_store %arg5[%c0_89, %c0_90], %68 {strides = array<i32>} : memref<128x128xf32, #tpu.memory_space<vmem>>, vector<64x128xf32>,
    %c0_91 = arith.constant 0 : index
    %c0_92 = arith.constant 0 : index
    %70 = vector.load %arg5[%c0_91, %c0_92] : memref<128x128xf32, #tpu.memory_space<vmem>>, vector<64x128xf32>
    %c0_93 = arith.constant 0 : index
    %c0_94 = arith.constant 0 : index
    %71 = vector.load %arg6[%c0_93, %c0_94] : memref<64x640xf32, #tpu.memory_space<vmem>>, vector<64x128xf32>
    tpu.vector_store %arg6[%c0_93, %c0_94], %70 {strides = array<i32>} : memref<64x640xf32, #tpu.memory_space<vmem>>, vector<64x128xf32>,
    %c0_95 = arith.constant 0 : index
    %c0_96 = arith.constant 0 : index
    %c0_97 = arith.constant 0 : index
    %72 = vector.load %arg1[%c0_95, %c0_96, %c0_97] : memref<4x64x128xf32, #tpu.memory_space<vmem>>, vector<1x64x128xf32>
    %73 = vector.shape_cast %72 : vector<1x64x128xf32> to vector<64x128xf32>
    %c0_98 = arith.constant 0 : index
    %c0_99 = arith.constant 0 : index
    %74 = vector.load %arg5[%c0_98, %c0_99] : memref<128x128xf32, #tpu.memory_space<vmem>>, vector<128x128xf32>
    %cst_100 = arith.constant dense<0.000000e+00> : vector<64x128xf32>
    %75 = tpu.matmul %73, %74, %cst_100 {dimension_numbers = #tpu.dot_dimension_numbers<[1], [0], [0], [1], [0, 0, 1, 1], [], []>} : vector<64x128xf32>, vector<128x128xf32>, vector<64x128xf32> -> vector<64x128xf32>
    %c0_101 = arith.constant 0 : index
    %c128_102 = arith.constant 128 : index
    %76 = vector.load %arg6[%c0_101, %c128_102] : memref<64x640xf32, #tpu.memory_space<vmem>>, vector<64x128xf32>
    tpu.vector_store %arg6[%c0_101, %c128_102], %75 {strides = array<i32>} : memref<64x640xf32, #tpu.memory_space<vmem>>, vector<64x128xf32>,
    %c1_103 = arith.constant 1 : index
    %c0_104 = arith.constant 0 : index
    %c0_105 = arith.constant 0 : index
    %77 = vector.load %arg1[%c1_103, %c0_104, %c0_105] : memref<4x64x128xf32, #tpu.memory_space<vmem>>, vector<1x64x128xf32>
    %78 = vector.shape_cast %77 : vector<1x64x128xf32> to vector<64x128xf32>
    %c0_106 = arith.constant 0 : index
    %c0_107 = arith.constant 0 : index
    %79 = vector.load %arg5[%c0_106, %c0_107] : memref<128x128xf32, #tpu.memory_space<vmem>>, vector<128x128xf32>
    %cst_108 = arith.constant dense<0.000000e+00> : vector<64x128xf32>
    %80 = tpu.matmul %78, %79, %cst_108 {dimension_numbers = #tpu.dot_dimension_numbers<[1], [0], [0], [1], [0, 0, 1, 1], [], []>} : vector<64x128xf32>, vector<128x128xf32>, vector<64x128xf32> -> vector<64x128xf32>
    %c0_109 = arith.constant 0 : index
    %c256_110 = arith.constant 256 : index
    %81 = vector.load %arg6[%c0_109, %c256_110] : memref<64x640xf32, #tpu.memory_space<vmem>>, vector<64x128xf32>
    tpu.vector_store %arg6[%c0_109, %c256_110], %80 {strides = array<i32>} : memref<64x640xf32, #tpu.memory_space<vmem>>, vector<64x128xf32>,
    %c2_111 = arith.constant 2 : index
    %c0_112 = arith.constant 0 : index
    %c0_113 = arith.constant 0 : index
    %82 = vector.load %arg1[%c2_111, %c0_112, %c0_113] : memref<4x64x128xf32, #tpu.memory_space<vmem>>, vector<1x64x128xf32>
    %83 = vector.shape_cast %82 : vector<1x64x128xf32> to vector<64x128xf32>
    %c0_114 = arith.constant 0 : index
    %c0_115 = arith.constant 0 : index
    %84 = vector.load %arg5[%c0_114, %c0_115] : memref<128x128xf32, #tpu.memory_space<vmem>>, vector<128x128xf32>
    %cst_116 = arith.constant dense<0.000000e+00> : vector<64x128xf32>
    %85 = tpu.matmul %83, %84, %cst_116 {dimension_numbers = #tpu.dot_dimension_numbers<[1], [0], [0], [1], [0, 0, 1, 1], [], []>} : vector<64x128xf32>, vector<128x128xf32>, vector<64x128xf32> -> vector<64x128xf32>
    %c0_117 = arith.constant 0 : index
    %c384_118 = arith.constant 384 : index
    %86 = vector.load %arg6[%c0_117, %c384_118] : memref<64x640xf32, #tpu.memory_space<vmem>>, vector<64x128xf32>
    tpu.vector_store %arg6[%c0_117, %c384_118], %85 {strides = array<i32>} : memref<64x640xf32, #tpu.memory_space<vmem>>, vector<64x128xf32>,
    %c3_119 = arith.constant 3 : index
    %c0_120 = arith.constant 0 : index
    %c0_121 = arith.constant 0 : index
    %87 = vector.load %arg1[%c3_119, %c0_120, %c0_121] : memref<4x64x128xf32, #tpu.memory_space<vmem>>, vector<1x64x128xf32>
    %88 = vector.shape_cast %87 : vector<1x64x128xf32> to vector<64x128xf32>
    %c0_122 = arith.constant 0 : index
    %c0_123 = arith.constant 0 : index
    %89 = vector.load %arg5[%c0_122, %c0_123] : memref<128x128xf32, #tpu.memory_space<vmem>>, vector<128x128xf32>
    %cst_124 = arith.constant dense<0.000000e+00> : vector<64x128xf32>
    %90 = tpu.matmul %88, %89, %cst_124 {dimension_numbers = #tpu.dot_dimension_numbers<[1], [0], [0], [1], [0, 0, 1, 1], [], []>} : vector<64x128xf32>, vector<128x128xf32>, vector<64x128xf32> -> vector<64x128xf32>
    %c0_125 = arith.constant 0 : index
    %c512_126 = arith.constant 512 : index
    %91 = vector.load %arg6[%c0_125, %c512_126] : memref<64x640xf32, #tpu.memory_space<vmem>>, vector<64x128xf32>
    tpu.vector_store %arg6[%c0_125, %c512_126], %90 {strides = array<i32>} : memref<64x640xf32, #tpu.memory_space<vmem>>, vector<64x128xf32>,
    %c0_127 = arith.constant 0 : index
    %c0_128 = arith.constant 0 : index
    %92 = vector.load %arg6[%c0_127, %c0_128] : memref<64x640xf32, #tpu.memory_space<vmem>>, vector<64x640xf32>
    %c2_129 = arith.constant 2 : index
    %c0_130 = arith.constant 0 : index
    %c0_131 = arith.constant 0 : index
    %93 = vector.load %arg2[%c2_129, %c0_130, %c0_131] : memref<3x640x128xf32, #tpu.memory_space<vmem>>, vector<1x640x128xf32>
    %94 = vector.shape_cast %93 : vector<1x640x128xf32> to vector<640x128xf32>
    %cst_132 = arith.constant dense<0.000000e+00> : vector<64x128xf32>
    %95 = tpu.matmul %92, %94, %cst_132 {dimension_numbers = #tpu.dot_dimension_numbers<[1], [0], [0], [1], [0, 0, 1, 1], [], []>} : vector<64x640xf32>, vector<640x128xf32>, vector<64x128xf32> -> vector<64x128xf32>
    %c2_133 = arith.constant 2 : index
    %c0_134 = arith.constant 0 : index
    %c0_135 = arith.constant 0 : index
    %96 = vector.load %arg3[%c2_133, %c0_134, %c0_135] : memref<3x1x128xf32, #tpu.memory_space<vmem>>, vector<1x1x128xf32>
    %97 = vector.shape_cast %96 : vector<1x1x128xf32> to vector<1x128xf32>
    %98 = vector.broadcast %97 : vector<1x128xf32> to vector<64x128xf32>
    %99 = arith.addf %95, %98 : vector<64x128xf32>
    %cst_136 = arith.constant 0.00999999977 : f32
    %100 = vector.broadcast %cst_136 : f32 to vector<64x128xf32>
    %101 = arith.mulf %100, %99 : vector<64x128xf32>
    %102 = arith.maximumf %99, %101 : vector<64x128xf32>
    %c0_137 = arith.constant 0 : index
    %c0_138 = arith.constant 0 : index
    %103 = vector.load %arg4[%c0_137, %c0_138] : memref<64x128xf32, #tpu.memory_space<vmem>>, vector<64x128xf32>
    tpu.vector_store %arg4[%c0_137, %c0_138], %102 {strides = array<i32>} : memref<64x128xf32, #tpu.memory_space<vmem>>, vector<64x128xf32>,
    return
  }
}

</mosaic_0001>

<llo_original>
// kernel: rgcn_forward_pallas.1
$region0: #{rgcn_forward_pallas.1}
  #allocation0 [shape = 'u32[]', space=smem, size = 0x4, offset = 0x4, fixed_abs, tag = 'smem constant byte address 0x4 - core index']
  #allocation1 [shape = 'u32[144,128]{1,0:T(1,128)}', space=vmem, size = 0x12000, scoped, tag = 'internal scratch']
  #allocation2 [shape = 'f32[128,128]{1,0:T(8,128)}', space=vmem, size = 0x10000, scoped, tag = 'scratch operand']
  #allocation3 [shape = 'f32[64,640]{1,0:T(8,128)}', space=vmem, size = 0x28000, scoped, tag = 'scratch operand']
  %s0 = inlined_call_operand.vmem [shape: f32[128,128], index: 0, kind: input, shape index: {}]
  %s1 = inlined_call_operand.vmem [shape: f32[4,64,128], index: 1, kind: input, shape index: {}]
  %s2 = inlined_call_operand.hbm [shape: f32[3,640,128], index: 2, kind: input, shape index: {}]
  %s3 = inlined_call_operand.vmem [shape: f32[3,1,128], index: 3, kind: input, shape index: {}]
  %s4 = inlined_call_operand.hbm [shape: f32[64,128], index: 4, kind: output, shape index: {}]
  %s5 = sld [smem:[#allocation0]]
  $region30: #{rgcn_forward_pallas.1} parent=0
    _
  %s7 = ssub.s32 1, %s5
  %s8 = scalar_select 0, %s7, %s5
  $region1: #{rgcn_forward_pallas.1} parent=0
    #allocation4 [shape = 'u8[983040]{0}', space=vmem, size = 0xf0000, scoped, tag = 'input window, operand 2, single buffered']
    #allocation5 [shape = 's32[1]{0}', space=sflag, size = 0x4, scoped, tag = 'scoped memory for rgcn_forward_pallas.1']
    #allocation6 [shape = 's32[1]{0}', space=sflag, size = 0x4, scoped, tag = 'scoped memory for rgcn_forward_pallas.1']
    #allocation7 [shape = 'u8[32768]{0}', space=vmem, size = 0x8000, scoped, tag = 'output window, operand 0, single buffered']
    %9 = vsyncpa [#allocation5], 0
    %10 = vsyncpa [#allocation6], 0
    // Predicated region
    $region2: #{rgcn_forward_pallas.1} parent=1 // pred_check
      _
    $region3: #{rgcn_forward_pallas.1} parent=1 // pred_check_branch
      %12 = sbr.rel (0) target = $region5
    $region4: #{rgcn_forward_pallas.1} parent=1 // pred_region
      _
    $region5: #{rgcn_forward_pallas.1} parent=1 // pred_fallthru
      _
    // Predicated region
    $region6: #{rgcn_forward_pallas.1} parent=1 // pred_check
      _
    $region7: #{rgcn_forward_pallas.1} parent=1 // pred_check_branch
      %14 = sbr.rel (0) target = $region9
    $region8: #{rgcn_forward_pallas.1} parent=1 // pred_region
      _
    $region9: #{rgcn_forward_pallas.1} parent=1 // pred_fallthru
      _
    // Predicated region
    $region10: #{rgcn_forward_pallas.1} parent=1 // pred_check
      _
    $region11: #{rgcn_forward_pallas.1} parent=1 // pred_check_branch
      %16 = sbr.rel (0) target = $region13
    $region12: #{rgcn_forward_pallas.1} parent=1 // pred_region
      %s18 = ssub.s32 30720, 30720
      %19 = vsyncadd [#allocation5], %s18
      %s20 = sshll.u32 [#allocation4], 4
      %s21 = int_to_ptr.vmem [resolvable:$true] %s20
      %26 = dma.hbm_to_vmem [thread:$0]  %s2, 30720, %s21, [#allocation5], 128, 128, 8
    $region13: #{rgcn_forward_pallas.1} parent=1 // pred_fallthru
      _
    // Predicated region
    $region14: #{rgcn_forward_pallas.1} parent=1 // pred_check
      _
    $region15: #{rgcn_forward_pallas.1} parent=1 // pred_check_branch
      %28 = sbr.rel (0) target = $region17
    $region16: #{rgcn_forward_pallas.1} parent=1 // pred_region
      _
    $region17: #{rgcn_forward_pallas.1} parent=1 // pred_fallthru
      _
    // Predicated region
    $region18: #{rgcn_forward_pallas.1} parent=1 // pred_check
      _
    $region19: #{rgcn_forward_pallas.1} parent=1 // pred_check_branch
      %30 = sbr.rel (0) target = $region21
    $region20: #{rgcn_forward_pallas.1} parent=1 // pred_region
      %31 = dma.done [#allocation5], 30720
    $region21: #{rgcn_forward_pallas.1} parent=1 // pred_fallthru
      _
    %v32 = vld [vmem:[%s0] sm:$0xff]
    %v33 = vld [vmem:[%s0 + $0x8] sm:$0xff]
    %v34 = vld [vmem:[%s0 + $0x10] sm:$0xff]
    %v35 = vld [vmem:[%s0 + $0x18] sm:$0xff]
    %v36 = vld [vmem:[%s0 + $0x20] sm:$0xff]
    %v37 = vld [vmem:[%s0 + $0x28] sm:$0xff]
    %v38 = vld [vmem:[%s0 + $0x30] sm:$0xff]
    %v39 = vld [vmem:[%s0 + $0x38] sm:$0xff]
    %v40 = vld [vmem:[%s0 + $0x40] sm:$0xff]
    %v41 = vld [vmem:[%s0 + $0x48] sm:$0xff]
    %v42 = vld [vmem:[%s0 + $0x50] sm:$0xff]
    %v43 = vld [vmem:[%s0 + $0x58] sm:$0xff]
    %v44 = vld [vmem:[%s0 + $0x60] sm:$0xff]
    %v45 = vld [vmem:[%s0 + $0x68] sm:$0xff]
    %v46 = vld [vmem:[%s0 + $0x70] sm:$0xff]
    %v47 = vld [vmem:[%s0 + $0x78] sm:$0xff]
    %48 = vst [vmem:[#allocation2] sm:$0xff] %v32
    %49 = vst [vmem:[#allocation2 + $0x8] sm:$0xff] %v33
    %50 = vst [vmem:[#allocation2 + $0x10] sm:$0xff] %v34
    %51 = vst [vmem:[#allocation2 + $0x18] sm:$0xff] %v35
    %52 = vst [vmem:[#allocation2 + $0x20] sm:$0xff] %v36
    %53 = vst [vmem:[#allocation2 + $0x28] sm:$0xff] %v37
    %54 = vst [vmem:[#allocation2 + $0x30] sm:$0xff] %v38
    %55 = vst [vmem:[#allocation2 + $0x38] sm:$0xff] %v39
    %56 = vst [vmem:[#allocation2 + $0x40] sm:$0xff] %v40
    %57 = vst [vmem:[#allocation2 + $0x48] sm:$0xff] %v41
    %58 = vst [vmem:[#allocation2 + $0x50] sm:$0xff] %v42
    %59 = vst [vmem:[#allocation2 + $0x58] sm:$0xff] %v43
    %60 = vst [vmem:[#allocation2 + $0x60] sm:$0xff] %v44
    %61 = vst [vmem:[#allocation2 + $0x68] sm:$0xff] %v45
    %62 = vst [vmem:[#allocation2 + $0x70] sm:$0xff] %v46
    %63 = vst [vmem:[#allocation2 + $0x78] sm:$0xff] %v47
    %v64 = vld [vmem:[#allocation2] sm:$0xff]
    %v65 = vld [vmem:[#allocation2 + $0x8] sm:$0xff]
    %v66 = vld [vmem:[#allocation2 + $0x10] sm:$0xff]
    %v67 = vld [vmem:[#allocation2 + $0x18] sm:$0xff]
    %v68 = vld [vmem:[#allocation2 + $0x20] sm:$0xff]
    %v69 = vld [vmem:[#allocation2 + $0x28] sm:$0xff]
    %v70 = vld [vmem:[#allocation2 + $0x30] sm:$0xff]
    %v71 = vld [vmem:[#allocation2 + $0x38] sm:$0xff]
    %72 = vst [vmem:[#allocation3] sm:$0xff] %v64
    %73 = vst [vmem:[#allocation3 + $0x28] sm:$0xff] %v65
    %74 = vst [vmem:[#allocation3 + $0x50] sm:$0xff] %v66
    %75 = vst [vmem:[#allocation3 + $0x78] sm:$0xff] %v67
    %76 = vst [vmem:[#allocation3 + $0xa0] sm:$0xff] %v68
    %77 = vst [vmem:[#allocation3 + $0xc8] sm:$0xff] %v69
    %78 = vst [vmem:[#allocation3 + $0xf0] sm:$0xff] %v70
    %79 = vst [vmem:[#allocation3 + $0x118] sm:$0xff] %v71
    %v80 = vld [vmem:[%s1] sm:$0xff]
    %v81 = vld [vmem:[%s1 + $0x8] sm:$0xff]
    %v82 = vld [vmem:[%s1 + $0x10] sm:$0xff]
    %v83 = vld [vmem:[%s1 + $0x18] sm:$0xff]
    %v84 = vld [vmem:[%s1 + $0x20] sm:$0xff]
    %v85 = vld [vmem:[%s1 + $0x28] sm:$0xff]
    %v86 = vld [vmem:[%s1 + $0x30] sm:$0xff]
    %v87 = vld [vmem:[%s1 + $0x38] sm:$0xff]
    %v88 = vld [vmem:[#allocation2] sm:$0xff]
    %v89 = vld [vmem:[#allocation2 + $0x8] sm:$0xff]
    %v90 = vld [vmem:[#allocation2 + $0x10] sm:$0xff]
    %v91 = vld [vmem:[#allocation2 + $0x18] sm:$0xff]
    %v92 = vld [vmem:[#allocation2 + $0x20] sm:$0xff]
    %v93 = vld [vmem:[#allocation2 + $0x28] sm:$0xff]
    %v94 = vld [vmem:[#allocation2 + $0x30] sm:$0xff]
    %v95 = vld [vmem:[#allocation2 + $0x38] sm:$0xff]
    %v96 = vld [vmem:[#allocation2 + $0x40] sm:$0xff]
    %v97 = vld [vmem:[#allocation2 + $0x48] sm:$0xff]
    %v98 = vld [vmem:[#allocation2 + $0x50] sm:$0xff]
    %v99 = vld [vmem:[#allocation2 + $0x58] sm:$0xff]
    %v100 = vld [vmem:[#allocation2 + $0x60] sm:$0xff]
    %v101 = vld [vmem:[#allocation2 + $0x68] sm:$0xff]
    %v102 = vld [vmem:[#allocation2 + $0x70] sm:$0xff]
    %v103 = vld [vmem:[#allocation2 + $0x78] sm:$0xff]
    %104 = vmatprep.subr.mxu0 0.0
    %105 = vmatpush1.msra.mxu0 %v88
    %106 = vmatprep.subr.mxu0 0.0
    %107 = vmatpush1.msra.mxu0 %v89
    %108 = vmatprep.subr.mxu0 0.0
    %109 = vmatpush1.msra.mxu0 %v90
    %110 = vmatprep.subr.mxu0 0.0
    %111 = vmatpush1.msra.mxu0 %v91
    %112 = vmatprep.subr.mxu0 0.0
    %113 = vmatpush1.msra.mxu0 %v92
    %114 = vmatprep.subr.mxu0 0.0
    %115 = vmatpush1.msra.mxu0 %v93
    %116 = vmatprep.subr.mxu0 0.0
    %117 = vmatpush1.msra.mxu0 %v94
    %118 = vmatprep.subr.mxu0 0.0
    %119 = vmatpush1.msra.mxu0 %v95
    %120 = vmatprep.subr.mxu0 0.0
    %121 = vmatpush1.msra.mxu0 %v96
    %122 = vmatprep.subr.mxu0 0.0
    %123 = vmatpush1.msra.mxu0 %v97
    %124 = vmatprep.subr.mxu0 0.0
    %125 = vmatpush1.msra.mxu0 %v98
    %126 = vmatprep.subr.mxu0 0.0
    %127 = vmatpush1.msra.mxu0 %v99
    %128 = vmatprep.subr.mxu0 0.0
    %129 = vmatpush1.msra.mxu0 %v100
    %130 = vmatprep.subr.mxu0 0.0
    %131 = vmatpush1.msra.mxu0 %v101
    %132 = vmatprep.subr.mxu0 0.0
    %133 = vmatpush1.msra.mxu0 %v102
    %134 = vmatprep.subr.mxu0 0.0
    %135 = vmatpush1.msra.mxu0 %v103
    %136 = vmatprep.subr.mxu0 0.0
    %137 = vmatpush1.msra.mxu0 0.0
    %138 = vmatprep.subr.mxu0 0.0
    %139 = vmatpush1.msra.mxu0 0.0
    %140 = vmatprep.subr.mxu0 0.0
    %141 = vmatpush1.msra.mxu0 0.0
    %142 = vmatprep.subr.mxu0 0.0
    %143 = vmatpush1.msra.mxu0 0.0
    %144 = vmatprep.subr.mxu0 0.0
    %145 = vmatpush1.msra.mxu0 0.0
    %146 = vmatprep.subr.mxu0 0.0
    %147 = vmatpush1.msra.mxu0 0.0
    %148 = vmatprep.subr.mxu0 0.0
    %149 = vmatpush1.msra.mxu0 0.0
    %150 = vmatprep.subr.mxu0 0.0
    %151 = vmatpush1.msra.mxu0 0.0
    %152 = vmatprep.subr.mxu0 0.0
    %153 = vmatpush1.msra.mxu0 0.0
    %154 = vmatprep.subr.mxu0 0.0
    %155 = vmatpush1.msra.mxu0 0.0
    %156 = vmatprep.subr.mxu0 0.0
    %157 = vmatpush1.msra.mxu0 0.0
    %158 = vmatprep.subr.mxu0 0.0
    %159 = vmatpush1.msra.mxu0 0.0
    %160 = vmatprep.subr.mxu0 0.0
    %161 = vmatpush1.msra.mxu0 0.0
    %162 = vmatprep.subr.mxu0 0.0
    %163 = vmatpush1.msra.mxu0 0.0
    %164 = vmatprep.subr.mxu0 0.0
    %165 = vmatpush1.msra.mxu0 0.0
    %166 = vmatprep.subr.mxu0 0.0
    %167 = vmatpush1.msra.mxu0 0.0
    %168 = vmatprep.mubr.f32.mxu0 0.0
    %169 = vmatmul.mubr.f32.gmra.mrb[0].mxu0 %v80
    %v170 = vpop.f32.mrb[0].mxu0
    %v171 = vadd.f32 0.0, %v170
    %v172 = vpop.f32.mrb[0].mxu0
    %173 = vmatprep.mubr.f32.mxu0 0.0
    %174 = vmatmul.mubr.f32.gmra.mrb[0].mxu0 %v81
    %v175 = vpop.f32.mrb[0].mxu0
    %v176 = vadd.f32 0.0, %v175
    %v177 = vpop.f32.mrb[0].mxu0
    %178 = vmatprep.mubr.f32.mxu0 0.0
    %179 = vmatmul.mubr.f32.gmra.mrb[0].mxu0 %v82
    %v180 = vpop.f32.mrb[0].mxu0
    %v181 = vadd.f32 0.0, %v180
    %v182 = vpop.f32.mrb[0].mxu0
    %183 = vmatprep.mubr.f32.mxu0 0.0
    %184 = vmatmul.mubr.f32.gmra.mrb[0].mxu0 %v83
    %v185 = vpop.f32.mrb[0].mxu0
    %v186 = vadd.f32 0.0, %v185
    %v187 = vpop.f32.mrb[0].mxu0
    %188 = vmatprep.mubr.f32.mxu0 0.0
    %189 = vmatmul.mubr.f32.gmra.mrb[0].mxu0 %v84
    %v190 = vpop.f32.mrb[0].mxu0
    %v191 = vadd.f32 0.0, %v190
    %v192 = vpop.f32.mrb[0].mxu0
    %193 = vmatprep.mubr.f32.mxu0 0.0
    %194 = vmatmul.mubr.f32.gmra.mrb[0].mxu0 %v85
    %v195 = vpop.f32.mrb[0].mxu0
    %v196 = vadd.f32 0.0, %v195
    %v197 = vpop.f32.mrb[0].mxu0
    %198 = vmatprep.mubr.f32.mxu0 0.0
    %199 = vmatmul.mubr.f32.gmra.mrb[0].mxu0 %v86
    %v200 = vpop.f32.mrb[0].mxu0
    %v201 = vadd.f32 0.0, %v200
    %v202 = vpop.f32.mrb[0].mxu0
    %203 = vmatprep.mubr.f32.mxu0 0.0
    %204 = vmatmul.mubr.f32.gmra.mrb[0].mxu0 %v87
    %v205 = vpop.f32.mrb[0].mxu0
    %v206 = vadd.f32 0.0, %v205
    %v207 = vpop.f32.mrb[0].mxu0
    %208 = vdwg.mxu0
    %209 = vst [vmem:[#allocation3 + $0x8] sm:$0xff] %v171
    %210 = vst [vmem:[#allocation3 + $0x30] sm:$0xff] %v176
    %211 = vst [vmem:[#allocation3 + $0x58] sm:$0xff] %v181
    %212 = vst [vmem:[#allocation3 + $0x80] sm:$0xff] %v186
    %213 = vst [vmem:[#allocation3 + $0xa8] sm:$0xff] %v191
    %214 = vst [vmem:[#allocation3 + $0xd0] sm:$0xff] %v196
    %215 = vst [vmem:[#allocation3 + $0xf8] sm:$0xff] %v201
    %216 = vst [vmem:[#allocation3 + $0x120] sm:$0xff] %v206
    %s217 = scalar_lea.vmem %s1, 64
    %v218 = vld [vmem:[%s217] sm:$0xff]
    %v219 = vld [vmem:[%s217 + $0x8] sm:$0xff]
    %v220 = vld [vmem:[%s217 + $0x10] sm:$0xff]
    %v221 = vld [vmem:[%s217 + $0x18] sm:$0xff]
    %v222 = vld [vmem:[%s217 + $0x20] sm:$0xff]
    %v223 = vld [vmem:[%s217 + $0x28] sm:$0xff]
    %v224 = vld [vmem:[%s217 + $0x30] sm:$0xff]
    %v225 = vld [vmem:[%s217 + $0x38] sm:$0xff]
    %v226 = vld [vmem:[#allocation2] sm:$0xff]
    %v227 = vld [vmem:[#allocation2 + $0x8] sm:$0xff]
    %v228 = vld [vmem:[#allocation2 + $0x10] sm:$0xff]
    %v229 = vld [vmem:[#allocation2 + $0x18] sm:$0xff]
    %v230 = vld [vmem:[#allocation2 + $0x20] sm:$0xff]
    %v231 = vld [vmem:[#allocation2 + $0x28] sm:$0xff]
    %v232 = vld [vmem:[#allocation2 + $0x30] sm:$0xff]
    %v233 = vld [vmem:[#allocation2 + $0x38] sm:$0xff]
    %v234 = vld [vmem:[#allocation2 + $0x40] sm:$0xff]
    %v235 = vld [vmem:[#allocation2 + $0x48] sm:$0xff]
    %v236 = vld [vmem:[#allocation2 + $0x50] sm:$0xff]
    %v237 = vld [vmem:[#allocation2 + $0x58] sm:$0xff]
    %v238 = vld [vmem:[#allocation2 + $0x60] sm:$0xff]
    %v239 = vld [vmem:[#allocation2 + $0x68] sm:$0xff]
    %v240 = vld [vmem:[#allocation2 + $0x70] sm:$0xff]
    %v241 = vld [vmem:[#allocation2 + $0x78] sm:$0xff]
    %242 = vmatprep.subr.mxu0 0.0
    %243 = vmatpush1.msra.mxu0 %v226
    %244 = vmatprep.subr.mxu0 0.0
    %245 = vmatpush1.msra.mxu0 %v227
    %246 = vmatprep.subr.mxu0 0.0
    %247 = vmatpush1.msra.mxu0 %v228
    %248 = vmatprep.subr.mxu0 0.0
    %249 = vmatpush1.msra.mxu0 %v229
    %250 = vmatprep.subr.mxu0 0.0
    %251 = vmatpush1.msra.mxu0 %v230
    %252 = vmatprep.subr.mxu0 0.0
    %253 = vmatpush1.msra.mxu0 %v231
    %254 = vmatprep.subr.mxu0 0.0
    %255 = vmatpush1.msra.mxu0 %v232
    %256 = vmatprep.subr.mxu0 0.0
    %257 = vmatpush1.msra.mxu0 %v233
    %258 = vmatprep.subr.mxu0 0.0
    %259 = vmatpush1.msra.mxu0 %v234
    %260 = vmatprep.subr.mxu0 0.0
    %261 = vmatpush1.msra.mxu0 %v235
    %262 = vmatprep.subr.mxu0 0.0
    %263 = vmatpush1.msra.mxu0 %v236
    %264 = vmatprep.subr.mxu0 0.0
    %265 = vmatpush1.msra.mxu0 %v237
    %266 = vmatprep.subr.mxu0 0.0
    %267 = vmatpush1.msra.mxu0 %v238
    %268 = vmatprep.subr.mxu0 0.0
    %269 = vmatpush1.msra.mxu0 %v239
    %270 = vmatprep.subr.mxu0 0.0
    %271 = vmatpush1.msra.mxu0 %v240
    %272 = vmatprep.subr.mxu0 0.0
    %273 = vmatpush1.msra.mxu0 %v241
    %274 = vmatprep.subr.mxu0 0.0
    %275 = vmatpush1.msra.mxu0 0.0
    %276 = vmatprep.subr.mxu0 0.0
    %277 = vmatpush1.msra.mxu0 0.0
    %278 = vmatprep.subr.mxu0 0.0
    %279 = vmatpush1.msra.mxu0 0.0
    %280 = vmatprep.subr.mxu0 0.0
    %281 = vmatpush1.msra.mxu0 0.0
    %282 = vmatprep.subr.mxu0 0.0
    %283 = vmatpush1.msra.mxu0 0.0
    %284 = vmatprep.subr.mxu0 0.0
    %285 = vmatpush1.msra.mxu0 0.0
    %286 = vmatprep.subr.mxu0 0.0
    %287 = vmatpush1.msra.mxu0 0.0
    %288 = vmatprep.subr.mxu0 0.0
    %289 = vmatpush1.msra.mxu0 0.0
    %290 = vmatprep.subr.mxu0 0.0
    %291 = vmatpush1.msra.mxu0 0.0
    %292 = vmatprep.subr.mxu0 0.0
    %293 = vmatpush1.msra.mxu0 0.0
    %294 = vmatprep.subr.mxu0 0.0
    %295 = vmatpush1.msra.mxu0 0.0
    %296 = vmatprep.subr.mxu0 0.0
    %297 = vmatpush1.msra.mxu0 0.0
    %298 = vmatprep.subr.mxu0 0.0
    %299 = vmatpush1.msra.mxu0 0.0
    %300 = vmatprep.subr.mxu0 0.0
    %301 = vmatpush1.msra.mxu0 0.0
    %302 = vmatprep.subr.mxu0 0.0
    %303 = vmatpush1.msra.mxu0 0.0
    %304 = vmatprep.subr.mxu0 0.0
    %305 = vmatpush1.msra.mxu0 0.0
    %306 = vmatprep.mubr.f32.mxu0 0.0
    %307 = vmatmul.mubr.f32.gmra.mrb[0].mxu0 %v218
    %v308 = vpop.f32.mrb[0].mxu0
    %v309 = vadd.f32 0.0, %v308
    %v310 = vpop.f32.mrb[0].mxu0
    %311 = vmatprep.mubr.f32.mxu0 0.0
    %312 = vmatmul.mubr.f32.gmra.mrb[0].mxu0 %v219
    %v313 = vpop.f32.mrb[0].mxu0
    %v314 = vadd.f32 0.0, %v313
    %v315 = vpop.f32.mrb[0].mxu0
    %316 = vmatprep.mubr.f32.mxu0 0.0
    %317 = vmatmul.mubr.f32.gmra.mrb[0].mxu0 %v220
    %v318 = vpop.f32.mrb[0].mxu0
    %v319 = vadd.f32 0.0, %v318
    %v320 = vpop.f32.mrb[0].mxu0
    %321 = vmatprep.mubr.f32.mxu0 0.0
    %322 = vmatmul.mubr.f32.gmra.mrb[0].mxu0 %v221
    %v323 = vpop.f32.mrb[0].mxu0
    %v324 = vadd.f32 0.0, %v323
    %v325 = vpop.f32.mrb[0].mxu0
    %326 = vmatprep.mubr.f32.mxu0 0.0
    %327 = vmatmul.mubr.f32.gmra.mrb[0].mxu0 %v222
    %v328 = vpop.f32.mrb[0].mxu0
    %v329 = vadd.f32 0.0, %v328
    %v330 = vpop.f32.mrb[0].mxu0
    %331 = vmatprep.mubr.f32.mxu0 0.0
    %332 = vmatmul.mubr.f32.gmra.mrb[0].mxu0 %v223
    %v333 = vpop.f32.mrb[0].mxu0
    %v334 = vadd.f32 0.0, %v333
    %v335 = vpop.f32.mrb[0].mxu0
    %336 = vmatprep.mubr.f32.mxu0 0.0
    %337 = vmatmul.mubr.f32.gmra.mrb[0].mxu0 %v224
    %v338 = vpop.f32.mrb[0].mxu0
    %v339 = vadd.f32 0.0, %v338
    %v340 = vpop.f32.mrb[0].mxu0
    %341 = vmatprep.mubr.f32.mxu0 0.0
    %342 = vmatmul.mubr.f32.gmra.mrb[0].mxu0 %v225
    %v343 = vpop.f32.mrb[0].mxu0
    %v344 = vadd.f32 0.0, %v343
    %v345 = vpop.f32.mrb[0].mxu0
    %346 = vdwg.mxu0
    %347 = vst [vmem:[#allocation3 + $0x10] sm:$0xff] %v309
    %348 = vst [vmem:[#allocation3 + $0x38] sm:$0xff] %v314
    %349 = vst [vmem:[#allocation3 + $0x60] sm:$0xff] %v319
    %350 = vst [vmem:[#allocation3 + $0x88] sm:$0xff] %v324
    %351 = vst [vmem:[#allocation3 + $0xb0] sm:$0xff] %v329
    %352 = vst [vmem:[#allocation3 + $0xd8] sm:$0xff] %v334
    %353 = vst [vmem:[#allocation3 + $0x100] sm:$0xff] %v339
    %354 = vst [vmem:[#allocation3 + $0x128] sm:$0xff] %v344
    %s355 = scalar_lea.vmem %s1, 128
    %v356 = vld [vmem:[%s355] sm:$0xff]
    %v357 = vld [vmem:[%s355 + $0x8] sm:$0xff]
    %v358 = vld [vmem:[%s355 + $0x10] sm:$0xff]
    %v359 = vld [vmem:[%s355 + $0x18] sm:$0xff]
    %v360 = vld [vmem:[%s355 + $0x20] sm:$0xff]
    %v361 = vld [vmem:[%s355 + $0x28] sm:$0xff]
    %v362 = vld [vmem:[%s355 + $0x30] sm:$0xff]
    %v363 = vld [vmem:[%s355 + $0x38] sm:$0xff]
    %v364 = vld [vmem:[#allocation2] sm:$0xff]
    %v365 = vld [vmem:[#allocation2 + $0x8] sm:$0xff]
    %v366 = vld [vmem:[#allocation2 + $0x10] sm:$0xff]
    %v367 = vld [vmem:[#allocation2 + $0x18] sm:$0xff]
    %v368 = vld [vmem:[#allocation2 + $0x20] sm:$0xff]
    %v369 = vld [vmem:[#allocation2 + $0x28] sm:$0xff]
    %v370 = vld [vmem:[#allocation2 + $0x30] sm:$0xff]
    %v371 = vld [vmem:[#allocation2 + $0x38] sm:$0xff]
    %v372 = vld [vmem:[#allocation2 + $0x40] sm:$0xff]
    %v373 = vld [vmem:[#allocation2 + $0x48] sm:$0xff]
    %v374 = vld [vmem:[#allocation2 + $0x50] sm:$0xff]
    %v375 = vld [vmem:[#allocation2 + $0x58] sm:$0xff]
    %v376 = vld [vmem:[#allocation2 + $0x60] sm:$0xff]
    %v377 = vld [vmem:[#allocation2 + $0x68] sm:$0xff]
    %v378 = vld [vmem:[#allocation2 + $0x70] sm:$0xff]
    %v379 = vld [vmem:[#allocation2 + $0x78] sm:$0xff]
    %380 = vmatprep.subr.mxu0 0.0
    %381 = vmatpush1.msra.mxu0 %v364
    %382 = vmatprep.subr.mxu0 0.0
    %383 = vmatpush1.msra.mxu0 %v365
    %384 = vmatprep.subr.mxu0 0.0
    %385 = vmatpush1.msra.mxu0 %v366
    %386 = vmatprep.subr.mxu0 0.0
    %387 = vmatpush1.msra.mxu0 %v367
    %388 = vmatprep.subr.mxu0 0.0
    %389 = vmatpush1.msra.mxu0 %v368
    %390 = vmatprep.subr.mxu0 0.0
    %391 = vmatpush1.msra.mxu0 %v369
    %392 = vmatprep.subr.mxu0 0.0
    %393 = vmatpush1.msra.mxu0 %v370
    %394 = vmatprep.subr.mxu0 0.0
    %395 = vmatpush1.msra.mxu0 %v371
    %396 = vmatprep.subr.mxu0 0.0
    %397 = vmatpush1.msra.mxu0 %v372
    %398 = vmatprep.subr.mxu0 0.0
    %399 = vmatpush1.msra.mxu0 %v373
    %400 = vmatprep.subr.mxu0 0.0
    %401 = vmatpush1.msra.mxu0 %v374
    %402 = vmatprep.subr.mxu0 0.0
    %403 = vmatpush1.msra.mxu0 %v375
    %404 = vmatprep.subr.mxu0 0.0
    %405 = vmatpush1.msra.mxu0 %v376
    %406 = vmatprep.subr.mxu0 0.0
    %407 = vmatpush1.msra.mxu0 %v377
    %408 = vmatprep.subr.mxu0 0.0
    %409 = vmatpush1.msra.mxu0 %v378
    %410 = vmatprep.subr.mxu0 0.0
    %411 = vmatpush1.msra.mxu0 %v379
    %412 = vmatprep.subr.mxu0 0.0
    %413 = vmatpush1.msra.mxu0 0.0
    %414 = vmatprep.subr.mxu0 0.0
    %415 = vmatpush1.msra.mxu0 0.0
    %416 = vmatprep.subr.mxu0 0.0
    %417 = vmatpush1.msra.mxu0 0.0
    %418 = vmatprep.subr.mxu0 0.0
    %419 = vmatpush1.msra.mxu0 0.0
    %420 = vmatprep.subr.mxu0 0.0
    %421 = vmatpush1.msra.mxu0 0.0
    %422 = vmatprep.subr.mxu0 0.0
    %423 = vmatpush1.msra.mxu0 0.0
    %424 = vmatprep.subr.mxu0 0.0
    %425 = vmatpush1.msra.mxu0 0.0
    %426 = vmatprep.subr.mxu0 0.0
    %427 = vmatpush1.msra.mxu0 0.0
    %428 = vmatprep.subr.mxu0 0.0
    %429 = vmatpush1.msra.mxu0 0.0
    %430 = vmatprep.subr.mxu0 0.0
    %431 = vmatpush1.msra.mxu0 0.0
    %432 = vmatprep.subr.mxu0 0.0
    %433 = vmatpush1.msra.mxu0 0.0
    %434 = vmatprep.subr.mxu0 0.0
    %435 = vmatpush1.msra.mxu0 0.0
    %436 = vmatprep.subr.mxu0 0.0
    %437 = vmatpush1.msra.mxu0 0.0
    %438 = vmatprep.subr.mxu0 0.0
    %439 = vmatpush1.msra.mxu0 0.0
    %440 = vmatprep.subr.mxu0 0.0
    %441 = vmatpush1.msra.mxu0 0.0
    %442 = vmatprep.subr.mxu0 0.0
    %443 = vmatpush1.msra.mxu0 0.0
    %444 = vmatprep.mubr.f32.mxu0 0.0
    %445 = vmatmul.mubr.f32.gmra.mrb[0].mxu0 %v356
    %v446 = vpop.f32.mrb[0].mxu0
    %v447 = vadd.f32 0.0, %v446
    %v448 = vpop.f32.mrb[0].mxu0
    %449 = vmatprep.mubr.f32.mxu0 0.0
    %450 = vmatmul.mubr.f32.gmra.mrb[0].mxu0 %v357
    %v451 = vpop.f32.mrb[0].mxu0
    %v452 = vadd.f32 0.0, %v451
    %v453 = vpop.f32.mrb[0].mxu0
    %454 = vmatprep.mubr.f32.mxu0 0.0
    %455 = vmatmul.mubr.f32.gmra.mrb[0].mxu0 %v358
    %v456 = vpop.f32.mrb[0].mxu0
    %v457 = vadd.f32 0.0, %v456
    %v458 = vpop.f32.mrb[0].mxu0
    %459 = vmatprep.mubr.f32.mxu0 0.0
    %460 = vmatmul.mubr.f32.gmra.mrb[0].mxu0 %v359
    %v461 = vpop.f32.mrb[0].mxu0
    %v462 = vadd.f32 0.0, %v461
    %v463 = vpop.f32.mrb[0].mxu0
    %464 = vmatprep.mubr.f32.mxu0 0.0
    %465 = vmatmul.mubr.f32.gmra.mrb[0].mxu0 %v360
    %v466 = vpop.f32.mrb[0].mxu0
    %v467 = vadd.f32 0.0, %v466
    %v468 = vpop.f32.mrb[0].mxu0
    %469 = vmatprep.mubr.f32.mxu0 0.0
    %470 = vmatmul.mubr.f32.gmra.mrb[0].mxu0 %v361
    %v471 = vpop.f32.mrb[0].mxu0
    %v472 = vadd.f32 0.0, %v471
    %v473 = vpop.f32.mrb[0].mxu0
    %474 = vmatprep.mubr.f32.mxu0 0.0
    %475 = vmatmul.mubr.f32.gmra.mrb[0].mxu0 %v362
    %v476 = vpop.f32.mrb[0].mxu0
    %v477 = vadd.f32 0.0, %v476
    %v478 = vpop.f32.mrb[0].mxu0
    %479 = vmatprep.mubr.f32.mxu0 0.0
    %480 = vmatmul.mubr.f32.gmra.mrb[0].mxu0 %v363
    %v481 = vpop.f32.mrb[0].mxu0
    %v482 = vadd.f32 0.0, %v481
    %v483 = vpop.f32.mrb[0].mxu0
    %484 = vdwg.mxu0
    %485 = vst [vmem:[#allocation3 + $0x18] sm:$0xff] %v447
    %486 = vst [vmem:[#allocation3 + $0x40] sm:$0xff] %v452
    %487 = vst [vmem:[#allocation3 + $0x68] sm:$0xff] %v457
    %488 = vst [vmem:[#allocation3 + $0x90] sm:$0xff] %v462
    %489 = vst [vmem:[#allocation3 + $0xb8] sm:$0xff] %v467
    %490 = vst [vmem:[#allocation3 + $0xe0] sm:$0xff] %v472
    %491 = vst [vmem:[#allocation3 + $0x108] sm:$0xff] %v477
    %492 = vst [vmem:[#allocation3 + $0x130] sm:$0xff] %v482
    %s493 = scalar_lea.vmem %s1, 192
    %v494 = vld [vmem:[%s493] sm:$0xff]
    %v495 = vld [vmem:[%s493 + $0x8] sm:$0xff]
    %v496 = vld [vmem:[%s493 + $0x10] sm:$0xff]
    %v497 = vld [vmem:[%s493 + $0x18] sm:$0xff]
    %v498 = vld [vmem:[%s493 + $0x20] sm:$0xff]
    %v499 = vld [vmem:[%s493 + $0x28] sm:$0xff]
    %v500 = vld [vmem:[%s493 + $0x30] sm:$0xff]
    %v501 = vld [vmem:[%s493 + $0x38] sm:$0xff]
    %v502 = vld [vmem:[#allocation2] sm:$0xff]
    %v503 = vld [vmem:[#allocation2 + $0x8] sm:$0xff]
    %v504 = vld [vmem:[#allocation2 + $0x10] sm:$0xff]
    %v505 = vld [vmem:[#allocation2 + $0x18] sm:$0xff]
    %v506 = vld [vmem:[#allocation2 + $0x20] sm:$0xff]
    %v507 = vld [vmem:[#allocation2 + $0x28] sm:$0xff]
    %v508 = vld [vmem:[#allocation2 + $0x30] sm:$0xff]
    %v509 = vld [vmem:[#allocation2 + $0x38] sm:$0xff]
    %v510 = vld [vmem:[#allocation2 + $0x40] sm:$0xff]
    %v511 = vld [vmem:[#allocation2 + $0x48] sm:$0xff]
    %v512 = vld [vmem:[#allocation2 + $0x50] sm:$0xff]
    %v513 = vld [vmem:[#allocation2 + $0x58] sm:$0xff]
    %v514 = vld [vmem:[#allocation2 + $0x60] sm:$0xff]
    %v515 = vld [vmem:[#allocation2 + $0x68] sm:$0xff]
    %v516 = vld [vmem:[#allocation2 + $0x70] sm:$0xff]
    %v517 = vld [vmem:[#allocation2 + $0x78] sm:$0xff]
    %518 = vmatprep.subr.mxu0 0.0
    %519 = vmatpush1.msra.mxu0 %v502
    %520 = vmatprep.subr.mxu0 0.0
    %521 = vmatpush1.msra.mxu0 %v503
    %522 = vmatprep.subr.mxu0 0.0
    %523 = vmatpush1.msra.mxu0 %v504
    %524 = vmatprep.subr.mxu0 0.0
    %525 = vmatpush1.msra.mxu0 %v505
    %526 = vmatprep.subr.mxu0 0.0
    %527 = vmatpush1.msra.mxu0 %v506
    %528 = vmatprep.subr.mxu0 0.0
    %529 = vmatpush1.msra.mxu0 %v507
    %530 = vmatprep.subr.mxu0 0.0
    %531 = vmatpush1.msra.mxu0 %v508
    %532 = vmatprep.subr.mxu0 0.0
    %533 = vmatpush1.msra.mxu0 %v509
    %534 = vmatprep.subr.mxu0 0.0
    %535 = vmatpush1.msra.mxu0 %v510
    %536 = vmatprep.subr.mxu0 0.0
    %537 = vmatpush1.msra.mxu0 %v511
    %538 = vmatprep.subr.mxu0 0.0
    %539 = vmatpush1.msra.mxu0 %v512
    %540 = vmatprep.subr.mxu0 0.0
    %541 = vmatpush1.msra.mxu0 %v513
    %542 = vmatprep.subr.mxu0 0.0
    %543 = vmatpush1.msra.mxu0 %v514
    %544 = vmatprep.subr.mxu0 0.0
    %545 = vmatpush1.msra.mxu0 %v515
    %546 = vmatprep.subr.mxu0 0.0
    %547 = vmatpush1.msra.mxu0 %v516
    %548 = vmatprep.subr.mxu0 0.0
    %549 = vmatpush1.msra.mxu0 %v517
    %550 = vmatprep.subr.mxu0 0.0
    %551 = vmatpush1.msra.mxu0 0.0
    %552 = vmatprep.subr.mxu0 0.0
    %553 = vmatpush1.msra.mxu0 0.0
    %554 = vmatprep.subr.mxu0 0.0
    %555 = vmatpush1.msra.mxu0 0.0
    %556 = vmatprep.subr.mxu0 0.0
    %557 = vmatpush1.msra.mxu0 0.0
    %558 = vmatprep.subr.mxu0 0.0
    %559 = vmatpush1.msra.mxu0 0.0
    %560 = vmatprep.subr.mxu0 0.0
    %561 = vmatpush1.msra.mxu0 0.0
    %562 = vmatprep.subr.mxu0 0.0
    %563 = vmatpush1.msra.mxu0 0.0
    %564 = vmatprep.subr.mxu0 0.0
    %565 = vmatpush1.msra.mxu0 0.0
    %566 = vmatprep.subr.mxu0 0.0
    %567 = vmatpush1.msra.mxu0 0.0
    %568 = vmatprep.subr.mxu0 0.0
    %569 = vmatpush1.msra.mxu0 0.0
    %570 = vmatprep.subr.mxu0 0.0
    %571 = vmatpush1.msra.mxu0 0.0
    %572 = vmatprep.subr.mxu0 0.0
    %573 = vmatpush1.msra.mxu0 0.0
    %574 = vmatprep.subr.mxu0 0.0
    %575 = vmatpush1.msra.mxu0 0.0
    %576 = vmatprep.subr.mxu0 0.0
    %577 = vmatpush1.msra.mxu0 0.0
    %578 = vmatprep.subr.mxu0 0.0
    %579 = vmatpush1.msra.mxu0 0.0
    %580 = vmatprep.subr.mxu0 0.0
    %581 = vmatpush1.msra.mxu0 0.0
    %582 = vmatprep.mubr.f32.mxu0 0.0
    %583 = vmatmul.mubr.f32.gmra.mrb[0].mxu0 %v494
    %v584 = vpop.f32.mrb[0].mxu0
    %v585 = vadd.f32 0.0, %v584
    %v586 = vpop.f32.mrb[0].mxu0
    %587 = vmatprep.mubr.f32.mxu0 0.0
    %588 = vmatmul.mubr.f32.gmra.mrb[0].mxu0 %v495
    %v589 = vpop.f32.mrb[0].mxu0
    %v590 = vadd.f32 0.0, %v589
    %v591 = vpop.f32.mrb[0].mxu0
    %592 = vmatprep.mubr.f32.mxu0 0.0
    %593 = vmatmul.mubr.f32.gmra.mrb[0].mxu0 %v496
    %v594 = vpop.f32.mrb[0].mxu0
    %v595 = vadd.f32 0.0, %v594
    %v596 = vpop.f32.mrb[0].mxu0
    %597 = vmatprep.mubr.f32.mxu0 0.0
    %598 = vmatmul.mubr.f32.gmra.mrb[0].mxu0 %v497
    %v599 = vpop.f32.mrb[0].mxu0
    %v600 = vadd.f32 0.0, %v599
    %v601 = vpop.f32.mrb[0].mxu0
    %602 = vmatprep.mubr.f32.mxu0 0.0
    %603 = vmatmul.mubr.f32.gmra.mrb[0].mxu0 %v498
    %v604 = vpop.f32.mrb[0].mxu0
    %v605 = vadd.f32 0.0, %v604
    %v606 = vpop.f32.mrb[0].mxu0
    %607 = vmatprep.mubr.f32.mxu0 0.0
    %608 = vmatmul.mubr.f32.gmra.mrb[0].mxu0 %v499
    %v609 = vpop.f32.mrb[0].mxu0
    %v610 = vadd.f32 0.0, %v609
    %v611 = vpop.f32.mrb[0].mxu0
    %612 = vmatprep.mubr.f32.mxu0 0.0
    %613 = vmatmul.mubr.f32.gmra.mrb[0].mxu0 %v500
    %v614 = vpop.f32.mrb[0].mxu0
    %v615 = vadd.f32 0.0, %v614
    %v616 = vpop.f32.mrb[0].mxu0
    %617 = vmatprep.mubr.f32.mxu0 0.0
    %618 = vmatmul.mubr.f32.gmra.mrb[0].mxu0 %v501
    %v619 = vpop.f32.mrb[0].mxu0
    %v620 = vadd.f32 0.0, %v619
    %v621 = vpop.f32.mrb[0].mxu0
    %622 = vdwg.mxu0
    %623 = vst [vmem:[#allocation3 + $0x20] sm:$0xff] %v585
    %624 = vst [vmem:[#allocation3 + $0x48] sm:$0xff] %v590
    %625 = vst [vmem:[#allocation3 + $0x70] sm:$0xff] %v595
    %626 = vst [vmem:[#allocation3 + $0x98] sm:$0xff] %v600
    %627 = vst [vmem:[#allocation3 + $0xc0] sm:$0xff] %v605
    %628 = vst [vmem:[#allocation3 + $0xe8] sm:$0xff] %v610
    %629 = vst [vmem:[#allocation3 + $0x110] sm:$0xff] %v615
    %630 = vst [vmem:[#allocation3 + $0x138] sm:$0xff] %v620
    %v631 = vld [vmem:[#allocation3] sm:$0xff]
    %v632 = vld [vmem:[#allocation3 + $0x8] sm:$0xff]
    %v633 = vld [vmem:[#allocation3 + $0x10] sm:$0xff]
    %v634 = vld [vmem:[#allocation3 + $0x18] sm:$0xff]
    %v635 = vld [vmem:[#allocation3 + $0x20] sm:$0xff]
    %v636 = vld [vmem:[#allocation3 + $0x28] sm:$0xff]
    %v637 = vld [vmem:[#allocation3 + $0x30] sm:$0xff]
    %v638 = vld [vmem:[#allocation3 + $0x38] sm:$0xff]
    %v639 = vld [vmem:[#allocation3 + $0x40] sm:$0xff]
    %v640 = vld [vmem:[#allocation3 + $0x48] sm:$0xff]
    %v641 = vld [vmem:[#allocation3 + $0x50] sm:$0xff]
    %v642 = vld [vmem:[#allocation3 + $0x58] sm:$0xff]
    %v643 = vld [vmem:[#allocation3 + $0x60] sm:$0xff]
    %v644 = vld [vmem:[#allocation3 + $0x68] sm:$0xff]
    %v645 = vld [vmem:[#allocation3 + $0x70] sm:$0xff]
    %v646 = vld [vmem:[#allocation3 + $0x78] sm:$0xff]
    %v647 = vld [vmem:[#allocation3 + $0x80] sm:$0xff]
    %v648 = vld [vmem:[#allocation3 + $0x88] sm:$0xff]
    %v649 = vld [vmem:[#allocation3 + $0x90] sm:$0xff]
    %v650 = vld [vmem:[#allocation3 + $0x98] sm:$0xff]
    %v651 = vld [vmem:[#allocation3 + $0xa0] sm:$0xff]
    %v652 = vld [vmem:[#allocation3 + $0xa8] sm:$0xff]
    %v653 = vld [vmem:[#allocation3 + $0xb0] sm:$0xff]
    %v654 = vld [vmem:[#allocation3 + $0xb8] sm:$0xff]
    %v655 = vld [vmem:[#allocation3 + $0xc0] sm:$0xff]
    %v656 = vld [vmem:[#allocation3 + $0xc8] sm:$0xff]
    %v657 = vld [vmem:[#allocation3 + $0xd0] sm:$0xff]
    %v658 = vld [vmem:[#allocation3 + $0xd8] sm:$0xff]
    %v659 = vld [vmem:[#allocation3 + $0xe0] sm:$0xff]
    %v660 = vld [vmem:[#allocation3 + $0xe8] sm:$0xff]
    %v661 = vld [vmem:[#allocation3 + $0xf0] sm:$0xff]
    %v662 = vld [vmem:[#allocation3 + $0xf8] sm:$0xff]
    %v663 = vld [vmem:[#allocation3 + $0x100] sm:$0xff]
    %v664 = vld [vmem:[#allocation3 + $0x108] sm:$0xff]
    %v665 = vld [vmem:[#allocation3 + $0x110] sm:$0xff]
    %v666 = vld [vmem:[#allocation3 + $0x118] sm:$0xff]
    %v667 = vld [vmem:[#allocation3 + $0x120] sm:$0xff]
    %v668 = vld [vmem:[#allocation3 + $0x128] sm:$0xff]
    %v669 = vld [vmem:[#allocation3 + $0x130] sm:$0xff]
    %v670 = vld [vmem:[#allocation3 + $0x138] sm:$0xff]
    %v671 = vld [vmem:[#allocation4] sm:$0xff]
    %v672 = vld [vmem:[#allocation4 + $0x8] sm:$0xff]
    %v673 = vld [vmem:[#allocation4 + $0x10] sm:$0xff]
    %v674 = vld [vmem:[#allocation4 + $0x18] sm:$0xff]
    %v675 = vld [vmem:[#allocation4 + $0x20] sm:$0xff]
    %v676 = vld [vmem:[#allocation4 + $0x28] sm:$0xff]
    %v677 = vld [vmem:[#allocation4 + $0x30] sm:$0xff]
    %v678 = vld [vmem:[#allocation4 + $0x38] sm:$0xff]
    %v679 = vld [vmem:[#allocation4 + $0x40] sm:$0xff]
    %v680 = vld [vmem:[#allocation4 + $0x48] sm:$0xff]
    %v681 = vld [vmem:[#allocation4 + $0x50] sm:$0xff]
    %v682 = vld [vmem:[#allocation4 + $0x58] sm:$0xff]
    %v683 = vld [vmem:[#allocation4 + $0x60] sm:$0xff]
    %v684 = vld [vmem:[#allocation4 + $0x68] sm:$0xff]
    %v685 = vld [vmem:[#allocation4 + $0x70] sm:$0xff]
    %v686 = vld [vmem:[#allocation4 + $0x78] sm:$0xff]
    %v687 = vld [vmem:[#allocation4 + $0x80] sm:$0xff]
    %v688 = vld [vmem:[#allocation4 + $0x88] sm:$0xff]
    %v689 = vld [vmem:[#allocation4 + $0x90] sm:$0xff]
    %v690 = vld [vmem:[#allocation4 + $0x98] sm:$0xff]
    %v691 = vld [vmem:[#allocation4 + $0xa0] sm:$0xff]
    %v692 = vld [vmem:[#allocation4 + $0xa8] sm:$0xff]
    %v693 = vld [vmem:[#allocation4 + $0xb0] sm:$0xff]
    %v694 = vld [vmem:[#allocation4 + $0xb8] sm:$0xff]
    %v695 = vld [vmem:[#allocation4 + $0xc0] sm:$0xff]
    %v696 = vld [vmem:[#allocation4 + $0xc8] sm:$0xff]
    %v697 = vld [vmem:[#allocation4 + $0xd0] sm:$0xff]
    %v698 = vld [vmem:[#allocation4 + $0xd8] sm:$0xff]
    %v699 = vld [vmem:[#allocation4 + $0xe0] sm:$0xff]
    %v700 = vld [vmem:[#allocation4 + $0xe8] sm:$0xff]
    %v701 = vld [vmem:[#allocation4 + $0xf0] sm:$0xff]
    %v702 = vld [vmem:[#allocation4 + $0xf8] sm:$0xff]
    %v703 = vld [vmem:[#allocation4 + $0x100] sm:$0xff]
    %v704 = vld [vmem:[#allocation4 + $0x108] sm:$0xff]
    %v705 = vld [vmem:[#allocation4 + $0x110] sm:$0xff]
    %v706 = vld [vmem:[#allocation4 + $0x118] sm:$0xff]
    %v707 = vld [vmem:[#allocation4 + $0x120] sm:$0xff]
    %v708 = vld [vmem:[#allocation4 + $0x128] sm:$0xff]
    %v709 = vld [vmem:[#allocation4 + $0x130] sm:$0xff]
    %v710 = vld [vmem:[#allocation4 + $0x138] sm:$0xff]
    %v711 = vld [vmem:[#allocation4 + $0x140] sm:$0xff]
    %v712 = vld [vmem:[#allocation4 + $0x148] sm:$0xff]
    %v713 = vld [vmem:[#allocation4 + $0x150] sm:$0xff]
    %v714 = vld [vmem:[#allocation4 + $0x158] sm:$0xff]
    %v715 = vld [vmem:[#allocation4 + $0x160] sm:$0xff]
    %v716 = vld [vmem:[#allocation4 + $0x168] sm:$0xff]
    %v717 = vld [vmem:[#allocation4 + $0x170] sm:$0xff]
    %v718 = vld [vmem:[#allocation4 + $0x178] sm:$0xff]
    %v719 = vld [vmem:[#allocation4 + $0x180] sm:$0xff]
    %v720 = vld [vmem:[#allocation4 + $0x188] sm:$0xff]
    %v721 = vld [vmem:[#allocation4 + $0x190] sm:$0xff]
    %v722 = vld [vmem:[#allocation4 + $0x198] sm:$0xff]
    %v723 = vld [vmem:[#allocation4 + $0x1a0] sm:$0xff]
    %v724 = vld [vmem:[#allocation4 + $0x1a8] sm:$0xff]
    %v725 = vld [vmem:[#allocation4 + $0x1b0] sm:$0xff]
    %v726 = vld [vmem:[#allocation4 + $0x1b8] sm:$0xff]
    %v727 = vld [vmem:[#allocation4 + $0x1c0] sm:$0xff]
    %v728 = vld [vmem:[#allocation4 + $0x1c8] sm:$0xff]
    %v729 = vld [vmem:[#allocation4 + $0x1d0] sm:$0xff]
    %v730 = vld [vmem:[#allocation4 + $0x1d8] sm:$0xff]
    %v731 = vld [vmem:[#allocation4 + $0x1e0] sm:$0xff]
    %v732 = vld [vmem:[#allocation4 + $0x1e8] sm:$0xff]
    %v733 = vld [vmem:[#allocation4 + $0x1f0] sm:$0xff]
    %v734 = vld [vmem:[#allocation4 + $0x1f8] sm:$0xff]
    %v735 = vld [vmem:[#allocation4 + $0x200] sm:$0xff]
    %v736 = vld [vmem:[#allocation4 + $0x208] sm:$0xff]
    %v737 = vld [vmem:[#allocation4 + $0x210] sm:$0xff]
    %v738 = vld [vmem:[#allocation4 + $0x218] sm:$0xff]
    %v739 = vld [vmem:[#allocation4 + $0x220] sm:$0xff]
    %v740 = vld [vmem:[#allocation4 + $0x228] sm:$0xff]
    %v741 = vld [vmem:[#allocation4 + $0x230] sm:$0xff]
    %v742 = vld [vmem:[#allocation4 + $0x238] sm:$0xff]
    %v743 = vld [vmem:[#allocation4 + $0x240] sm:$0xff]
    %v744 = vld [vmem:[#allocation4 + $0x248] sm:$0xff]
    %v745 = vld [vmem:[#allocation4 + $0x250] sm:$0xff]
    %v746 = vld [vmem:[#allocation4 + $0x258] sm:$0xff]
    %v747 = vld [vmem:[#allocation4 + $0x260] sm:$0xff]
    %v748 = vld [vmem:[#allocation4 + $0x268] sm:$0xff]
    %v749 = vld [vmem:[#allocation4 + $0x270] sm:$0xff]
    %v750 = vld [vmem:[#allocation4 + $0x278] sm:$0xff]
    %v751 = vld [vmem:[%s3] sm:$0x1]
    %v753 = vlaneseq
    %v754 = vshrl.u32 %v753, 7
    %v755 = vsub.s32 0, %v754
    %v756 = vrot.slane %v751, %v755
    %758 = vmatprep.subr.mxu0 0.0
    %759 = vmatpush1.msra.mxu0 %v671
    %760 = vmatprep.subr.mxu0 0.0
    %761 = vmatpush1.msra.mxu0 %v672
    %762 = vmatprep.subr.mxu0 0.0
    %763 = vmatpush1.msra.mxu0 %v673
    %764 = vmatprep.subr.mxu0 0.0
    %765 = vmatpush1.msra.mxu0 %v674
    %766 = vmatprep.subr.mxu0 0.0
    %767 = vmatpush1.msra.mxu0 %v675
    %768 = vmatprep.subr.mxu0 0.0
    %769 = vmatpush1.msra.mxu0 %v676
    %770 = vmatprep.subr.mxu0 0.0
    %771 = vmatpush1.msra.mxu0 %v677
    %772 = vmatprep.subr.mxu0 0.0
    %773 = vmatpush1.msra.mxu0 %v678
    %774 = vmatprep.subr.mxu0 0.0
    %775 = vmatpush1.msra.mxu0 %v679
    %776 = vmatprep.subr.mxu0 0.0
    %777 = vmatpush1.msra.mxu0 %v680
    %778 = vmatprep.subr.mxu0 0.0
    %779 = vmatpush1.msra.mxu0 %v681
    %780 = vmatprep.subr.mxu0 0.0
    %781 = vmatpush1.msra.mxu0 %v682
    %782 = vmatprep.subr.mxu0 0.0
    %783 = vmatpush1.msra.mxu0 %v683
    %784 = vmatprep.subr.mxu0 0.0
    %785 = vmatpush1.msra.mxu0 %v684
    %786 = vmatprep.subr.mxu0 0.0
    %787 = vmatpush1.msra.mxu0 %v685
    %788 = vmatprep.subr.mxu0 0.0
    %789 = vmatpush1.msra.mxu0 %v686
    %790 = vmatprep.subr.mxu0 0.0
    %791 = vmatpush1.msra.mxu0 %v687
    %792 = vmatprep.subr.mxu0 0.0
    %793 = vmatpush1.msra.mxu0 %v688
    %794 = vmatprep.subr.mxu0 0.0
    %795 = vmatpush1.msra.mxu0 %v689
    %796 = vmatprep.subr.mxu0 0.0
    %797 = vmatpush1.msra.mxu0 %v690
    %798 = vmatprep.subr.mxu0 0.0
    %799 = vmatpush1.msra.mxu0 %v691
    %800 = vmatprep.subr.mxu0 0.0
    %801 = vmatpush1.msra.mxu0 %v692
    %802 = vmatprep.subr.mxu0 0.0
    %803 = vmatpush1.msra.mxu0 %v693
    %804 = vmatprep.subr.mxu0 0.0
    %805 = vmatpush1.msra.mxu0 %v694
    %806 = vmatprep.subr.mxu0 0.0
    %807 = vmatpush1.msra.mxu0 %v695
    %808 = vmatprep.subr.mxu0 0.0
    %809 = vmatpush1.msra.mxu0 %v696
    %810 = vmatprep.subr.mxu0 0.0
    %811 = vmatpush1.msra.mxu0 %v697
    %812 = vmatprep.subr.mxu0 0.0
    %813 = vmatpush1.msra.mxu0 %v698
    %814 = vmatprep.subr.mxu0 0.0
    %815 = vmatpush1.msra.mxu0 %v699
    %816 = vmatprep.subr.mxu0 0.0
    %817 = vmatpush1.msra.mxu0 %v700
    %818 = vmatprep.subr.mxu0 0.0
    %819 = vmatpush1.msra.mxu0 %v701
    %820 = vmatprep.subr.mxu0 0.0
    %821 = vmatpush1.msra.mxu0 %v702
    %822 = vmatprep.mubr.f32.mxu0 %v632
    %823 = vmatmul.mubr.f32.gmra.mrb[0].mxu0 %v631
    %v824 = vpop.f32.mrb[0].mxu0
    %v825 = vadd.f32 %v756, %v824
    %v826 = vpop.f32.mrb[0].mxu0
    %827 = vmatprep.mubr.f32.mxu0 %v637
    %828 = vmatmul.mubr.f32.gmra.mrb[0].mxu0 %v636
    %v829 = vpop.f32.mrb[0].mxu0
    %v830 = vadd.f32 %v756, %v829
    %v831 = vpop.f32.mrb[0].mxu0
    %832 = vmatprep.mubr.f32.mxu0 %v642
    %833 = vmatmul.mubr.f32.gmra.mrb[0].mxu0 %v641
    %v834 = vpop.f32.mrb[0].mxu0
    %v835 = vadd.f32 %v756, %v834
    %v836 = vpop.f32.mrb[0].mxu0
    %837 = vmatprep.mubr.f32.mxu0 %v647
    %838 = vmatmul.mubr.f32.gmra.mrb[0].mxu0 %v646
    %v839 = vpop.f32.mrb[0].mxu0
    %v840 = vadd.f32 %v756, %v839
    %v841 = vpop.f32.mrb[0].mxu0
    %842 = vmatprep.mubr.f32.mxu0 %v652
    %843 = vmatmul.mubr.f32.gmra.mrb[0].mxu0 %v651
    %v844 = vpop.f32.mrb[0].mxu0
    %v845 = vadd.f32 %v756, %v844
    %v846 = vpop.f32.mrb[0].mxu0
    %847 = vmatprep.mubr.f32.mxu0 %v657
    %848 = vmatmul.mubr.f32.gmra.mrb[0].mxu0 %v656
    %v849 = vpop.f32.mrb[0].mxu0
    %v850 = vadd.f32 %v756, %v849
    %v851 = vpop.f32.mrb[0].mxu0
    %852 = vmatprep.mubr.f32.mxu0 %v662
    %853 = vmatmul.mubr.f32.gmra.mrb[0].mxu0 %v661
    %v854 = vpop.f32.mrb[0].mxu0
    %v855 = vadd.f32 %v756, %v854
    %v856 = vpop.f32.mrb[0].mxu0
    %857 = vmatprep.mubr.f32.mxu0 %v667
    %858 = vmatmul.mubr.f32.gmra.mrb[0].mxu0 %v666
    %v859 = vpop.f32.mrb[0].mxu0
    %v860 = vadd.f32 %v756, %v859
    %v861 = vpop.f32.mrb[0].mxu0
    %862 = vdwg.mxu0
    %863 = vmatprep.subr.mxu0 0.0
    %864 = vmatpush1.msra.mxu0 %v703
    %865 = vmatprep.subr.mxu0 0.0
    %866 = vmatpush1.msra.mxu0 %v704
    %867 = vmatprep.subr.mxu0 0.0
    %868 = vmatpush1.msra.mxu0 %v705
    %869 = vmatprep.subr.mxu0 0.0
    %870 = vmatpush1.msra.mxu0 %v706
    %871 = vmatprep.subr.mxu0 0.0
    %872 = vmatpush1.msra.mxu0 %v707
    %873 = vmatprep.subr.mxu0 0.0
    %874 = vmatpush1.msra.mxu0 %v708
    %875 = vmatprep.subr.mxu0 0.0
    %876 = vmatpush1.msra.mxu0 %v709
    %877 = vmatprep.subr.mxu0 0.0
    %878 = vmatpush1.msra.mxu0 %v710
    %879 = vmatprep.subr.mxu0 0.0
    %880 = vmatpush1.msra.mxu0 %v711
    %881 = vmatprep.subr.mxu0 0.0
    %882 = vmatpush1.msra.mxu0 %v712
    %883 = vmatprep.subr.mxu0 0.0
    %884 = vmatpush1.msra.mxu0 %v713
    %885 = vmatprep.subr.mxu0 0.0
    %886 = vmatpush1.msra.mxu0 %v714
    %887 = vmatprep.subr.mxu0 0.0
    %888 = vmatpush1.msra.mxu0 %v715
    %889 = vmatprep.subr.mxu0 0.0
    %890 = vmatpush1.msra.mxu0 %v716
    %891 = vmatprep.subr.mxu0 0.0
    %892 = vmatpush1.msra.mxu0 %v717
    %893 = vmatprep.subr.mxu0 0.0
    %894 = vmatpush1.msra.mxu0 %v718
    %895 = vmatprep.subr.mxu0 0.0
    %896 = vmatpush1.msra.mxu0 %v719
    %897 = vmatprep.subr.mxu0 0.0
    %898 = vmatpush1.msra.mxu0 %v720
    %899 = vmatprep.subr.mxu0 0.0
    %900 = vmatpush1.msra.mxu0 %v721
    %901 = vmatprep.subr.mxu0 0.0
    %902 = vmatpush1.msra.mxu0 %v722
    %903 = vmatprep.subr.mxu0 0.0
    %904 = vmatpush1.msra.mxu0 %v723
    %905 = vmatprep.subr.mxu0 0.0
    %906 = vmatpush1.msra.mxu0 %v724
    %907 = vmatprep.subr.mxu0 0.0
    %908 = vmatpush1.msra.mxu0 %v725
    %909 = vmatprep.subr.mxu0 0.0
    %910 = vmatpush1.msra.mxu0 %v726
    %911 = vmatprep.subr.mxu0 0.0
    %912 = vmatpush1.msra.mxu0 %v727
    %913 = vmatprep.subr.mxu0 0.0
    %914 = vmatpush1.msra.mxu0 %v728
    %915 = vmatprep.subr.mxu0 0.0
    %916 = vmatpush1.msra.mxu0 %v729
    %917 = vmatprep.subr.mxu0 0.0
    %918 = vmatpush1.msra.mxu0 %v730
    %919 = vmatprep.subr.mxu0 0.0
    %920 = vmatpush1.msra.mxu0 %v731
    %921 = vmatprep.subr.mxu0 0.0
    %922 = vmatpush1.msra.mxu0 %v732
    %923 = vmatprep.subr.mxu0 0.0
    %924 = vmatpush1.msra.mxu0 %v733
    %925 = vmatprep.subr.mxu0 0.0
    %926 = vmatpush1.msra.mxu0 %v734
    %927 = vmatprep.mubr.f32.mxu0 %v634
    %928 = vmatmul.mubr.f32.gmra.mrb[0].mxu0 %v633
    %v929 = vpop.f32.mrb[0].mxu0
    %v930 = vadd.f32 %v825, %v929
    %v931 = vpop.f32.mrb[0].mxu0
    %932 = vmatprep.mubr.f32.mxu0 %v639
    %933 = vmatmul.mubr.f32.gmra.mrb[0].mxu0 %v638
    %v934 = vpop.f32.mrb[0].mxu0
    %v935 = vadd.f32 %v830, %v934
    %v936 = vpop.f32.mrb[0].mxu0
    %937 = vmatprep.mubr.f32.mxu0 %v644
    %938 = vmatmul.mubr.f32.gmra.mrb[0].mxu0 %v643
    %v939 = vpop.f32.mrb[0].mxu0
    %v940 = vadd.f32 %v835, %v939
    %v941 = vpop.f32.mrb[0].mxu0
    %942 = vmatprep.mubr.f32.mxu0 %v649
    %943 = vmatmul.mubr.f32.gmra.mrb[0].mxu0 %v648
    %v944 = vpop.f32.mrb[0].mxu0
    %v945 = vadd.f32 %v840, %v944
    %v946 = vpop.f32.mrb[0].mxu0
    %947 = vmatprep.mubr.f32.mxu0 %v654
    %948 = vmatmul.mubr.f32.gmra.mrb[0].mxu0 %v653
    %v949 = vpop.f32.mrb[0].mxu0
    %v950 = vadd.f32 %v845, %v949
    %v951 = vpop.f32.mrb[0].mxu0
    %952 = vmatprep.mubr.f32.mxu0 %v659
    %953 = vmatmul.mubr.f32.gmra.mrb[0].mxu0 %v658
    %v954 = vpop.f32.mrb[0].mxu0
    %v955 = vadd.f32 %v850, %v954
    %v956 = vpop.f32.mrb[0].mxu0
    %957 = vmatprep.mubr.f32.mxu0 %v664
    %958 = vmatmul.mubr.f32.gmra.mrb[0].mxu0 %v663
    %v959 = vpop.f32.mrb[0].mxu0
    %v960 = vadd.f32 %v855, %v959
    %v961 = vpop.f32.mrb[0].mxu0
    %962 = vmatprep.mubr.f32.mxu0 %v669
    %963 = vmatmul.mubr.f32.gmra.mrb[0].mxu0 %v668
    %v964 = vpop.f32.mrb[0].mxu0
    %v965 = vadd.f32 %v860, %v964
    %v966 = vpop.f32.mrb[0].mxu0
    %967 = vdwg.mxu0
    %968 = vmatprep.subr.mxu0 0.0
    %969 = vmatpush1.msra.mxu0 %v735
    %970 = vmatprep.subr.mxu0 0.0
    %971 = vmatpush1.msra.mxu0 %v736
    %972 = vmatprep.subr.mxu0 0.0
    %973 = vmatpush1.msra.mxu0 %v737
    %974 = vmatprep.subr.mxu0 0.0
    %975 = vmatpush1.msra.mxu0 %v738
    %976 = vmatprep.subr.mxu0 0.0
    %977 = vmatpush1.msra.mxu0 %v739
    %978 = vmatprep.subr.mxu0 0.0
    %979 = vmatpush1.msra.mxu0 %v740
    %980 = vmatprep.subr.mxu0 0.0
    %981 = vmatpush1.msra.mxu0 %v741
    %982 = vmatprep.subr.mxu0 0.0
    %983 = vmatpush1.msra.mxu0 %v742
    %984 = vmatprep.subr.mxu0 0.0
    %985 = vmatpush1.msra.mxu0 %v743
    %986 = vmatprep.subr.mxu0 0.0
    %987 = vmatpush1.msra.mxu0 %v744
    %988 = vmatprep.subr.mxu0 0.0
    %989 = vmatpush1.msra.mxu0 %v745
    %990 = vmatprep.subr.mxu0 0.0
    %991 = vmatpush1.msra.mxu0 %v746
    %992 = vmatprep.subr.mxu0 0.0
    %993 = vmatpush1.msra.mxu0 %v747
    %994 = vmatprep.subr.mxu0 0.0
    %995 = vmatpush1.msra.mxu0 %v748
    %996 = vmatprep.subr.mxu0 0.0
    %997 = vmatpush1.msra.mxu0 %v749
    %998 = vmatprep.subr.mxu0 0.0
    %999 = vmatpush1.msra.mxu0 %v750
    %1000 = vmatprep.subr.mxu0 0.0
    %1001 = vmatpush1.msra.mxu0 0.0
    %1002 = vmatprep.subr.mxu0 0.0
    %1003 = vmatpush1.msra.mxu0 0.0
    %1004 = vmatprep.subr.mxu0 0.0
    %1005 = vmatpush1.msra.mxu0 0.0
    %1006 = vmatprep.subr.mxu0 0.0
    %1007 = vmatpush1.msra.mxu0 0.0
    %1008 = vmatprep.subr.mxu0 0.0
    %1009 = vmatpush1.msra.mxu0 0.0
    %1010 = vmatprep.subr.mxu0 0.0
    %1011 = vmatpush1.msra.mxu0 0.0
    %1012 = vmatprep.subr.mxu0 0.0
    %1013 = vmatpush1.msra.mxu0 0.0
    %1014 = vmatprep.subr.mxu0 0.0
    %1015 = vmatpush1.msra.mxu0 0.0
    %1016 = vmatprep.subr.mxu0 0.0
    %1017 = vmatpush1.msra.mxu0 0.0
    %1018 = vmatprep.subr.mxu0 0.0
    %1019 = vmatpush1.msra.mxu0 0.0
    %1020 = vmatprep.subr.mxu0 0.0
    %1021 = vmatpush1.msra.mxu0 0.0
    %1022 = vmatprep.subr.mxu0 0.0
    %1023 = vmatpush1.msra.mxu0 0.0
    %1024 = vmatprep.subr.mxu0 0.0
    %1025 = vmatpush1.msra.mxu0 0.0
    %1026 = vmatprep.subr.mxu0 0.0
    %1027 = vmatpush1.msra.mxu0 0.0
    %1028 = vmatprep.subr.mxu0 0.0
    %1029 = vmatpush1.msra.mxu0 0.0
    %1030 = vmatprep.subr.mxu0 0.0
    %1031 = vmatpush1.msra.mxu0 0.0
    %1032 = vmatprep.mubr.f32.mxu0 0.0
    %1033 = vmatmul.mubr.f32.gmra.mrb[0].mxu0 %v635
    %v1034 = vpop.f32.mrb[0].mxu0
    %v1035 = vadd.f32 %v930, %v1034
    %v1036 = vpop.f32.mrb[0].mxu0
    %1037 = vmatprep.mubr.f32.mxu0 0.0
    %1038 = vmatmul.mubr.f32.gmra.mrb[0].mxu0 %v640
    %v1039 = vpop.f32.mrb[0].mxu0
    %v1040 = vadd.f32 %v935, %v1039
    %v1041 = vpop.f32.mrb[0].mxu0
    %1042 = vmatprep.mubr.f32.mxu0 0.0
    %1043 = vmatmul.mubr.f32.gmra.mrb[0].mxu0 %v645
    %v1044 = vpop.f32.mrb[0].mxu0
    %v1045 = vadd.f32 %v940, %v1044
    %v1046 = vpop.f32.mrb[0].mxu0
    %1047 = vmatprep.mubr.f32.mxu0 0.0
    %1048 = vmatmul.mubr.f32.gmra.mrb[0].mxu0 %v650
    %v1049 = vpop.f32.mrb[0].mxu0
    %v1050 = vadd.f32 %v945, %v1049
    %v1051 = vpop.f32.mrb[0].mxu0
    %1052 = vmatprep.mubr.f32.mxu0 0.0
    %1053 = vmatmul.mubr.f32.gmra.mrb[0].mxu0 %v655
    %v1054 = vpop.f32.mrb[0].mxu0
    %v1055 = vadd.f32 %v950, %v1054
    %v1056 = vpop.f32.mrb[0].mxu0
    %1057 = vmatprep.mubr.f32.mxu0 0.0
    %1058 = vmatmul.mubr.f32.gmra.mrb[0].mxu0 %v660
    %v1059 = vpop.f32.mrb[0].mxu0
    %v1060 = vadd.f32 %v955, %v1059
    %v1061 = vpop.f32.mrb[0].mxu0
    %1062 = vmatprep.mubr.f32.mxu0 0.0
    %1063 = vmatmul.mubr.f32.gmra.mrb[0].mxu0 %v665
    %v1064 = vpop.f32.mrb[0].mxu0
    %v1065 = vadd.f32 %v960, %v1064
    %v1066 = vpop.f32.mrb[0].mxu0
    %1067 = vmatprep.mubr.f32.mxu0 0.0
    %1068 = vmatmul.mubr.f32.gmra.mrb[0].mxu0 %v670
    %v1069 = vpop.f32.mrb[0].mxu0
    %v1070 = vadd.f32 %v965, %v1069
    %v1071 = vpop.f32.mrb[0].mxu0
    %1072 = vdwg.mxu0
    %v1073 = vmul.f32 %v1035, 0.01
    %v1074 = vmul.f32 %v1040, 0.01
    %v1075 = vmul.f32 %v1045, 0.01
    %v1076 = vmul.f32 %v1050, 0.01
    %v1077 = vmul.f32 %v1055, 0.01
    %v1078 = vmul.f32 %v1060, 0.01
    %v1079 = vmul.f32 %v1065, 0.01
    %v1080 = vmul.f32 %v1070, 0.01
    %v1081 = vmax.f32 %v1035, %v1073
    %v1082 = vmax.f32 %v1040, %v1074
    %v1083 = vmax.f32 %v1045, %v1075
    %v1084 = vmax.f32 %v1050, %v1076
    %v1085 = vmax.f32 %v1055, %v1077
    %v1086 = vmax.f32 %v1060, %v1078
    %v1087 = vmax.f32 %v1065, %v1079
    %v1088 = vmax.f32 %v1070, %v1080
    %1089 = vst [vmem:[#allocation2] sm:$0xff] %v1081
    %1090 = vst [vmem:[#allocation2 + $0x8] sm:$0xff] %v1082
    %1091 = vst [vmem:[#allocation2 + $0x10] sm:$0xff] %v1083
    %1092 = vst [vmem:[#allocation2 + $0x18] sm:$0xff] %v1084
    %1093 = vst [vmem:[#allocation2 + $0x20] sm:$0xff] %v1085
    %1094 = vst [vmem:[#allocation2 + $0x28] sm:$0xff] %v1086
    %1095 = vst [vmem:[#allocation2 + $0x30] sm:$0xff] %v1087
    %1096 = vst [vmem:[#allocation2 + $0x38] sm:$0xff] %v1088
    %v1097 = vld [vmem:[#allocation2] sm:$0xff]
    %v1098 = vld [vmem:[#allocation2 + $0x8] sm:$0xff]
    %v1099 = vld [vmem:[#allocation2 + $0x10] sm:$0xff]
    %v1100 = vld [vmem:[#allocation2 + $0x18] sm:$0xff]
    %v1101 = vld [vmem:[#allocation2 + $0x20] sm:$0xff]
    %v1102 = vld [vmem:[#allocation2 + $0x28] sm:$0xff]
    %v1103 = vld [vmem:[#allocation2 + $0x30] sm:$0xff]
    %v1104 = vld [vmem:[#allocation2 + $0x38] sm:$0xff]
    %1105 = vst [vmem:[#allocation3] sm:$0xff] %v1097
    %1106 = vst [vmem:[#allocation3 + $0x28] sm:$0xff] %v1098
    %1107 = vst [vmem:[#allocation3 + $0x50] sm:$0xff] %v1099
    %1108 = vst [vmem:[#allocation3 + $0x78] sm:$0xff] %v1100
    %1109 = vst [vmem:[#allocation3 + $0xa0] sm:$0xff] %v1101
    %1110 = vst [vmem:[#allocation3 + $0xc8] sm:$0xff] %v1102
    %1111 = vst [vmem:[#allocation3 + $0xf0] sm:$0xff] %v1103
    %1112 = vst [vmem:[#allocation3 + $0x118] sm:$0xff] %v1104
    %v1113 = vld [vmem:[%s1] sm:$0xff]
    %v1114 = vld [vmem:[%s1 + $0x8] sm:$0xff]
    %v1115 = vld [vmem:[%s1 + $0x10] sm:$0xff]
    %v1116 = vld [vmem:[%s1 + $0x18] sm:$0xff]
    %v1117 = vld [vmem:[%s1 + $0x20] sm:$0xff]
    %v1118 = vld [vmem:[%s1 + $0x28] sm:$0xff]
    %v1119 = vld [vmem:[%s1 + $0x30] sm:$0xff]
    %v1120 = vld [vmem:[%s1 + $0x38] sm:$0xff]
    %v1121 = vld [vmem:[#allocation2] sm:$0xff]
    %v1122 = vld [vmem:[#allocation2 + $0x8] sm:$0xff]
    %v1123 = vld [vmem:[#allocation2 + $0x10] sm:$0xff]
    %v1124 = vld [vmem:[#allocation2 + $0x18] sm:$0xff]
    %v1125 = vld [vmem:[#allocation2 + $0x20] sm:$0xff]
    %v1126 = vld [vmem:[#allocation2 + $0x28] sm:$0xff]
    %v1127 = vld [vmem:[#allocation2 + $0x30] sm:$0xff]
    %v1128 = vld [vmem:[#allocation2 + $0x38] sm:$0xff]
    %v1129 = vld [vmem:[#allocation2 + $0x40] sm:$0xff]
    %v1130 = vld [vmem:[#allocation2 + $0x48] sm:$0xff]
    %v1131 = vld [vmem:[#allocation2 + $0x50] sm:$0xff]
    %v1132 = vld [vmem:[#allocation2 + $0x58] sm:$0xff]
    %v1133 = vld [vmem:[#allocation2 + $0x60] sm:$0xff]
    %v1134 = vld [vmem:[#allocation2 + $0x68] sm:$0xff]
    %v1135 = vld [vmem:[#allocation2 + $0x70] sm:$0xff]
    %v1136 = vld [vmem:[#allocation2 + $0x78] sm:$0xff]
    %1137 = vmatprep.subr.mxu0 0.0
    %1138 = vmatpush1.msra.mxu0 %v1121
    %1139 = vmatprep.subr.mxu0 0.0
    %1140 = vmatpush1.msra.mxu0 %v1122
    %1141 = vmatprep.subr.mxu0 0.0
    %1142 = vmatpush1.msra.mxu0 %v1123
    %1143 = vmatprep.subr.mxu0 0.0
    %1144 = vmatpush1.msra.mxu0 %v1124
    %1145 = vmatprep.subr.mxu0 0.0
    %1146 = vmatpush1.msra.mxu0 %v1125
    %1147 = vmatprep.subr.mxu0 0.0
    %1148 = vmatpush1.msra.mxu0 %v1126
    %1149 = vmatprep.subr.mxu0 0.0
    %1150 = vmatpush1.msra.mxu0 %v1127
    %1151 = vmatprep.subr.mxu0 0.0
    %1152 = vmatpush1.msra.mxu0 %v1128
    %1153 = vmatprep.subr.mxu0 0.0
    %1154 = vmatpush1.msra.mxu0 %v1129
    %1155 = vmatprep.subr.mxu0 0.0
    %1156 = vmatpush1.msra.mxu0 %v1130
    %1157 = vmatprep.subr.mxu0 0.0
    %1158 = vmatpush1.msra.mxu0 %v1131
    %1159 = vmatprep.subr.mxu0 0.0
    %1160 = vmatpush1.msra.mxu0 %v1132
    %1161 = vmatprep.subr.mxu0 0.0
    %1162 = vmatpush1.msra.mxu0 %v1133
    %1163 = vmatprep.subr.mxu0 0.0
    %1164 = vmatpush1.msra.mxu0 %v1134
    %1165 = vmatprep.subr.mxu0 0.0
    %1166 = vmatpush1.msra.mxu0 %v1135
    %1167 = vmatprep.subr.mxu0 0.0
    %1168 = vmatpush1.msra.mxu0 %v1136
    %1169 = vmatprep.subr.mxu0 0.0
    %1170 = vmatpush1.msra.mxu0 0.0
    %1171 = vmatprep.subr.mxu0 0.0
    %1172 = vmatpush1.msra.mxu0 0.0
    %1173 = vmatprep.subr.mxu0 0.0
    %1174 = vmatpush1.msra.mxu0 0.0
    %1175 = vmatprep.subr.mxu0 0.0
    %1176 = vmatpush1.msra.mxu0 0.0
    %1177 = vmatprep.subr.mxu0 0.0
    %1178 = vmatpush1.msra.mxu0 0.0
    %1179 = vmatprep.subr.mxu0 0.0
    %1180 = vmatpush1.msra.mxu0 0.0
    %1181 = vmatprep.subr.mxu0 0.0
    %1182 = vmatpush1.msra.mxu0 0.0
    %1183 = vmatprep.subr.mxu0 0.0
    %1184 = vmatpush1.msra.mxu0 0.0
    %1185 = vmatprep.subr.mxu0 0.0
    %1186 = vmatpush1.msra.mxu0 0.0
    %1187 = vmatprep.subr.mxu0 0.0
    %1188 = vmatpush1.msra.mxu0 0.0
    %1189 = vmatprep.subr.mxu0 0.0
    %1190 = vmatpush1.msra.mxu0 0.0
    %1191 = vmatprep.subr.mxu0 0.0
    %1192 = vmatpush1.msra.mxu0 0.0
    %1193 = vmatprep.subr.mxu0 0.0
    %1194 = vmatpush1.msra.mxu0 0.0
    %1195 = vmatprep.subr.mxu0 0.0
    %1196 = vmatpush1.msra.mxu0 0.0
    %1197 = vmatprep.subr.mxu0 0.0
    %1198 = vmatpush1.msra.mxu0 0.0
    %1199 = vmatprep.subr.mxu0 0.0
    %1200 = vmatpush1.msra.mxu0 0.0
    %1201 = vmatprep.mubr.f32.mxu0 0.0
    %1202 = vmatmul.mubr.f32.gmra.mrb[0].mxu0 %v1113
    %v1203 = vpop.f32.mrb[0].mxu0
    %v1204 = vadd.f32 0.0, %v1203
    %v1205 = vpop.f32.mrb[0].mxu0
    %1206 = vmatprep.mubr.f32.mxu0 0.0
    %1207 = vmatmul.mubr.f32.gmra.mrb[0].mxu0 %v1114
    %v1208 = vpop.f32.mrb[0].mxu0
    %v1209 = vadd.f32 0.0, %v1208
    %v1210 = vpop.f32.mrb[0].mxu0
    %1211 = vmatprep.mubr.f32.mxu0 0.0
    %1212 = vmatmul.mubr.f32.gmra.mrb[0].mxu0 %v1115
    %v1213 = vpop.f32.mrb[0].mxu0
    %v1214 = vadd.f32 0.0, %v1213
    %v1215 = vpop.f32.mrb[0].mxu0
    %1216 = vmatprep.mubr.f32.mxu0 0.0
    %1217 = vmatmul.mubr.f32.gmra.mrb[0].mxu0 %v1116
    %v1218 = vpop.f32.mrb[0].mxu0
    %v1219 = vadd.f32 0.0, %v1218
    %v1220 = vpop.f32.mrb[0].mxu0
    %1221 = vmatprep.mubr.f32.mxu0 0.0
    %1222 = vmatmul.mubr.f32.gmra.mrb[0].mxu0 %v1117
    %v1223 = vpop.f32.mrb[0].mxu0
    %v1224 = vadd.f32 0.0, %v1223
    %v1225 = vpop.f32.mrb[0].mxu0
    %1226 = vmatprep.mubr.f32.mxu0 0.0
    %1227 = vmatmul.mubr.f32.gmra.mrb[0].mxu0 %v1118
    %v1228 = vpop.f32.mrb[0].mxu0
    %v1229 = vadd.f32 0.0, %v1228
    %v1230 = vpop.f32.mrb[0].mxu0
    %1231 = vmatprep.mubr.f32.mxu0 0.0
    %1232 = vmatmul.mubr.f32.gmra.mrb[0].mxu0 %v1119
    %v1233 = vpop.f32.mrb[0].mxu0
    %v1234 = vadd.f32 0.0, %v1233
    %v1235 = vpop.f32.mrb[0].mxu0
    %1236 = vmatprep.mubr.f32.mxu0 0.0
    %1237 = vmatmul.mubr.f32.gmra.mrb[0].mxu0 %v1120
    %v1238 = vpop.f32.mrb[0].mxu0
    %v1239 = vadd.f32 0.0, %v1238
    %v1240 = vpop.f32.mrb[0].mxu0
    %1241 = vdwg.mxu0
    %1242 = vst [vmem:[#allocation3 + $0x8] sm:$0xff] %v1204
    %1243 = vst [vmem:[#allocation3 + $0x30] sm:$0xff] %v1209
    %1244 = vst [vmem:[#allocation3 + $0x58] sm:$0xff] %v1214
    %1245 = vst [vmem:[#allocation3 + $0x80] sm:$0xff] %v1219
    %1246 = vst [vmem:[#allocation3 + $0xa8] sm:$0xff] %v1224
    %1247 = vst [vmem:[#allocation3 + $0xd0] sm:$0xff] %v1229
    %1248 = vst [vmem:[#allocation3 + $0xf8] sm:$0xff] %v1234
    %1249 = vst [vmem:[#allocation3 + $0x120] sm:$0xff] %v1239
    %v1250 = vld [vmem:[%s217] sm:$0xff]
    %v1251 = vld [vmem:[%s217 + $0x8] sm:$0xff]
    %v1252 = vld [vmem:[%s217 + $0x10] sm:$0xff]
    %v1253 = vld [vmem:[%s217 + $0x18] sm:$0xff]
    %v1254 = vld [vmem:[%s217 + $0x20] sm:$0xff]
    %v1255 = vld [vmem:[%s217 + $0x28] sm:$0xff]
    %v1256 = vld [vmem:[%s217 + $0x30] sm:$0xff]
    %v1257 = vld [vmem:[%s217 + $0x38] sm:$0xff]
    %v1258 = vld [vmem:[#allocation2] sm:$0xff]
    %v1259 = vld [vmem:[#allocation2 + $0x8] sm:$0xff]
    %v1260 = vld [vmem:[#allocation2 + $0x10] sm:$0xff]
    %v1261 = vld [vmem:[#allocation2 + $0x18] sm:$0xff]
    %v1262 = vld [vmem:[#allocation2 + $0x20] sm:$0xff]
    %v1263 = vld [vmem:[#allocation2 + $0x28] sm:$0xff]
    %v1264 = vld [vmem:[#allocation2 + $0x30] sm:$0xff]
    %v1265 = vld [vmem:[#allocation2 + $0x38] sm:$0xff]
    %v1266 = vld [vmem:[#allocation2 + $0x40] sm:$0xff]
    %v1267 = vld [vmem:[#allocation2 + $0x48] sm:$0xff]
    %v1268 = vld [vmem:[#allocation2 + $0x50] sm:$0xff]
    %v1269 = vld [vmem:[#allocation2 + $0x58] sm:$0xff]
    %v1270 = vld [vmem:[#allocation2 + $0x60] sm:$0xff]
    %v1271 = vld [vmem:[#allocation2 + $0x68] sm:$0xff]
    %v1272 = vld [vmem:[#allocation2 + $0x70] sm:$0xff]
    %v1273 = vld [vmem:[#allocation2 + $0x78] sm:$0xff]
    %1274 = vmatprep.subr.mxu0 0.0
    %1275 = vmatpush1.msra.mxu0 %v1258
    %1276 = vmatprep.subr.mxu0 0.0
    %1277 = vmatpush1.msra.mxu0 %v1259
    %1278 = vmatprep.subr.mxu0 0.0
    %1279 = vmatpush1.msra.mxu0 %v1260
    %1280 = vmatprep.subr.mxu0 0.0
    %1281 = vmatpush1.msra.mxu0 %v1261
    %1282 = vmatprep.subr.mxu0 0.0
    %1283 = vmatpush1.msra.mxu0 %v1262
    %1284 = vmatprep.subr.mxu0 0.0
    %1285 = vmatpush1.msra.mxu0 %v1263
    %1286 = vmatprep.subr.mxu0 0.0
    %1287 = vmatpush1.msra.mxu0 %v1264
    %1288 = vmatprep.subr.mxu0 0.0
    %1289 = vmatpush1.msra.mxu0 %v1265
    %1290 = vmatprep.subr.mxu0 0.0
    %1291 = vmatpush1.msra.mxu0 %v1266
    %1292 = vmatprep.subr.mxu0 0.0
    %1293 = vmatpush1.msra.mxu0 %v1267
    %1294 = vmatprep.subr.mxu0 0.0
    %1295 = vmatpush1.msra.mxu0 %v1268
    %1296 = vmatprep.subr.mxu0 0.0
    %1297 = vmatpush1.msra.mxu0 %v1269
    %1298 = vmatprep.subr.mxu0 0.0
    %1299 = vmatpush1.msra.mxu0 %v1270
    %1300 = vmatprep.subr.mxu0 0.0
    %1301 = vmatpush1.msra.mxu0 %v1271
    %1302 = vmatprep.subr.mxu0 0.0
    %1303 = vmatpush1.msra.mxu0 %v1272
    %1304 = vmatprep.subr.mxu0 0.0
    %1305 = vmatpush1.msra.mxu0 %v1273
    %1306 = vmatprep.subr.mxu0 0.0
    %1307 = vmatpush1.msra.mxu0 0.0
    %1308 = vmatprep.subr.mxu0 0.0
    %1309 = vmatpush1.msra.mxu0 0.0
    %1310 = vmatprep.subr.mxu0 0.0
    %1311 = vmatpush1.msra.mxu0 0.0
    %1312 = vmatprep.subr.mxu0 0.0
    %1313 = vmatpush1.msra.mxu0 0.0
    %1314 = vmatprep.subr.mxu0 0.0
    %1315 = vmatpush1.msra.mxu0 0.0
    %1316 = vmatprep.subr.mxu0 0.0
    %1317 = vmatpush1.msra.mxu0 0.0
    %1318 = vmatprep.subr.mxu0 0.0
    %1319 = vmatpush1.msra.mxu0 0.0
    %1320 = vmatprep.subr.mxu0 0.0
    %1321 = vmatpush1.msra.mxu0 0.0
    %1322 = vmatprep.subr.mxu0 0.0
    %1323 = vmatpush1.msra.mxu0 0.0
    %1324 = vmatprep.subr.mxu0 0.0
    %1325 = vmatpush1.msra.mxu0 0.0
    %1326 = vmatprep.subr.mxu0 0.0
    %1327 = vmatpush1.msra.mxu0 0.0
    %1328 = vmatprep.subr.mxu0 0.0
    %1329 = vmatpush1.msra.mxu0 0.0
    %1330 = vmatprep.subr.mxu0 0.0
    %1331 = vmatpush1.msra.mxu0 0.0
    %1332 = vmatprep.subr.mxu0 0.0
    %1333 = vmatpush1.msra.mxu0 0.0
    %1334 = vmatprep.subr.mxu0 0.0
    %1335 = vmatpush1.msra.mxu0 0.0
    %1336 = vmatprep.subr.mxu0 0.0
    %1337 = vmatpush1.msra.mxu0 0.0
    %1338 = vmatprep.mubr.f32.mxu0 0.0
    %1339 = vmatmul.mubr.f32.gmra.mrb[0].mxu0 %v1250
    %v1340 = vpop.f32.mrb[0].mxu0
    %v1341 = vadd.f32 0.0, %v1340
    %v1342 = vpop.f32.mrb[0].mxu0
    %1343 = vmatprep.mubr.f32.mxu0 0.0
    %1344 = vmatmul.mubr.f32.gmra.mrb[0].mxu0 %v1251
    %v1345 = vpop.f32.mrb[0].mxu0
    %v1346 = vadd.f32 0.0, %v1345
    %v1347 = vpop.f32.mrb[0].mxu0
    %1348 = vmatprep.mubr.f32.mxu0 0.0
    %1349 = vmatmul.mubr.f32.gmra.mrb[0].mxu0 %v1252
    %v1350 = vpop.f32.mrb[0].mxu0
    %v1351 = vadd.f32 0.0, %v1350
    %v1352 = vpop.f32.mrb[0].mxu0
    %1353 = vmatprep.mubr.f32.mxu0 0.0
    %1354 = vmatmul.mubr.f32.gmra.mrb[0].mxu0 %v1253
    %v1355 = vpop.f32.mrb[0].mxu0
    %v1356 = vadd.f32 0.0, %v1355
    %v1357 = vpop.f32.mrb[0].mxu0
    %1358 = vmatprep.mubr.f32.mxu0 0.0
    %1359 = vmatmul.mubr.f32.gmra.mrb[0].mxu0 %v1254
    %v1360 = vpop.f32.mrb[0].mxu0
    %v1361 = vadd.f32 0.0, %v1360
    %v1362 = vpop.f32.mrb[0].mxu0
    %1363 = vmatprep.mubr.f32.mxu0 0.0
    %1364 = vmatmul.mubr.f32.gmra.mrb[0].mxu0 %v1255
    %v1365 = vpop.f32.mrb[0].mxu0
    %v1366 = vadd.f32 0.0, %v1365
    %v1367 = vpop.f32.mrb[0].mxu0
    %1368 = vmatprep.mubr.f32.mxu0 0.0
    %1369 = vmatmul.mubr.f32.gmra.mrb[0].mxu0 %v1256
    %v1370 = vpop.f32.mrb[0].mxu0
    %v1371 = vadd.f32 0.0, %v1370
    %v1372 = vpop.f32.mrb[0].mxu0
    %1373 = vmatprep.mubr.f32.mxu0 0.0
    %1374 = vmatmul.mubr.f32.gmra.mrb[0].mxu0 %v1257
    %v1375 = vpop.f32.mrb[0].mxu0
    %v1376 = vadd.f32 0.0, %v1375
    %v1377 = vpop.f32.mrb[0].mxu0
    %1378 = vdwg.mxu0
    %1379 = vst [vmem:[#allocation3 + $0x10] sm:$0xff] %v1341
    %1380 = vst [vmem:[#allocation3 + $0x38] sm:$0xff] %v1346
    %1381 = vst [vmem:[#allocation3 + $0x60] sm:$0xff] %v1351
    %1382 = vst [vmem:[#allocation3 + $0x88] sm:$0xff] %v1356
    %1383 = vst [vmem:[#allocation3 + $0xb0] sm:$0xff] %v1361
    %1384 = vst [vmem:[#allocation3 + $0xd8] sm:$0xff] %v1366
    %1385 = vst [vmem:[#allocation3 + $0x100] sm:$0xff] %v1371
    %1386 = vst [vmem:[#allocation3 + $0x128] sm:$0xff] %v1376
    %v1387 = vld [vmem:[%s355] sm:$0xff]
    %v1388 = vld [vmem:[%s355 + $0x8] sm:$0xff]
    %v1389 = vld [vmem:[%s355 + $0x10] sm:$0xff]
    %v1390 = vld [vmem:[%s355 + $0x18] sm:$0xff]
    %v1391 = vld [vmem:[%s355 + $0x20] sm:$0xff]
    %v1392 = vld [vmem:[%s355 + $0x28] sm:$0xff]
    %v1393 = vld [vmem:[%s355 + $0x30] sm:$0xff]
    %v1394 = vld [vmem:[%s355 + $0x38] sm:$0xff]
    %v1395 = vld [vmem:[#allocation2] sm:$0xff]
    %v1396 = vld [vmem:[#allocation2 + $0x8] sm:$0xff]
    %v1397 = vld [vmem:[#allocation2 + $0x10] sm:$0xff]
    %v1398 = vld [vmem:[#allocation2 + $0x18] sm:$0xff]
    %v1399 = vld [vmem:[#allocation2 + $0x20] sm:$0xff]
    %v1400 = vld [vmem:[#allocation2 + $0x28] sm:$0xff]
    %v1401 = vld [vmem:[#allocation2 + $0x30] sm:$0xff]
    %v1402 = vld [vmem:[#allocation2 + $0x38] sm:$0xff]
    %v1403 = vld [vmem:[#allocation2 + $0x40] sm:$0xff]
    %v1404 = vld [vmem:[#allocation2 + $0x48] sm:$0xff]
    %v1405 = vld [vmem:[#allocation2 + $0x50] sm:$0xff]
    %v1406 = vld [vmem:[#allocation2 + $0x58] sm:$0xff]
    %v1407 = vld [vmem:[#allocation2 + $0x60] sm:$0xff]
    %v1408 = vld [vmem:[#allocation2 + $0x68] sm:$0xff]
    %v1409 = vld [vmem:[#allocation2 + $0x70] sm:$0xff]
    %v1410 = vld [vmem:[#allocation2 + $0x78] sm:$0xff]
    %1411 = vmatprep.subr.mxu0 0.0
    %1412 = vmatpush1.msra.mxu0 %v1395
    %1413 = vmatprep.subr.mxu0 0.0
    %1414 = vmatpush1.msra.mxu0 %v1396
    %1415 = vmatprep.subr.mxu0 0.0
    %1416 = vmatpush1.msra.mxu0 %v1397
    %1417 = vmatprep.subr.mxu0 0.0
    %1418 = vmatpush1.msra.mxu0 %v1398
    %1419 = vmatprep.subr.mxu0 0.0
    %1420 = vmatpush1.msra.mxu0 %v1399
    %1421 = vmatprep.subr.mxu0 0.0
    %1422 = vmatpush1.msra.mxu0 %v1400
    %1423 = vmatprep.subr.mxu0 0.0
    %1424 = vmatpush1.msra.mxu0 %v1401
    %1425 = vmatprep.subr.mxu0 0.0
    %1426 = vmatpush1.msra.mxu0 %v1402
    %1427 = vmatprep.subr.mxu0 0.0
    %1428 = vmatpush1.msra.mxu0 %v1403
    %1429 = vmatprep.subr.mxu0 0.0
    %1430 = vmatpush1.msra.mxu0 %v1404
    %1431 = vmatprep.subr.mxu0 0.0
    %1432 = vmatpush1.msra.mxu0 %v1405
    %1433 = vmatprep.subr.mxu0 0.0
    %1434 = vmatpush1.msra.mxu0 %v1406
    %1435 = vmatprep.subr.mxu0 0.0
    %1436 = vmatpush1.msra.mxu0 %v1407
    %1437 = vmatprep.subr.mxu0 0.0
    %1438 = vmatpush1.msra.mxu0 %v1408
    %1439 = vmatprep.subr.mxu0 0.0
    %1440 = vmatpush1.msra.mxu0 %v1409
    %1441 = vmatprep.subr.mxu0 0.0
    %1442 = vmatpush1.msra.mxu0 %v1410
    %1443 = vmatprep.subr.mxu0 0.0
    %1444 = vmatpush1.msra.mxu0 0.0
    %1445 = vmatprep.subr.mxu0 0.0
    %1446 = vmatpush1.msra.mxu0 0.0
    %1447 = vmatprep.subr.mxu0 0.0
    %1448 = vmatpush1.msra.mxu0 0.0
    %1449 = vmatprep.subr.mxu0 0.0
    %1450 = vmatpush1.msra.mxu0 0.0
    %1451 = vmatprep.subr.mxu0 0.0
    %1452 = vmatpush1.msra.mxu0 0.0
    %1453 = vmatprep.subr.mxu0 0.0
    %1454 = vmatpush1.msra.mxu0 0.0
    %1455 = vmatprep.subr.mxu0 0.0
    %1456 = vmatpush1.msra.mxu0 0.0
    %1457 = vmatprep.subr.mxu0 0.0
    %1458 = vmatpush1.msra.mxu0 0.0
    %1459 = vmatprep.subr.mxu0 0.0
    %1460 = vmatpush1.msra.mxu0 0.0
    %1461 = vmatprep.subr.mxu0 0.0
    %1462 = vmatpush1.msra.mxu0 0.0
    %1463 = vmatprep.subr.mxu0 0.0
    %1464 = vmatpush1.msra.mxu0 0.0
    %1465 = vmatprep.subr.mxu0 0.0
    %1466 = vmatpush1.msra.mxu0 0.0
    %1467 = vmatprep.subr.mxu0 0.0
    %1468 = vmatpush1.msra.mxu0 0.0
    %1469 = vmatprep.subr.mxu0 0.0
    %1470 = vmatpush1.msra.mxu0 0.0
    %1471 = vmatprep.subr.mxu0 0.0
    %1472 = vmatpush1.msra.mxu0 0.0
    %1473 = vmatprep.subr.mxu0 0.0
    %1474 = vmatpush1.msra.mxu0 0.0
    %1475 = vmatprep.mubr.f32.mxu0 0.0
    %1476 = vmatmul.mubr.f32.gmra.mrb[0].mxu0 %v1387
    %v1477 = vpop.f32.mrb[0].mxu0
    %v1478 = vadd.f32 0.0, %v1477
    %v1479 = vpop.f32.mrb[0].mxu0
    %1480 = vmatprep.mubr.f32.mxu0 0.0
    %1481 = vmatmul.mubr.f32.gmra.mrb[0].mxu0 %v1388
    %v1482 = vpop.f32.mrb[0].mxu0
    %v1483 = vadd.f32 0.0, %v1482
    %v1484 = vpop.f32.mrb[0].mxu0
    %1485 = vmatprep.mubr.f32.mxu0 0.0
    %1486 = vmatmul.mubr.f32.gmra.mrb[0].mxu0 %v1389
    %v1487 = vpop.f32.mrb[0].mxu0
    %v1488 = vadd.f32 0.0, %v1487
    %v1489 = vpop.f32.mrb[0].mxu0
    %1490 = vmatprep.mubr.f32.mxu0 0.0
    %1491 = vmatmul.mubr.f32.gmra.mrb[0].mxu0 %v1390
    %v1492 = vpop.f32.mrb[0].mxu0
    %v1493 = vadd.f32 0.0, %v1492
    %v1494 = vpop.f32.mrb[0].mxu0
    %1495 = vmatprep.mubr.f32.mxu0 0.0
    %1496 = vmatmul.mubr.f32.gmra.mrb[0].mxu0 %v1391
    %v1497 = vpop.f32.mrb[0].mxu0
    %v1498 = vadd.f32 0.0, %v1497
    %v1499 = vpop.f32.mrb[0].mxu0
    %1500 = vmatprep.mubr.f32.mxu0 0.0
    %1501 = vmatmul.mubr.f32.gmra.mrb[0].mxu0 %v1392
    %v1502 = vpop.f32.mrb[0].mxu0
    %v1503 = vadd.f32 0.0, %v1502
    %v1504 = vpop.f32.mrb[0].mxu0
    %1505 = vmatprep.mubr.f32.mxu0 0.0
    %1506 = vmatmul.mubr.f32.gmra.mrb[0].mxu0 %v1393
    %v1507 = vpop.f32.mrb[0].mxu0
    %v1508 = vadd.f32 0.0, %v1507
    %v1509 = vpop.f32.mrb[0].mxu0
    %1510 = vmatprep.mubr.f32.mxu0 0.0
    %1511 = vmatmul.mubr.f32.gmra.mrb[0].mxu0 %v1394
    %v1512 = vpop.f32.mrb[0].mxu0
    %v1513 = vadd.f32 0.0, %v1512
    %v1514 = vpop.f32.mrb[0].mxu0
    %1515 = vdwg.mxu0
    %1516 = vst [vmem:[#allocation3 + $0x18] sm:$0xff] %v1478
    %1517 = vst [vmem:[#allocation3 + $0x40] sm:$0xff] %v1483
    %1518 = vst [vmem:[#allocation3 + $0x68] sm:$0xff] %v1488
    %1519 = vst [vmem:[#allocation3 + $0x90] sm:$0xff] %v1493
    %1520 = vst [vmem:[#allocation3 + $0xb8] sm:$0xff] %v1498
    %1521 = vst [vmem:[#allocation3 + $0xe0] sm:$0xff] %v1503
    %1522 = vst [vmem:[#allocation3 + $0x108] sm:$0xff] %v1508
    %1523 = vst [vmem:[#allocation3 + $0x130] sm:$0xff] %v1513
    %v1524 = vld [vmem:[%s493] sm:$0xff]
    %v1525 = vld [vmem:[%s493 + $0x8] sm:$0xff]
    %v1526 = vld [vmem:[%s493 + $0x10] sm:$0xff]
    %v1527 = vld [vmem:[%s493 + $0x18] sm:$0xff]
    %v1528 = vld [vmem:[%s493 + $0x20] sm:$0xff]
    %v1529 = vld [vmem:[%s493 + $0x28] sm:$0xff]
    %v1530 = vld [vmem:[%s493 + $0x30] sm:$0xff]
    %v1531 = vld [vmem:[%s493 + $0x38] sm:$0xff]
    %v1532 = vld [vmem:[#allocation2] sm:$0xff]
    %v1533 = vld [vmem:[#allocation2 + $0x8] sm:$0xff]
    %v1534 = vld [vmem:[#allocation2 + $0x10] sm:$0xff]
    %v1535 = vld [vmem:[#allocation2 + $0x18] sm:$0xff]
    %v1536 = vld [vmem:[#allocation2 + $0x20] sm:$0xff]
    %v1537 = vld [vmem:[#allocation2 + $0x28] sm:$0xff]
    %v1538 = vld [vmem:[#allocation2 + $0x30] sm:$0xff]
    %v1539 = vld [vmem:[#allocation2 + $0x38] sm:$0xff]
    %v1540 = vld [vmem:[#allocation2 + $0x40] sm:$0xff]
    %v1541 = vld [vmem:[#allocation2 + $0x48] sm:$0xff]
    %v1542 = vld [vmem:[#allocation2 + $0x50] sm:$0xff]
    %v1543 = vld [vmem:[#allocation2 + $0x58] sm:$0xff]
    %v1544 = vld [vmem:[#allocation2 + $0x60] sm:$0xff]
    %v1545 = vld [vmem:[#allocation2 + $0x68] sm:$0xff]
    %v1546 = vld [vmem:[#allocation2 + $0x70] sm:$0xff]
    %v1547 = vld [vmem:[#allocation2 + $0x78] sm:$0xff]
    %1548 = vmatprep.subr.mxu0 0.0
    %1549 = vmatpush1.msra.mxu0 %v1532
    %1550 = vmatprep.subr.mxu0 0.0
    %1551 = vmatpush1.msra.mxu0 %v1533
    %1552 = vmatprep.subr.mxu0 0.0
    %1553 = vmatpush1.msra.mxu0 %v1534
    %1554 = vmatprep.subr.mxu0 0.0
    %1555 = vmatpush1.msra.mxu0 %v1535
    %1556 = vmatprep.subr.mxu0 0.0
    %1557 = vmatpush1.msra.mxu0 %v1536
    %1558 = vmatprep.subr.mxu0 0.0
    %1559 = vmatpush1.msra.mxu0 %v1537
    %1560 = vmatprep.subr.mxu0 0.0
    %1561 = vmatpush1.msra.mxu0 %v1538
    %1562 = vmatprep.subr.mxu0 0.0
    %1563 = vmatpush1.msra.mxu0 %v1539
    %1564 = vmatprep.subr.mxu0 0.0
    %1565 = vmatpush1.msra.mxu0 %v1540
    %1566 = vmatprep.subr.mxu0 0.0
    %1567 = vmatpush1.msra.mxu0 %v1541
    %1568 = vmatprep.subr.mxu0 0.0
    %1569 = vmatpush1.msra.mxu0 %v1542
    %1570 = vmatprep.subr.mxu0 0.0
    %1571 = vmatpush1.msra.mxu0 %v1543
    %1572 = vmatprep.subr.mxu0 0.0
    %1573 = vmatpush1.msra.mxu0 %v1544
    %1574 = vmatprep.subr.mxu0 0.0
    %1575 = vmatpush1.msra.mxu0 %v1545
    %1576 = vmatprep.subr.mxu0 0.0
    %1577 = vmatpush1.msra.mxu0 %v1546
    %1578 = vmatprep.subr.mxu0 0.0
    %1579 = vmatpush1.msra.mxu0 %v1547
    %1580 = vmatprep.subr.mxu0 0.0
    %1581 = vmatpush1.msra.mxu0 0.0
    %1582 = vmatprep.subr.mxu0 0.0
    %1583 = vmatpush1.msra.mxu0 0.0
    %1584 = vmatprep.subr.mxu0 0.0
    %1585 = vmatpush1.msra.mxu0 0.0
    %1586 = vmatprep.subr.mxu0 0.0
    %1587 = vmatpush1.msra.mxu0 0.0
    %1588 = vmatprep.subr.mxu0 0.0
    %1589 = vmatpush1.msra.mxu0 0.0
    %1590 = vmatprep.subr.mxu0 0.0
    %1591 = vmatpush1.msra.mxu0 0.0
    %1592 = vmatprep.subr.mxu0 0.0
    %1593 = vmatpush1.msra.mxu0 0.0
    %1594 = vmatprep.subr.mxu0 0.0
    %1595 = vmatpush1.msra.mxu0 0.0
    %1596 = vmatprep.subr.mxu0 0.0
    %1597 = vmatpush1.msra.mxu0 0.0
    %1598 = vmatprep.subr.mxu0 0.0
    %1599 = vmatpush1.msra.mxu0 0.0
    %1600 = vmatprep.subr.mxu0 0.0
    %1601 = vmatpush1.msra.mxu0 0.0
    %1602 = vmatprep.subr.mxu0 0.0
    %1603 = vmatpush1.msra.mxu0 0.0
    %1604 = vmatprep.subr.mxu0 0.0
    %1605 = vmatpush1.msra.mxu0 0.0
    %1606 = vmatprep.subr.mxu0 0.0
    %1607 = vmatpush1.msra.mxu0 0.0
    %1608 = vmatprep.subr.mxu0 0.0
    %1609 = vmatpush1.msra.mxu0 0.0
    %1610 = vmatprep.subr.mxu0 0.0
    %1611 = vmatpush1.msra.mxu0 0.0
    %1612 = vmatprep.mubr.f32.mxu0 0.0
    %1613 = vmatmul.mubr.f32.gmra.mrb[0].mxu0 %v1524
    %v1614 = vpop.f32.mrb[0].mxu0
    %v1615 = vadd.f32 0.0, %v1614
    %v1616 = vpop.f32.mrb[0].mxu0
    %1617 = vmatprep.mubr.f32.mxu0 0.0
    %1618 = vmatmul.mubr.f32.gmra.mrb[0].mxu0 %v1525
    %v1619 = vpop.f32.mrb[0].mxu0
    %v1620 = vadd.f32 0.0, %v1619
    %v1621 = vpop.f32.mrb[0].mxu0
    %1622 = vmatprep.mubr.f32.mxu0 0.0
    %1623 = vmatmul.mubr.f32.gmra.mrb[0].mxu0 %v1526
    %v1624 = vpop.f32.mrb[0].mxu0
    %v1625 = vadd.f32 0.0, %v1624
    %v1626 = vpop.f32.mrb[0].mxu0
    %1627 = vmatprep.mubr.f32.mxu0 0.0
    %1628 = vmatmul.mubr.f32.gmra.mrb[0].mxu0 %v1527
    %v1629 = vpop.f32.mrb[0].mxu0
    %v1630 = vadd.f32 0.0, %v1629
    %v1631 = vpop.f32.mrb[0].mxu0
    %1632 = vmatprep.mubr.f32.mxu0 0.0
    %1633 = vmatmul.mubr.f32.gmra.mrb[0].mxu0 %v1528
    %v1634 = vpop.f32.mrb[0].mxu0
    %v1635 = vadd.f32 0.0, %v1634
    %v1636 = vpop.f32.mrb[0].mxu0
    %1637 = vmatprep.mubr.f32.mxu0 0.0
    %1638 = vmatmul.mubr.f32.gmra.mrb[0].mxu0 %v1529
    %v1639 = vpop.f32.mrb[0].mxu0
    %v1640 = vadd.f32 0.0, %v1639
    %v1641 = vpop.f32.mrb[0].mxu0
    %1642 = vmatprep.mubr.f32.mxu0 0.0
    %1643 = vmatmul.mubr.f32.gmra.mrb[0].mxu0 %v1530
    %v1644 = vpop.f32.mrb[0].mxu0
    %v1645 = vadd.f32 0.0, %v1644
    %v1646 = vpop.f32.mrb[0].mxu0
    %1647 = vmatprep.mubr.f32.mxu0 0.0
    %1648 = vmatmul.mubr.f32.gmra.mrb[0].mxu0 %v1531
    %v1649 = vpop.f32.mrb[0].mxu0
    %v1650 = vadd.f32 0.0, %v1649
    %v1651 = vpop.f32.mrb[0].mxu0
    %1652 = vdwg.mxu0
    %1653 = vst [vmem:[#allocation3 + $0x20] sm:$0xff] %v1615
    %1654 = vst [vmem:[#allocation3 + $0x48] sm:$0xff] %v1620
    %1655 = vst [vmem:[#allocation3 + $0x70] sm:$0xff] %v1625
    %1656 = vst [vmem:[#allocation3 + $0x98] sm:$0xff] %v1630
    %1657 = vst [vmem:[#allocation3 + $0xc0] sm:$0xff] %v1635
    %1658 = vst [vmem:[#allocation3 + $0xe8] sm:$0xff] %v1640
    %1659 = vst [vmem:[#allocation3 + $0x110] sm:$0xff] %v1645
    %1660 = vst [vmem:[#allocation3 + $0x138] sm:$0xff] %v1650
    %v1661 = vld [vmem:[#allocation3] sm:$0xff]
    %v1662 = vld [vmem:[#allocation3 + $0x8] sm:$0xff]
    %v1663 = vld [vmem:[#allocation3 + $0x10] sm:$0xff]
    %v1664 = vld [vmem:[#allocation3 + $0x18] sm:$0xff]
    %v1665 = vld [vmem:[#allocation3 + $0x20] sm:$0xff]
    %v1666 = vld [vmem:[#allocation3 + $0x28] sm:$0xff]
    %v1667 = vld [vmem:[#allocation3 + $0x30] sm:$0xff]
    %v1668 = vld [vmem:[#allocation3 + $0x38] sm:$0xff]
    %v1669 = vld [vmem:[#allocation3 + $0x40] sm:$0xff]
    %v1670 = vld [vmem:[#allocation3 + $0x48] sm:$0xff]
    %v1671 = vld [vmem:[#allocation3 + $0x50] sm:$0xff]
    %v1672 = vld [vmem:[#allocation3 + $0x58] sm:$0xff]
    %v1673 = vld [vmem:[#allocation3 + $0x60] sm:$0xff]
    %v1674 = vld [vmem:[#allocation3 + $0x68] sm:$0xff]
    %v1675 = vld [vmem:[#allocation3 + $0x70] sm:$0xff]
    %v1676 = vld [vmem:[#allocation3 + $0x78] sm:$0xff]
    %v1677 = vld [vmem:[#allocation3 + $0x80] sm:$0xff]
    %v1678 = vld [vmem:[#allocation3 + $0x88] sm:$0xff]
    %v1679 = vld [vmem:[#allocation3 + $0x90] sm:$0xff]
    %v1680 = vld [vmem:[#allocation3 + $0x98] sm:$0xff]
    %v1681 = vld [vmem:[#allocation3 + $0xa0] sm:$0xff]
    %v1682 = vld [vmem:[#allocation3 + $0xa8] sm:$0xff]
    %v1683 = vld [vmem:[#allocation3 + $0xb0] sm:$0xff]
    %v1684 = vld [vmem:[#allocation3 + $0xb8] sm:$0xff]
    %v1685 = vld [vmem:[#allocation3 + $0xc0] sm:$0xff]
    %v1686 = vld [vmem:[#allocation3 + $0xc8] sm:$0xff]
    %v1687 = vld [vmem:[#allocation3 + $0xd0] sm:$0xff]
    %v1688 = vld [vmem:[#allocation3 + $0xd8] sm:$0xff]
    %v1689 = vld [vmem:[#allocation3 + $0xe0] sm:$0xff]
    %v1690 = vld [vmem:[#allocation3 + $0xe8] sm:$0xff]
    %v1691 = vld [vmem:[#allocation3 + $0xf0] sm:$0xff]
    %v1692 = vld [vmem:[#allocation3 + $0xf8] sm:$0xff]
    %v1693 = vld [vmem:[#allocation3 + $0x100] sm:$0xff]
    %v1694 = vld [vmem:[#allocation3 + $0x108] sm:$0xff]
    %v1695 = vld [vmem:[#allocation3 + $0x110] sm:$0xff]
    %v1696 = vld [vmem:[#allocation3 + $0x118] sm:$0xff]
    %v1697 = vld [vmem:[#allocation3 + $0x120] sm:$0xff]
    %v1698 = vld [vmem:[#allocation3 + $0x128] sm:$0xff]
    %v1699 = vld [vmem:[#allocation3 + $0x130] sm:$0xff]
    %v1700 = vld [vmem:[#allocation3 + $0x138] sm:$0xff]
    %s1701 = scalar_lea.vmem [#allocation4], 640
    %v1702 = vld [vmem:[%s1701] sm:$0xff]
    %v1703 = vld [vmem:[%s1701 + $0x8] sm:$0xff]
    %v1704 = vld [vmem:[%s1701 + $0x10] sm:$0xff]
    %v1705 = vld [vmem:[%s1701 + $0x18] sm:$0xff]
    %v1706 = vld [vmem:[%s1701 + $0x20] sm:$0xff]
    %v1707 = vld [vmem:[%s1701 + $0x28] sm:$0xff]
    %v1708 = vld [vmem:[%s1701 + $0x30] sm:$0xff]
    %v1709 = vld [vmem:[%s1701 + $0x38] sm:$0xff]
    %v1710 = vld [vmem:[%s1701 + $0x40] sm:$0xff]
    %v1711 = vld [vmem:[%s1701 + $0x48] sm:$0xff]
    %v1712 = vld [vmem:[%s1701 + $0x50] sm:$0xff]
    %v1713 = vld [vmem:[%s1701 + $0x58] sm:$0xff]
    %v1714 = vld [vmem:[%s1701 + $0x60] sm:$0xff]
    %v1715 = vld [vmem:[%s1701 + $0x68] sm:$0xff]
    %v1716 = vld [vmem:[%s1701 + $0x70] sm:$0xff]
    %v1717 = vld [vmem:[%s1701 + $0x78] sm:$0xff]
    %v1718 = vld [vmem:[%s1701 + $0x80] sm:$0xff]
    %v1719 = vld [vmem:[%s1701 + $0x88] sm:$0xff]
    %v1720 = vld [vmem:[%s1701 + $0x90] sm:$0xff]
    %v1721 = vld [vmem:[%s1701 + $0x98] sm:$0xff]
    %v1722 = vld [vmem:[%s1701 + $0xa0] sm:$0xff]
    %v1723 = vld [vmem:[%s1701 + $0xa8] sm:$0xff]
    %v1724 = vld [vmem:[%s1701 + $0xb0] sm:$0xff]
    %v1725 = vld [vmem:[%s1701 + $0xb8] sm:$0xff]
    %v1726 = vld [vmem:[%s1701 + $0xc0] sm:$0xff]
    %v1727 = vld [vmem:[%s1701 + $0xc8] sm:$0xff]
    %v1728 = vld [vmem:[%s1701 + $0xd0] sm:$0xff]
    %v1729 = vld [vmem:[%s1701 + $0xd8] sm:$0xff]
    %v1730 = vld [vmem:[%s1701 + $0xe0] sm:$0xff]
    %v1731 = vld [vmem:[%s1701 + $0xe8] sm:$0xff]
    %v1732 = vld [vmem:[%s1701 + $0xf0] sm:$0xff]
    %v1733 = vld [vmem:[%s1701 + $0xf8] sm:$0xff]
    %v1734 = vld [vmem:[%s1701 + $0x100] sm:$0xff]
    %v1735 = vld [vmem:[%s1701 + $0x108] sm:$0xff]
    %v1736 = vld [vmem:[%s1701 + $0x110] sm:$0xff]
    %v1737 = vld [vmem:[%s1701 + $0x118] sm:$0xff]
    %v1738 = vld [vmem:[%s1701 + $0x120] sm:$0xff]
    %v1739 = vld [vmem:[%s1701 + $0x128] sm:$0xff]
    %v1740 = vld [vmem:[%s1701 + $0x130] sm:$0xff]
    %v1741 = vld [vmem:[%s1701 + $0x138] sm:$0xff]
    %v1742 = vld [vmem:[%s1701 + $0x140] sm:$0xff]
    %v1743 = vld [vmem:[%s1701 + $0x148] sm:$0xff]
    %v1744 = vld [vmem:[%s1701 + $0x150] sm:$0xff]
    %v1745 = vld [vmem:[%s1701 + $0x158] sm:$0xff]
    %v1746 = vld [vmem:[%s1701 + $0x160] sm:$0xff]
    %v1747 = vld [vmem:[%s1701 + $0x168] sm:$0xff]
    %v1748 = vld [vmem:[%s1701 + $0x170] sm:$0xff]
    %v1749 = vld [vmem:[%s1701 + $0x178] sm:$0xff]
    %v1750 = vld [vmem:[%s1701 + $0x180] sm:$0xff]
    %v1751 = vld [vmem:[%s1701 + $0x188] sm:$0xff]
    %v1752 = vld [vmem:[%s1701 + $0x190] sm:$0xff]
    %v1753 = vld [vmem:[%s1701 + $0x198] sm:$0xff]
    %v1754 = vld [vmem:[%s1701 + $0x1a0] sm:$0xff]
    %v1755 = vld [vmem:[%s1701 + $0x1a8] sm:$0xff]
    %v1756 = vld [vmem:[%s1701 + $0x1b0] sm:$0xff]
    %v1757 = vld [vmem:[%s1701 + $0x1b8] sm:$0xff]
    %v1758 = vld [vmem:[%s1701 + $0x1c0] sm:$0xff]
    %v1759 = vld [vmem:[%s1701 + $0x1c8] sm:$0xff]
    %v1760 = vld [vmem:[%s1701 + $0x1d0] sm:$0xff]
    %v1761 = vld [vmem:[%s1701 + $0x1d8] sm:$0xff]
    %v1762 = vld [vmem:[%s1701 + $0x1e0] sm:$0xff]
    %v1763 = vld [vmem:[%s1701 + $0x1e8] sm:$0xff]
    %v1764 = vld [vmem:[%s1701 + $0x1f0] sm:$0xff]
    %v1765 = vld [vmem:[%s1701 + $0x1f8] sm:$0xff]
    %v1766 = vld [vmem:[%s1701 + $0x200] sm:$0xff]
    %v1767 = vld [vmem:[%s1701 + $0x208] sm:$0xff]
    %v1768 = vld [vmem:[%s1701 + $0x210] sm:$0xff]
    %v1769 = vld [vmem:[%s1701 + $0x218] sm:$0xff]
    %v1770 = vld [vmem:[%s1701 + $0x220] sm:$0xff]
    %v1771 = vld [vmem:[%s1701 + $0x228] sm:$0xff]
    %v1772 = vld [vmem:[%s1701 + $0x230] sm:$0xff]
    %v1773 = vld [vmem:[%s1701 + $0x238] sm:$0xff]
    %v1774 = vld [vmem:[%s1701 + $0x240] sm:$0xff]
    %v1775 = vld [vmem:[%s1701 + $0x248] sm:$0xff]
    %v1776 = vld [vmem:[%s1701 + $0x250] sm:$0xff]
    %v1777 = vld [vmem:[%s1701 + $0x258] sm:$0xff]
    %v1778 = vld [vmem:[%s1701 + $0x260] sm:$0xff]
    %v1779 = vld [vmem:[%s1701 + $0x268] sm:$0xff]
    %v1780 = vld [vmem:[%s1701 + $0x270] sm:$0xff]
    %v1781 = vld [vmem:[%s1701 + $0x278] sm:$0xff]
    %s1782 = scalar_lea.vmem %s3, 1
    %v1783 = vld [vmem:[%s1782] sm:$0x1]
    %v1785 = vlaneseq
    %v1786 = vshrl.u32 %v1785, 7
    %v1787 = vsub.s32 0, %v1786
    %v1788 = vrot.slane %v1783, %v1787
    %1790 = vmatprep.subr.mxu0 0.0
    %1791 = vmatpush1.msra.mxu0 %v1702
    %1792 = vmatprep.subr.mxu0 0.0
    %1793 = vmatpush1.msra.mxu0 %v1703
    %1794 = vmatprep.subr.mxu0 0.0
    %1795 = vmatpush1.msra.mxu0 %v1704
    %1796 = vmatprep.subr.mxu0 0.0
    %1797 = vmatpush1.msra.mxu0 %v1705
    %1798 = vmatprep.subr.mxu0 0.0
    %1799 = vmatpush1.msra.mxu0 %v1706
    %1800 = vmatprep.subr.mxu0 0.0
    %1801 = vmatpush1.msra.mxu0 %v1707
    %1802 = vmatprep.subr.mxu0 0.0
    %1803 = vmatpush1.msra.mxu0 %v1708
    %1804 = vmatprep.subr.mxu0 0.0
    %1805 = vmatpush1.msra.mxu0 %v1709
    %1806 = vmatprep.subr.mxu0 0.0
    %1807 = vmatpush1.msra.mxu0 %v1710
    %1808 = vmatprep.subr.mxu0 0.0
    %1809 = vmatpush1.msra.mxu0 %v1711
    %1810 = vmatprep.subr.mxu0 0.0
    %1811 = vmatpush1.msra.mxu0 %v1712
    %1812 = vmatprep.subr.mxu0 0.0
    %1813 = vmatpush1.msra.mxu0 %v1713
    %1814 = vmatprep.subr.mxu0 0.0
    %1815 = vmatpush1.msra.mxu0 %v1714
    %1816 = vmatprep.subr.mxu0 0.0
    %1817 = vmatpush1.msra.mxu0 %v1715
    %1818 = vmatprep.subr.mxu0 0.0
    %1819 = vmatpush1.msra.mxu0 %v1716
    %1820 = vmatprep.subr.mxu0 0.0
    %1821 = vmatpush1.msra.mxu0 %v1717
    %1822 = vmatprep.subr.mxu0 0.0
    %1823 = vmatpush1.msra.mxu0 %v1718
    %1824 = vmatprep.subr.mxu0 0.0
    %1825 = vmatpush1.msra.mxu0 %v1719
    %1826 = vmatprep.subr.mxu0 0.0
    %1827 = vmatpush1.msra.mxu0 %v1720
    %1828 = vmatprep.subr.mxu0 0.0
    %1829 = vmatpush1.msra.mxu0 %v1721
    %1830 = vmatprep.subr.mxu0 0.0
    %1831 = vmatpush1.msra.mxu0 %v1722
    %1832 = vmatprep.subr.mxu0 0.0
    %1833 = vmatpush1.msra.mxu0 %v1723
    %1834 = vmatprep.subr.mxu0 0.0
    %1835 = vmatpush1.msra.mxu0 %v1724
    %1836 = vmatprep.subr.mxu0 0.0
    %1837 = vmatpush1.msra.mxu0 %v1725
    %1838 = vmatprep.subr.mxu0 0.0
    %1839 = vmatpush1.msra.mxu0 %v1726
    %1840 = vmatprep.subr.mxu0 0.0
    %1841 = vmatpush1.msra.mxu0 %v1727
    %1842 = vmatprep.subr.mxu0 0.0
    %1843 = vmatpush1.msra.mxu0 %v1728
    %1844 = vmatprep.subr.mxu0 0.0
    %1845 = vmatpush1.msra.mxu0 %v1729
    %1846 = vmatprep.subr.mxu0 0.0
    %1847 = vmatpush1.msra.mxu0 %v1730
    %1848 = vmatprep.subr.mxu0 0.0
    %1849 = vmatpush1.msra.mxu0 %v1731
    %1850 = vmatprep.subr.mxu0 0.0
    %1851 = vmatpush1.msra.mxu0 %v1732
    %1852 = vmatprep.subr.mxu0 0.0
    %1853 = vmatpush1.msra.mxu0 %v1733
    %1854 = vmatprep.mubr.f32.mxu0 %v1662
    %1855 = vmatmul.mubr.f32.gmra.mrb[0].mxu0 %v1661
    %v1856 = vpop.f32.mrb[0].mxu0
    %v1857 = vadd.f32 %v1788, %v1856
    %v1858 = vpop.f32.mrb[0].mxu0
    %1859 = vmatprep.mubr.f32.mxu0 %v1667
    %1860 = vmatmul.mubr.f32.gmra.mrb[0].mxu0 %v1666
    %v1861 = vpop.f32.mrb[0].mxu0
    %v1862 = vadd.f32 %v1788, %v1861
    %v1863 = vpop.f32.mrb[0].mxu0
    %1864 = vmatprep.mubr.f32.mxu0 %v1672
    %1865 = vmatmul.mubr.f32.gmra.mrb[0].mxu0 %v1671
    %v1866 = vpop.f32.mrb[0].mxu0
    %v1867 = vadd.f32 %v1788, %v1866
    %v1868 = vpop.f32.mrb[0].mxu0
    %1869 = vmatprep.mubr.f32.mxu0 %v1677
    %1870 = vmatmul.mubr.f32.gmra.mrb[0].mxu0 %v1676
    %v1871 = vpop.f32.mrb[0].mxu0
    %v1872 = vadd.f32 %v1788, %v1871
    %v1873 = vpop.f32.mrb[0].mxu0
    %1874 = vmatprep.mubr.f32.mxu0 %v1682
    %1875 = vmatmul.mubr.f32.gmra.mrb[0].mxu0 %v1681
    %v1876 = vpop.f32.mrb[0].mxu0
    %v1877 = vadd.f32 %v1788, %v1876
    %v1878 = vpop.f32.mrb[0].mxu0
    %1879 = vmatprep.mubr.f32.mxu0 %v1687
    %1880 = vmatmul.mubr.f32.gmra.mrb[0].mxu0 %v1686
    %v1881 = vpop.f32.mrb[0].mxu0
    %v1882 = vadd.f32 %v1788, %v1881
    %v1883 = vpop.f32.mrb[0].mxu0
    %1884 = vmatprep.mubr.f32.mxu0 %v1692
    %1885 = vmatmul.mubr.f32.gmra.mrb[0].mxu0 %v1691
    %v1886 = vpop.f32.mrb[0].mxu0
    %v1887 = vadd.f32 %v1788, %v1886
    %v1888 = vpop.f32.mrb[0].mxu0
    %1889 = vmatprep.mubr.f32.mxu0 %v1697
    %1890 = vmatmul.mubr.f32.gmra.mrb[0].mxu0 %v1696
    %v1891 = vpop.f32.mrb[0].mxu0
    %v1892 = vadd.f32 %v1788, %v1891
    %v1893 = vpop.f32.mrb[0].mxu0
    %1894 = vdwg.mxu0
    %1895 = vmatprep.subr.mxu0 0.0
    %1896 = vmatpush1.msra.mxu0 %v1734
    %1897 = vmatprep.subr.mxu0 0.0
    %1898 = vmatpush1.msra.mxu0 %v1735
    %1899 = vmatprep.subr.mxu0 0.0
    %1900 = vmatpush1.msra.mxu0 %v1736
    %1901 = vmatprep.subr.mxu0 0.0
    %1902 = vmatpush1.msra.mxu0 %v1737
    %1903 = vmatprep.subr.mxu0 0.0
    %1904 = vmatpush1.msra.mxu0 %v1738
    %1905 = vmatprep.subr.mxu0 0.0
    %1906 = vmatpush1.msra.mxu0 %v1739
    %1907 = vmatprep.subr.mxu0 0.0
    %1908 = vmatpush1.msra.mxu0 %v1740
    %1909 = vmatprep.subr.mxu0 0.0
    %1910 = vmatpush1.msra.mxu0 %v1741
    %1911 = vmatprep.subr.mxu0 0.0
    %1912 = vmatpush1.msra.mxu0 %v1742
    %1913 = vmatprep.subr.mxu0 0.0
    %1914 = vmatpush1.msra.mxu0 %v1743
    %1915 = vmatprep.subr.mxu0 0.0
    %1916 = vmatpush1.msra.mxu0 %v1744
    %1917 = vmatprep.subr.mxu0 0.0
    %1918 = vmatpush1.msra.mxu0 %v1745
    %1919 = vmatprep.subr.mxu0 0.0
    %1920 = vmatpush1.msra.mxu0 %v1746
    %1921 = vmatprep.subr.mxu0 0.0
    %1922 = vmatpush1.msra.mxu0 %v1747
    %1923 = vmatprep.subr.mxu0 0.0
    %1924 = vmatpush1.msra.mxu0 %v1748
    %1925 = vmatprep.subr.mxu0 0.0
    %1926 = vmatpush1.msra.mxu0 %v1749
    %1927 = vmatprep.subr.mxu0 0.0
    %1928 = vmatpush1.msra.mxu0 %v1750
    %1929 = vmatprep.subr.mxu0 0.0
    %1930 = vmatpush1.msra.mxu0 %v1751
    %1931 = vmatprep.subr.mxu0 0.0
    %1932 = vmatpush1.msra.mxu0 %v1752
    %1933 = vmatprep.subr.mxu0 0.0
    %1934 = vmatpush1.msra.mxu0 %v1753
    %1935 = vmatprep.subr.mxu0 0.0
    %1936 = vmatpush1.msra.mxu0 %v1754
    %1937 = vmatprep.subr.mxu0 0.0
    %1938 = vmatpush1.msra.mxu0 %v1755
    %1939 = vmatprep.subr.mxu0 0.0
    %1940 = vmatpush1.msra.mxu0 %v1756
    %1941 = vmatprep.subr.mxu0 0.0
    %1942 = vmatpush1.msra.mxu0 %v1757
    %1943 = vmatprep.subr.mxu0 0.0
    %1944 = vmatpush1.msra.mxu0 %v1758
    %1945 = vmatprep.subr.mxu0 0.0
    %1946 = vmatpush1.msra.mxu0 %v1759
    %1947 = vmatprep.subr.mxu0 0.0
    %1948 = vmatpush1.msra.mxu0 %v1760
    %1949 = vmatprep.subr.mxu0 0.0
    %1950 = vmatpush1.msra.mxu0 %v1761
    %1951 = vmatprep.subr.mxu0 0.0
    %1952 = vmatpush1.msra.mxu0 %v1762
    %1953 = vmatprep.subr.mxu0 0.0
    %1954 = vmatpush1.msra.mxu0 %v1763
    %1955 = vmatprep.subr.mxu0 0.0
    %1956 = vmatpush1.msra.mxu0 %v1764
    %1957 = vmatprep.subr.mxu0 0.0
    %1958 = vmatpush1.msra.mxu0 %v1765
    %1959 = vmatprep.mubr.f32.mxu0 %v1664
    %1960 = vmatmul.mubr.f32.gmra.mrb[0].mxu0 %v1663
    %v1961 = vpop.f32.mrb[0].mxu0
    %v1962 = vadd.f32 %v1857, %v1961
    %v1963 = vpop.f32.mrb[0].mxu0
    %1964 = vmatprep.mubr.f32.mxu0 %v1669
    %1965 = vmatmul.mubr.f32.gmra.mrb[0].mxu0 %v1668
    %v1966 = vpop.f32.mrb[0].mxu0
    %v1967 = vadd.f32 %v1862, %v1966
    %v1968 = vpop.f32.mrb[0].mxu0
    %1969 = vmatprep.mubr.f32.mxu0 %v1674
    %1970 = vmatmul.mubr.f32.gmra.mrb[0].mxu0 %v1673
    %v1971 = vpop.f32.mrb[0].mxu0
    %v1972 = vadd.f32 %v1867, %v1971
    %v1973 = vpop.f32.mrb[0].mxu0
    %1974 = vmatprep.mubr.f32.mxu0 %v1679
    %1975 = vmatmul.mubr.f32.gmra.mrb[0].mxu0 %v1678
    %v1976 = vpop.f32.mrb[0].mxu0
    %v1977 = vadd.f32 %v1872, %v1976
    %v1978 = vpop.f32.mrb[0].mxu0
    %1979 = vmatprep.mubr.f32.mxu0 %v1684
    %1980 = vmatmul.mubr.f32.gmra.mrb[0].mxu0 %v1683
    %v1981 = vpop.f32.mrb[0].mxu0
    %v1982 = vadd.f32 %v1877, %v1981
    %v1983 = vpop.f32.mrb[0].mxu0
    %1984 = vmatprep.mubr.f32.mxu0 %v1689
    %1985 = vmatmul.mubr.f32.gmra.mrb[0].mxu0 %v1688
    %v1986 = vpop.f32.mrb[0].mxu0
    %v1987 = vadd.f32 %v1882, %v1986
    %v1988 = vpop.f32.mrb[0].mxu0
    %1989 = vmatprep.mubr.f32.mxu0 %v1694
    %1990 = vmatmul.mubr.f32.gmra.mrb[0].mxu0 %v1693
    %v1991 = vpop.f32.mrb[0].mxu0
    %v1992 = vadd.f32 %v1887, %v1991
    %v1993 = vpop.f32.mrb[0].mxu0
    %1994 = vmatprep.mubr.f32.mxu0 %v1699
    %1995 = vmatmul.mubr.f32.gmra.mrb[0].mxu0 %v1698
    %v1996 = vpop.f32.mrb[0].mxu0
    %v1997 = vadd.f32 %v1892, %v1996
    %v1998 = vpop.f32.mrb[0].mxu0
    %1999 = vdwg.mxu0
    %2000 = vmatprep.subr.mxu0 0.0
    %2001 = vmatpush1.msra.mxu0 %v1766
    %2002 = vmatprep.subr.mxu0 0.0
    %2003 = vmatpush1.msra.mxu0 %v1767
    %2004 = vmatprep.subr.mxu0 0.0
    %2005 = vmatpush1.msra.mxu0 %v1768
    %2006 = vmatprep.subr.mxu0 0.0
    %2007 = vmatpush1.msra.mxu0 %v1769
    %2008 = vmatprep.subr.mxu0 0.0
    %2009 = vmatpush1.msra.mxu0 %v1770
    %2010 = vmatprep.subr.mxu0 0.0
    %2011 = vmatpush1.msra.mxu0 %v1771
    %2012 = vmatprep.subr.mxu0 0.0
    %2013 = vmatpush1.msra.mxu0 %v1772
    %2014 = vmatprep.subr.mxu0 0.0
    %2015 = vmatpush1.msra.mxu0 %v1773
    %2016 = vmatprep.subr.mxu0 0.0
    %2017 = vmatpush1.msra.mxu0 %v1774
    %2018 = vmatprep.subr.mxu0 0.0
    %2019 = vmatpush1.msra.mxu0 %v1775
    %2020 = vmatprep.subr.mxu0 0.0
    %2021 = vmatpush1.msra.mxu0 %v1776
    %2022 = vmatprep.subr.mxu0 0.0
    %2023 = vmatpush1.msra.mxu0 %v1777
    %2024 = vmatprep.subr.mxu0 0.0
    %2025 = vmatpush1.msra.mxu0 %v1778
    %2026 = vmatprep.subr.mxu0 0.0
    %2027 = vmatpush1.msra.mxu0 %v1779
    %2028 = vmatprep.subr.mxu0 0.0
    %2029 = vmatpush1.msra.mxu0 %v1780
    %2030 = vmatprep.subr.mxu0 0.0
    %2031 = vmatpush1.msra.mxu0 %v1781
    %2032 = vmatprep.subr.mxu0 0.0
    %2033 = vmatpush1.msra.mxu0 0.0
    %2034 = vmatprep.subr.mxu0 0.0
    %2035 = vmatpush1.msra.mxu0 0.0
    %2036 = vmatprep.subr.mxu0 0.0
    %2037 = vmatpush1.msra.mxu0 0.0
    %2038 = vmatprep.subr.mxu0 0.0
    %2039 = vmatpush1.msra.mxu0 0.0
    %2040 = vmatprep.subr.mxu0 0.0
    %2041 = vmatpush1.msra.mxu0 0.0
    %2042 = vmatprep.subr.mxu0 0.0
    %2043 = vmatpush1.msra.mxu0 0.0
    %2044 = vmatprep.subr.mxu0 0.0
    %2045 = vmatpush1.msra.mxu0 0.0
    %2046 = vmatprep.subr.mxu0 0.0
    %2047 = vmatpush1.msra.mxu0 0.0
    %2048 = vmatprep.subr.mxu0 0.0
    %2049 = vmatpush1.msra.mxu0 0.0
    %2050 = vmatprep.subr.mxu0 0.0
    %2051 = vmatpush1.msra.mxu0 0.0
    %2052 = vmatprep.subr.mxu0 0.0
    %2053 = vmatpush1.msra.mxu0 0.0
    %2054 = vmatprep.subr.mxu0 0.0
    %2055 = vmatpush1.msra.mxu0 0.0
    %2056 = vmatprep.subr.mxu0 0.0
    %2057 = vmatpush1.msra.mxu0 0.0
    %2058 = vmatprep.subr.mxu0 0.0
    %2059 = vmatpush1.msra.mxu0 0.0
    %2060 = vmatprep.subr.mxu0 0.0
    %2061 = vmatpush1.msra.mxu0 0.0
    %2062 = vmatprep.subr.mxu0 0.0
    %2063 = vmatpush1.msra.mxu0 0.0
    %2064 = vmatprep.mubr.f32.mxu0 0.0
    %2065 = vmatmul.mubr.f32.gmra.mrb[0].mxu0 %v1665
    %v2066 = vpop.f32.mrb[0].mxu0
    %v2067 = vadd.f32 %v1962, %v2066
    %v2068 = vpop.f32.mrb[0].mxu0
    %2069 = vmatprep.mubr.f32.mxu0 0.0
    %2070 = vmatmul.mubr.f32.gmra.mrb[0].mxu0 %v1670
    %v2071 = vpop.f32.mrb[0].mxu0
    %v2072 = vadd.f32 %v1967, %v2071
    %v2073 = vpop.f32.mrb[0].mxu0
    %2074 = vmatprep.mubr.f32.mxu0 0.0
    %2075 = vmatmul.mubr.f32.gmra.mrb[0].mxu0 %v1675
    %v2076 = vpop.f32.mrb[0].mxu0
    %v2077 = vadd.f32 %v1972, %v2076
    %v2078 = vpop.f32.mrb[0].mxu0
    %2079 = vmatprep.mubr.f32.mxu0 0.0
    %2080 = vmatmul.mubr.f32.gmra.mrb[0].mxu0 %v1680
    %v2081 = vpop.f32.mrb[0].mxu0
    %v2082 = vadd.f32 %v1977, %v2081
    %v2083 = vpop.f32.mrb[0].mxu0
    %2084 = vmatprep.mubr.f32.mxu0 0.0
    %2085 = vmatmul.mubr.f32.gmra.mrb[0].mxu0 %v1685
    %v2086 = vpop.f32.mrb[0].mxu0
    %v2087 = vadd.f32 %v1982, %v2086
    %v2088 = vpop.f32.mrb[0].mxu0
    %2089 = vmatprep.mubr.f32.mxu0 0.0
    %2090 = vmatmul.mubr.f32.gmra.mrb[0].mxu0 %v1690
    %v2091 = vpop.f32.mrb[0].mxu0
    %v2092 = vadd.f32 %v1987, %v2091
    %v2093 = vpop.f32.mrb[0].mxu0
    %2094 = vmatprep.mubr.f32.mxu0 0.0
    %2095 = vmatmul.mubr.f32.gmra.mrb[0].mxu0 %v1695
    %v2096 = vpop.f32.mrb[0].mxu0
    %v2097 = vadd.f32 %v1992, %v2096
    %v2098 = vpop.f32.mrb[0].mxu0
    %2099 = vmatprep.mubr.f32.mxu0 0.0
    %2100 = vmatmul.mubr.f32.gmra.mrb[0].mxu0 %v1700
    %v2101 = vpop.f32.mrb[0].mxu0
    %v2102 = vadd.f32 %v1997, %v2101
    %v2103 = vpop.f32.mrb[0].mxu0
    %2104 = vdwg.mxu0
    %v2105 = vmul.f32 %v2067, 0.01
    %v2106 = vmul.f32 %v2072, 0.01
    %v2107 = vmul.f32 %v2077, 0.01
    %v2108 = vmul.f32 %v2082, 0.01
    %v2109 = vmul.f32 %v2087, 0.01
    %v2110 = vmul.f32 %v2092, 0.01
    %v2111 = vmul.f32 %v2097, 0.01
    %v2112 = vmul.f32 %v2102, 0.01
    %v2113 = vmax.f32 %v2067, %v2105
    %v2114 = vmax.f32 %v2072, %v2106
    %v2115 = vmax.f32 %v2077, %v2107
    %v2116 = vmax.f32 %v2082, %v2108
    %v2117 = vmax.f32 %v2087, %v2109
    %v2118 = vmax.f32 %v2092, %v2110
    %v2119 = vmax.f32 %v2097, %v2111
    %v2120 = vmax.f32 %v2102, %v2112
    %2121 = vst [vmem:[#allocation2] sm:$0xff] %v2113
    %2122 = vst [vmem:[#allocation2 + $0x8] sm:$0xff] %v2114
    %2123 = vst [vmem:[#allocation2 + $0x10] sm:$0xff] %v2115
    %2124 = vst [vmem:[#allocation2 + $0x18] sm:$0xff] %v2116
    %2125 = vst [vmem:[#allocation2 + $0x20] sm:$0xff] %v2117
    %2126 = vst [vmem:[#allocation2 + $0x28] sm:$0xff] %v2118
    %2127 = vst [vmem:[#allocation2 + $0x30] sm:$0xff] %v2119
    %2128 = vst [vmem:[#allocation2 + $0x38] sm:$0xff] %v2120
    %v2129 = vld [vmem:[#allocation2] sm:$0xff]
    %v2130 = vld [vmem:[#allocation2 + $0x8] sm:$0xff]
    %v2131 = vld [vmem:[#allocation2 + $0x10] sm:$0xff]
    %v2132 = vld [vmem:[#allocation2 + $0x18] sm:$0xff]
    %v2133 = vld [vmem:[#allocation2 + $0x20] sm:$0xff]
    %v2134 = vld [vmem:[#allocation2 + $0x28] sm:$0xff]
    %v2135 = vld [vmem:[#allocation2 + $0x30] sm:$0xff]
    %v2136 = vld [vmem:[#allocation2 + $0x38] sm:$0xff]
    %2137 = vst [vmem:[#allocation3] sm:$0xff] %v2129
    %2138 = vst [vmem:[#allocation3 + $0x28] sm:$0xff] %v2130
    %2139 = vst [vmem:[#allocation3 + $0x50] sm:$0xff] %v2131
    %2140 = vst [vmem:[#allocation3 + $0x78] sm:$0xff] %v2132
    %2141 = vst [vmem:[#allocation3 + $0xa0] sm:$0xff] %v2133
    %2142 = vst [vmem:[#allocation3 + $0xc8] sm:$0xff] %v2134
    %2143 = vst [vmem:[#allocation3 + $0xf0] sm:$0xff] %v2135
    %2144 = vst [vmem:[#allocation3 + $0x118] sm:$0xff] %v2136
    %v2145 = vld [vmem:[%s1] sm:$0xff]
    %v2146 = vld [vmem:[%s1 + $0x8] sm:$0xff]
    %v2147 = vld [vmem:[%s1 + $0x10] sm:$0xff]
    %v2148 = vld [vmem:[%s1 + $0x18] sm:$0xff]
    %v2149 = vld [vmem:[%s1 + $0x20] sm:$0xff]
    %v2150 = vld [vmem:[%s1 + $0x28] sm:$0xff]
    %v2151 = vld [vmem:[%s1 + $0x30] sm:$0xff]
    %v2152 = vld [vmem:[%s1 + $0x38] sm:$0xff]
    %v2153 = vld [vmem:[#allocation2] sm:$0xff]
    %v2154 = vld [vmem:[#allocation2 + $0x8] sm:$0xff]
    %v2155 = vld [vmem:[#allocation2 + $0x10] sm:$0xff]
    %v2156 = vld [vmem:[#allocation2 + $0x18] sm:$0xff]
    %v2157 = vld [vmem:[#allocation2 + $0x20] sm:$0xff]
    %v2158 = vld [vmem:[#allocation2 + $0x28] sm:$0xff]
    %v2159 = vld [vmem:[#allocation2 + $0x30] sm:$0xff]
    %v2160 = vld [vmem:[#allocation2 + $0x38] sm:$0xff]
    %v2161 = vld [vmem:[#allocation2 + $0x40] sm:$0xff]
    %v2162 = vld [vmem:[#allocation2 + $0x48] sm:$0xff]
    %v2163 = vld [vmem:[#allocation2 + $0x50] sm:$0xff]
    %v2164 = vld [vmem:[#allocation2 + $0x58] sm:$0xff]
    %v2165 = vld [vmem:[#allocation2 + $0x60] sm:$0xff]
    %v2166 = vld [vmem:[#allocation2 + $0x68] sm:$0xff]
    %v2167 = vld [vmem:[#allocation2 + $0x70] sm:$0xff]
    %v2168 = vld [vmem:[#allocation2 + $0x78] sm:$0xff]
    %2169 = vmatprep.subr.mxu0 0.0
    %2170 = vmatpush1.msra.mxu0 %v2153
    %2171 = vmatprep.subr.mxu0 0.0
    %2172 = vmatpush1.msra.mxu0 %v2154
    %2173 = vmatprep.subr.mxu0 0.0
    %2174 = vmatpush1.msra.mxu0 %v2155
    %2175 = vmatprep.subr.mxu0 0.0
    %2176 = vmatpush1.msra.mxu0 %v2156
    %2177 = vmatprep.subr.mxu0 0.0
    %2178 = vmatpush1.msra.mxu0 %v2157
    %2179 = vmatprep.subr.mxu0 0.0
    %2180 = vmatpush1.msra.mxu0 %v2158
    %2181 = vmatprep.subr.mxu0 0.0
    %2182 = vmatpush1.msra.mxu0 %v2159
    %2183 = vmatprep.subr.mxu0 0.0
    %2184 = vmatpush1.msra.mxu0 %v2160
    %2185 = vmatprep.subr.mxu0 0.0
    %2186 = vmatpush1.msra.mxu0 %v2161
    %2187 = vmatprep.subr.mxu0 0.0
    %2188 = vmatpush1.msra.mxu0 %v2162
    %2189 = vmatprep.subr.mxu0 0.0
    %2190 = vmatpush1.msra.mxu0 %v2163
    %2191 = vmatprep.subr.mxu0 0.0
    %2192 = vmatpush1.msra.mxu0 %v2164
    %2193 = vmatprep.subr.mxu0 0.0
    %2194 = vmatpush1.msra.mxu0 %v2165
    %2195 = vmatprep.subr.mxu0 0.0
    %2196 = vmatpush1.msra.mxu0 %v2166
    %2197 = vmatprep.subr.mxu0 0.0
    %2198 = vmatpush1.msra.mxu0 %v2167
    %2199 = vmatprep.subr.mxu0 0.0
    %2200 = vmatpush1.msra.mxu0 %v2168
    %2201 = vmatprep.subr.mxu0 0.0
    %2202 = vmatpush1.msra.mxu0 0.0
    %2203 = vmatprep.subr.mxu0 0.0
    %2204 = vmatpush1.msra.mxu0 0.0
    %2205 = vmatprep.subr.mxu0 0.0
    %2206 = vmatpush1.msra.mxu0 0.0
    %2207 = vmatprep.subr.mxu0 0.0
    %2208 = vmatpush1.msra.mxu0 0.0
    %2209 = vmatprep.subr.mxu0 0.0
    %2210 = vmatpush1.msra.mxu0 0.0
    %2211 = vmatprep.subr.mxu0 0.0
    %2212 = vmatpush1.msra.mxu0 0.0
    %2213 = vmatprep.subr.mxu0 0.0
    %2214 = vmatpush1.msra.mxu0 0.0
    %2215 = vmatprep.subr.mxu0 0.0
    %2216 = vmatpush1.msra.mxu0 0.0
    %2217 = vmatprep.subr.mxu0 0.0
    %2218 = vmatpush1.msra.mxu0 0.0
    %2219 = vmatprep.subr.mxu0 0.0
    %2220 = vmatpush1.msra.mxu0 0.0
    %2221 = vmatprep.subr.mxu0 0.0
    %2222 = vmatpush1.msra.mxu0 0.0
    %2223 = vmatprep.subr.mxu0 0.0
    %2224 = vmatpush1.msra.mxu0 0.0
    %2225 = vmatprep.subr.mxu0 0.0
    %2226 = vmatpush1.msra.mxu0 0.0
    %2227 = vmatprep.subr.mxu0 0.0
    %2228 = vmatpush1.msra.mxu0 0.0
    %2229 = vmatprep.subr.mxu0 0.0
    %2230 = vmatpush1.msra.mxu0 0.0
    %2231 = vmatprep.subr.mxu0 0.0
    %2232 = vmatpush1.msra.mxu0 0.0
    %2233 = vmatprep.mubr.f32.mxu0 0.0
    %2234 = vmatmul.mubr.f32.gmra.mrb[0].mxu0 %v2145
    %v2235 = vpop.f32.mrb[0].mxu0
    %v2236 = vadd.f32 0.0, %v2235
    %v2237 = vpop.f32.mrb[0].mxu0
    %2238 = vmatprep.mubr.f32.mxu0 0.0
    %2239 = vmatmul.mubr.f32.gmra.mrb[0].mxu0 %v2146
    %v2240 = vpop.f32.mrb[0].mxu0
    %v2241 = vadd.f32 0.0, %v2240
    %v2242 = vpop.f32.mrb[0].mxu0
    %2243 = vmatprep.mubr.f32.mxu0 0.0
    %2244 = vmatmul.mubr.f32.gmra.mrb[0].mxu0 %v2147
    %v2245 = vpop.f32.mrb[0].mxu0
    %v2246 = vadd.f32 0.0, %v2245
    %v2247 = vpop.f32.mrb[0].mxu0
    %2248 = vmatprep.mubr.f32.mxu0 0.0
    %2249 = vmatmul.mubr.f32.gmra.mrb[0].mxu0 %v2148
    %v2250 = vpop.f32.mrb[0].mxu0
    %v2251 = vadd.f32 0.0, %v2250
    %v2252 = vpop.f32.mrb[0].mxu0
    %2253 = vmatprep.mubr.f32.mxu0 0.0
    %2254 = vmatmul.mubr.f32.gmra.mrb[0].mxu0 %v2149
    %v2255 = vpop.f32.mrb[0].mxu0
    %v2256 = vadd.f32 0.0, %v2255
    %v2257 = vpop.f32.mrb[0].mxu0
    %2258 = vmatprep.mubr.f32.mxu0 0.0
    %2259 = vmatmul.mubr.f32.gmra.mrb[0].mxu0 %v2150
    %v2260 = vpop.f32.mrb[0].mxu0
    %v2261 = vadd.f32 0.0, %v2260
    %v2262 = vpop.f32.mrb[0].mxu0
    %2263 = vmatprep.mubr.f32.mxu0 0.0
    %2264 = vmatmul.mubr.f32.gmra.mrb[0].mxu0 %v2151
    %v2265 = vpop.f32.mrb[0].mxu0
    %v2266 = vadd.f32 0.0, %v2265
    %v2267 = vpop.f32.mrb[0].mxu0
    %2268 = vmatprep.mubr.f32.mxu0 0.0
    %2269 = vmatmul.mubr.f32.gmra.mrb[0].mxu0 %v2152
    %v2270 = vpop.f32.mrb[0].mxu0
    %v2271 = vadd.f32 0.0, %v2270
    %v2272 = vpop.f32.mrb[0].mxu0
    %2273 = vdwg.mxu0
    %2274 = vst [vmem:[#allocation3 + $0x8] sm:$0xff] %v2236
    %2275 = vst [vmem:[#allocation3 + $0x30] sm:$0xff] %v2241
    %2276 = vst [vmem:[#allocation3 + $0x58] sm:$0xff] %v2246
    %2277 = vst [vmem:[#allocation3 + $0x80] sm:$0xff] %v2251
    %2278 = vst [vmem:[#allocation3 + $0xa8] sm:$0xff] %v2256
    %2279 = vst [vmem:[#allocation3 + $0xd0] sm:$0xff] %v2261
    %2280 = vst [vmem:[#allocation3 + $0xf8] sm:$0xff] %v2266
    %2281 = vst [vmem:[#allocation3 + $0x120] sm:$0xff] %v2271
    %v2282 = vld [vmem:[%s217] sm:$0xff]
    %v2283 = vld [vmem:[%s217 + $0x8] sm:$0xff]
    %v2284 = vld [vmem:[%s217 + $0x10] sm:$0xff]
    %v2285 = vld [vmem:[%s217 + $0x18] sm:$0xff]
    %v2286 = vld [vmem:[%s217 + $0x20] sm:$0xff]
    %v2287 = vld [vmem:[%s217 + $0x28] sm:$0xff]
    %v2288 = vld [vmem:[%s217 + $0x30] sm:$0xff]
    %v2289 = vld [vmem:[%s217 + $0x38] sm:$0xff]
    %v2290 = vld [vmem:[#allocation2] sm:$0xff]
    %v2291 = vld [vmem:[#allocation2 + $0x8] sm:$0xff]
    %v2292 = vld [vmem:[#allocation2 + $0x10] sm:$0xff]
    %v2293 = vld [vmem:[#allocation2 + $0x18] sm:$0xff]
    %v2294 = vld [vmem:[#allocation2 + $0x20] sm:$0xff]
    %v2295 = vld [vmem:[#allocation2 + $0x28] sm:$0xff]
    %v2296 = vld [vmem:[#allocation2 + $0x30] sm:$0xff]
    %v2297 = vld [vmem:[#allocation2 + $0x38] sm:$0xff]
    %v2298 = vld [vmem:[#allocation2 + $0x40] sm:$0xff]
    %v2299 = vld [vmem:[#allocation2 + $0x48] sm:$0xff]
    %v2300 = vld [vmem:[#allocation2 + $0x50] sm:$0xff]
    %v2301 = vld [vmem:[#allocation2 + $0x58] sm:$0xff]
    %v2302 = vld [vmem:[#allocation2 + $0x60] sm:$0xff]
    %v2303 = vld [vmem:[#allocation2 + $0x68] sm:$0xff]
    %v2304 = vld [vmem:[#allocation2 + $0x70] sm:$0xff]
    %v2305 = vld [vmem:[#allocation2 + $0x78] sm:$0xff]
    %2306 = vmatprep.subr.mxu0 0.0
    %2307 = vmatpush1.msra.mxu0 %v2290
    %2308 = vmatprep.subr.mxu0 0.0
    %2309 = vmatpush1.msra.mxu0 %v2291
    %2310 = vmatprep.subr.mxu0 0.0
    %2311 = vmatpush1.msra.mxu0 %v2292
    %2312 = vmatprep.subr.mxu0 0.0
    %2313 = vmatpush1.msra.mxu0 %v2293
    %2314 = vmatprep.subr.mxu0 0.0
    %2315 = vmatpush1.msra.mxu0 %v2294
    %2316 = vmatprep.subr.mxu0 0.0
    %2317 = vmatpush1.msra.mxu0 %v2295
    %2318 = vmatprep.subr.mxu0 0.0
    %2319 = vmatpush1.msra.mxu0 %v2296
    %2320 = vmatprep.subr.mxu0 0.0
    %2321 = vmatpush1.msra.mxu0 %v2297
    %2322 = vmatprep.subr.mxu0 0.0
    %2323 = vmatpush1.msra.mxu0 %v2298
    %2324 = vmatprep.subr.mxu0 0.0
    %2325 = vmatpush1.msra.mxu0 %v2299
    %2326 = vmatprep.subr.mxu0 0.0
    %2327 = vmatpush1.msra.mxu0 %v2300
    %2328 = vmatprep.subr.mxu0 0.0
    %2329 = vmatpush1.msra.mxu0 %v2301
    %2330 = vmatprep.subr.mxu0 0.0
    %2331 = vmatpush1.msra.mxu0 %v2302
    %2332 = vmatprep.subr.mxu0 0.0
    %2333 = vmatpush1.msra.mxu0 %v2303
    %2334 = vmatprep.subr.mxu0 0.0
    %2335 = vmatpush1.msra.mxu0 %v2304
    %2336 = vmatprep.subr.mxu0 0.0
    %2337 = vmatpush1.msra.mxu0 %v2305
    %2338 = vmatprep.subr.mxu0 0.0
    %2339 = vmatpush1.msra.mxu0 0.0
    %2340 = vmatprep.subr.mxu0 0.0
    %2341 = vmatpush1.msra.mxu0 0.0
    %2342 = vmatprep.subr.mxu0 0.0
    %2343 = vmatpush1.msra.mxu0 0.0
    %2344 = vmatprep.subr.mxu0 0.0
    %2345 = vmatpush1.msra.mxu0 0.0
    %2346 = vmatprep.subr.mxu0 0.0
    %2347 = vmatpush1.msra.mxu0 0.0
    %2348 = vmatprep.subr.mxu0 0.0
    %2349 = vmatpush1.msra.mxu0 0.0
    %2350 = vmatprep.subr.mxu0 0.0
    %2351 = vmatpush1.msra.mxu0 0.0
    %2352 = vmatprep.subr.mxu0 0.0
    %2353 = vmatpush1.msra.mxu0 0.0
    %2354 = vmatprep.subr.mxu0 0.0
    %2355 = vmatpush1.msra.mxu0 0.0
    %2356 = vmatprep.subr.mxu0 0.0
    %2357 = vmatpush1.msra.mxu0 0.0
    %2358 = vmatprep.subr.mxu0 0.0
    %2359 = vmatpush1.msra.mxu0 0.0
    %2360 = vmatprep.subr.mxu0 0.0
    %2361 = vmatpush1.msra.mxu0 0.0
    %2362 = vmatprep.subr.mxu0 0.0
    %2363 = vmatpush1.msra.mxu0 0.0
    %2364 = vmatprep.subr.mxu0 0.0
    %2365 = vmatpush1.msra.mxu0 0.0
    %2366 = vmatprep.subr.mxu0 0.0
    %2367 = vmatpush1.msra.mxu0 0.0
    %2368 = vmatprep.subr.mxu0 0.0
    %2369 = vmatpush1.msra.mxu0 0.0
    %2370 = vmatprep.mubr.f32.mxu0 0.0
    %2371 = vmatmul.mubr.f32.gmra.mrb[0].mxu0 %v2282
    %v2372 = vpop.f32.mrb[0].mxu0
    %v2373 = vadd.f32 0.0, %v2372
    %v2374 = vpop.f32.mrb[0].mxu0
    %2375 = vmatprep.mubr.f32.mxu0 0.0
    %2376 = vmatmul.mubr.f32.gmra.mrb[0].mxu0 %v2283
    %v2377 = vpop.f32.mrb[0].mxu0
    %v2378 = vadd.f32 0.0, %v2377
    %v2379 = vpop.f32.mrb[0].mxu0
    %2380 = vmatprep.mubr.f32.mxu0 0.0
    %2381 = vmatmul.mubr.f32.gmra.mrb[0].mxu0 %v2284
    %v2382 = vpop.f32.mrb[0].mxu0
    %v2383 = vadd.f32 0.0, %v2382
    %v2384 = vpop.f32.mrb[0].mxu0
    %2385 = vmatprep.mubr.f32.mxu0 0.0
    %2386 = vmatmul.mubr.f32.gmra.mrb[0].mxu0 %v2285
    %v2387 = vpop.f32.mrb[0].mxu0
    %v2388 = vadd.f32 0.0, %v2387
    %v2389 = vpop.f32.mrb[0].mxu0
    %2390 = vmatprep.mubr.f32.mxu0 0.0
    %2391 = vmatmul.mubr.f32.gmra.mrb[0].mxu0 %v2286
    %v2392 = vpop.f32.mrb[0].mxu0
    %v2393 = vadd.f32 0.0, %v2392
    %v2394 = vpop.f32.mrb[0].mxu0
    %2395 = vmatprep.mubr.f32.mxu0 0.0
    %2396 = vmatmul.mubr.f32.gmra.mrb[0].mxu0 %v2287
    %v2397 = vpop.f32.mrb[0].mxu0
    %v2398 = vadd.f32 0.0, %v2397
    %v2399 = vpop.f32.mrb[0].mxu0
    %2400 = vmatprep.mubr.f32.mxu0 0.0
    %2401 = vmatmul.mubr.f32.gmra.mrb[0].mxu0 %v2288
    %v2402 = vpop.f32.mrb[0].mxu0
    %v2403 = vadd.f32 0.0, %v2402
    %v2404 = vpop.f32.mrb[0].mxu0
    %2405 = vmatprep.mubr.f32.mxu0 0.0
    %2406 = vmatmul.mubr.f32.gmra.mrb[0].mxu0 %v2289
    %v2407 = vpop.f32.mrb[0].mxu0
    %v2408 = vadd.f32 0.0, %v2407
    %v2409 = vpop.f32.mrb[0].mxu0
    %2410 = vdwg.mxu0
    %2411 = vst [vmem:[#allocation3 + $0x10] sm:$0xff] %v2373
    %2412 = vst [vmem:[#allocation3 + $0x38] sm:$0xff] %v2378
    %2413 = vst [vmem:[#allocation3 + $0x60] sm:$0xff] %v2383
    %2414 = vst [vmem:[#allocation3 + $0x88] sm:$0xff] %v2388
    %2415 = vst [vmem:[#allocation3 + $0xb0] sm:$0xff] %v2393
    %2416 = vst [vmem:[#allocation3 + $0xd8] sm:$0xff] %v2398
    %2417 = vst [vmem:[#allocation3 + $0x100] sm:$0xff] %v2403
    %2418 = vst [vmem:[#allocation3 + $0x128] sm:$0xff] %v2408
    %v2419 = vld [vmem:[%s355] sm:$0xff]
    %v2420 = vld [vmem:[%s355 + $0x8] sm:$0xff]
    %v2421 = vld [vmem:[%s355 + $0x10] sm:$0xff]
    %v2422 = vld [vmem:[%s355 + $0x18] sm:$0xff]
    %v2423 = vld [vmem:[%s355 + $0x20] sm:$0xff]
    %v2424 = vld [vmem:[%s355 + $0x28] sm:$0xff]
    %v2425 = vld [vmem:[%s355 + $0x30] sm:$0xff]
    %v2426 = vld [vmem:[%s355 + $0x38] sm:$0xff]
    %v2427 = vld [vmem:[#allocation2] sm:$0xff]
    %v2428 = vld [vmem:[#allocation2 + $0x8] sm:$0xff]
    %v2429 = vld [vmem:[#allocation2 + $0x10] sm:$0xff]
    %v2430 = vld [vmem:[#allocation2 + $0x18] sm:$0xff]
    %v2431 = vld [vmem:[#allocation2 + $0x20] sm:$0xff]
    %v2432 = vld [vmem:[#allocation2 + $0x28] sm:$0xff]
    %v2433 = vld [vmem:[#allocation2 + $0x30] sm:$0xff]
    %v2434 = vld [vmem:[#allocation2 + $0x38] sm:$0xff]
    %v2435 = vld [vmem:[#allocation2 + $0x40] sm:$0xff]
    %v2436 = vld [vmem:[#allocation2 + $0x48] sm:$0xff]
    %v2437 = vld [vmem:[#allocation2 + $0x50] sm:$0xff]
    %v2438 = vld [vmem:[#allocation2 + $0x58] sm:$0xff]
    %v2439 = vld [vmem:[#allocation2 + $0x60] sm:$0xff]
    %v2440 = vld [vmem:[#allocation2 + $0x68] sm:$0xff]
    %v2441 = vld [vmem:[#allocation2 + $0x70] sm:$0xff]
    %v2442 = vld [vmem:[#allocation2 + $0x78] sm:$0xff]
    %2443 = vmatprep.subr.mxu0 0.0
    %2444 = vmatpush1.msra.mxu0 %v2427
    %2445 = vmatprep.subr.mxu0 0.0
    %2446 = vmatpush1.msra.mxu0 %v2428
    %2447 = vmatprep.subr.mxu0 0.0
    %2448 = vmatpush1.msra.mxu0 %v2429
    %2449 = vmatprep.subr.mxu0 0.0
    %2450 = vmatpush1.msra.mxu0 %v2430
    %2451 = vmatprep.subr.mxu0 0.0
    %2452 = vmatpush1.msra.mxu0 %v2431
    %2453 = vmatprep.subr.mxu0 0.0
    %2454 = vmatpush1.msra.mxu0 %v2432
    %2455 = vmatprep.subr.mxu0 0.0
    %2456 = vmatpush1.msra.mxu0 %v2433
    %2457 = vmatprep.subr.mxu0 0.0
    %2458 = vmatpush1.msra.mxu0 %v2434
    %2459 = vmatprep.subr.mxu0 0.0
    %2460 = vmatpush1.msra.mxu0 %v2435
    %2461 = vmatprep.subr.mxu0 0.0
    %2462 = vmatpush1.msra.mxu0 %v2436
    %2463 = vmatprep.subr.mxu0 0.0
    %2464 = vmatpush1.msra.mxu0 %v2437
    %2465 = vmatprep.subr.mxu0 0.0
    %2466 = vmatpush1.msra.mxu0 %v2438
    %2467 = vmatprep.subr.mxu0 0.0
    %2468 = vmatpush1.msra.mxu0 %v2439
    %2469 = vmatprep.subr.mxu0 0.0
    %2470 = vmatpush1.msra.mxu0 %v2440
    %2471 = vmatprep.subr.mxu0 0.0
    %2472 = vmatpush1.msra.mxu0 %v2441
    %2473 = vmatprep.subr.mxu0 0.0
    %2474 = vmatpush1.msra.mxu0 %v2442
    %2475 = vmatprep.subr.mxu0 0.0
    %2476 = vmatpush1.msra.mxu0 0.0
    %2477 = vmatprep.subr.mxu0 0.0
    %2478 = vmatpush1.msra.mxu0 0.0
    %2479 = vmatprep.subr.mxu0 0.0
    %2480 = vmatpush1.msra.mxu0 0.0
    %2481 = vmatprep.subr.mxu0 0.0
    %2482 = vmatpush1.msra.mxu0 0.0
    %2483 = vmatprep.subr.mxu0 0.0
    %2484 = vmatpush1.msra.mxu0 0.0
    %2485 = vmatprep.subr.mxu0 0.0
    %2486 = vmatpush1.msra.mxu0 0.0
    %2487 = vmatprep.subr.mxu0 0.0
    %2488 = vmatpush1.msra.mxu0 0.0
    %2489 = vmatprep.subr.mxu0 0.0
    %2490 = vmatpush1.msra.mxu0 0.0
    %2491 = vmatprep.subr.mxu0 0.0
    %2492 = vmatpush1.msra.mxu0 0.0
    %2493 = vmatprep.subr.mxu0 0.0
    %2494 = vmatpush1.msra.mxu0 0.0
    %2495 = vmatprep.subr.mxu0 0.0
    %2496 = vmatpush1.msra.mxu0 0.0
    %2497 = vmatprep.subr.mxu0 0.0
    %2498 = vmatpush1.msra.mxu0 0.0
    %2499 = vmatprep.subr.mxu0 0.0
    %2500 = vmatpush1.msra.mxu0 0.0
    %2501 = vmatprep.subr.mxu0 0.0
    %2502 = vmatpush1.msra.mxu0 0.0
    %2503 = vmatprep.subr.mxu0 0.0
    %2504 = vmatpush1.msra.mxu0 0.0
    %2505 = vmatprep.subr.mxu0 0.0
    %2506 = vmatpush1.msra.mxu0 0.0
    %2507 = vmatprep.mubr.f32.mxu0 0.0
    %2508 = vmatmul.mubr.f32.gmra.mrb[0].mxu0 %v2419
    %v2509 = vpop.f32.mrb[0].mxu0
    %v2510 = vadd.f32 0.0, %v2509
    %v2511 = vpop.f32.mrb[0].mxu0
    %2512 = vmatprep.mubr.f32.mxu0 0.0
    %2513 = vmatmul.mubr.f32.gmra.mrb[0].mxu0 %v2420
    %v2514 = vpop.f32.mrb[0].mxu0
    %v2515 = vadd.f32 0.0, %v2514
    %v2516 = vpop.f32.mrb[0].mxu0
    %2517 = vmatprep.mubr.f32.mxu0 0.0
    %2518 = vmatmul.mubr.f32.gmra.mrb[0].mxu0 %v2421
    %v2519 = vpop.f32.mrb[0].mxu0
    %v2520 = vadd.f32 0.0, %v2519
    %v2521 = vpop.f32.mrb[0].mxu0
    %2522 = vmatprep.mubr.f32.mxu0 0.0
    %2523 = vmatmul.mubr.f32.gmra.mrb[0].mxu0 %v2422
    %v2524 = vpop.f32.mrb[0].mxu0
    %v2525 = vadd.f32 0.0, %v2524
    %v2526 = vpop.f32.mrb[0].mxu0
    %2527 = vmatprep.mubr.f32.mxu0 0.0
    %2528 = vmatmul.mubr.f32.gmra.mrb[0].mxu0 %v2423
    %v2529 = vpop.f32.mrb[0].mxu0
    %v2530 = vadd.f32 0.0, %v2529
    %v2531 = vpop.f32.mrb[0].mxu0
    %2532 = vmatprep.mubr.f32.mxu0 0.0
    %2533 = vmatmul.mubr.f32.gmra.mrb[0].mxu0 %v2424
    %v2534 = vpop.f32.mrb[0].mxu0
    %v2535 = vadd.f32 0.0, %v2534
    %v2536 = vpop.f32.mrb[0].mxu0
    %2537 = vmatprep.mubr.f32.mxu0 0.0
    %2538 = vmatmul.mubr.f32.gmra.mrb[0].mxu0 %v2425
    %v2539 = vpop.f32.mrb[0].mxu0
    %v2540 = vadd.f32 0.0, %v2539
    %v2541 = vpop.f32.mrb[0].mxu0
    %2542 = vmatprep.mubr.f32.mxu0 0.0
    %2543 = vmatmul.mubr.f32.gmra.mrb[0].mxu0 %v2426
    %v2544 = vpop.f32.mrb[0].mxu0
    %v2545 = vadd.f32 0.0, %v2544
    %v2546 = vpop.f32.mrb[0].mxu0
    %2547 = vdwg.mxu0
    %2548 = vst [vmem:[#allocation3 + $0x18] sm:$0xff] %v2510
    %2549 = vst [vmem:[#allocation3 + $0x40] sm:$0xff] %v2515
    %2550 = vst [vmem:[#allocation3 + $0x68] sm:$0xff] %v2520
    %2551 = vst [vmem:[#allocation3 + $0x90] sm:$0xff] %v2525
    %2552 = vst [vmem:[#allocation3 + $0xb8] sm:$0xff] %v2530
    %2553 = vst [vmem:[#allocation3 + $0xe0] sm:$0xff] %v2535
    %2554 = vst [vmem:[#allocation3 + $0x108] sm:$0xff] %v2540
    %2555 = vst [vmem:[#allocation3 + $0x130] sm:$0xff] %v2545
    %v2556 = vld [vmem:[%s493] sm:$0xff]
    %v2557 = vld [vmem:[%s493 + $0x8] sm:$0xff]
    %v2558 = vld [vmem:[%s493 + $0x10] sm:$0xff]
    %v2559 = vld [vmem:[%s493 + $0x18] sm:$0xff]
    %v2560 = vld [vmem:[%s493 + $0x20] sm:$0xff]
    %v2561 = vld [vmem:[%s493 + $0x28] sm:$0xff]
    %v2562 = vld [vmem:[%s493 + $0x30] sm:$0xff]
    %v2563 = vld [vmem:[%s493 + $0x38] sm:$0xff]
    %v2564 = vld [vmem:[#allocation2] sm:$0xff]
    %v2565 = vld [vmem:[#allocation2 + $0x8] sm:$0xff]
    %v2566 = vld [vmem:[#allocation2 + $0x10] sm:$0xff]
    %v2567 = vld [vmem:[#allocation2 + $0x18] sm:$0xff]
    %v2568 = vld [vmem:[#allocation2 + $0x20] sm:$0xff]
    %v2569 = vld [vmem:[#allocation2 + $0x28] sm:$0xff]
    %v2570 = vld [vmem:[#allocation2 + $0x30] sm:$0xff]
    %v2571 = vld [vmem:[#allocation2 + $0x38] sm:$0xff]
    %v2572 = vld [vmem:[#allocation2 + $0x40] sm:$0xff]
    %v2573 = vld [vmem:[#allocation2 + $0x48] sm:$0xff]
    %v2574 = vld [vmem:[#allocation2 + $0x50] sm:$0xff]
    %v2575 = vld [vmem:[#allocation2 + $0x58] sm:$0xff]
    %v2576 = vld [vmem:[#allocation2 + $0x60] sm:$0xff]
    %v2577 = vld [vmem:[#allocation2 + $0x68] sm:$0xff]
    %v2578 = vld [vmem:[#allocation2 + $0x70] sm:$0xff]
    %v2579 = vld [vmem:[#allocation2 + $0x78] sm:$0xff]
    %2580 = vmatprep.subr.mxu0 0.0
    %2581 = vmatpush1.msra.mxu0 %v2564
    %2582 = vmatprep.subr.mxu0 0.0
    %2583 = vmatpush1.msra.mxu0 %v2565
    %2584 = vmatprep.subr.mxu0 0.0
    %2585 = vmatpush1.msra.mxu0 %v2566
    %2586 = vmatprep.subr.mxu0 0.0
    %2587 = vmatpush1.msra.mxu0 %v2567
    %2588 = vmatprep.subr.mxu0 0.0
    %2589 = vmatpush1.msra.mxu0 %v2568
    %2590 = vmatprep.subr.mxu0 0.0
    %2591 = vmatpush1.msra.mxu0 %v2569
    %2592 = vmatprep.subr.mxu0 0.0
    %2593 = vmatpush1.msra.mxu0 %v2570
    %2594 = vmatprep.subr.mxu0 0.0
    %2595 = vmatpush1.msra.mxu0 %v2571
    %2596 = vmatprep.subr.mxu0 0.0
    %2597 = vmatpush1.msra.mxu0 %v2572
    %2598 = vmatprep.subr.mxu0 0.0
    %2599 = vmatpush1.msra.mxu0 %v2573
    %2600 = vmatprep.subr.mxu0 0.0
    %2601 = vmatpush1.msra.mxu0 %v2574
    %2602 = vmatprep.subr.mxu0 0.0
    %2603 = vmatpush1.msra.mxu0 %v2575
    %2604 = vmatprep.subr.mxu0 0.0
    %2605 = vmatpush1.msra.mxu0 %v2576
    %2606 = vmatprep.subr.mxu0 0.0
    %2607 = vmatpush1.msra.mxu0 %v2577
    %2608 = vmatprep.subr.mxu0 0.0
    %2609 = vmatpush1.msra.mxu0 %v2578
    %2610 = vmatprep.subr.mxu0 0.0
    %2611 = vmatpush1.msra.mxu0 %v2579
    %2612 = vmatprep.subr.mxu0 0.0
    %2613 = vmatpush1.msra.mxu0 0.0
    %2614 = vmatprep.subr.mxu0 0.0
    %2615 = vmatpush1.msra.mxu0 0.0
    %2616 = vmatprep.subr.mxu0 0.0
    %2617 = vmatpush1.msra.mxu0 0.0
    %2618 = vmatprep.subr.mxu0 0.0
    %2619 = vmatpush1.msra.mxu0 0.0
    %2620 = vmatprep.subr.mxu0 0.0
    %2621 = vmatpush1.msra.mxu0 0.0
    %2622 = vmatprep.subr.mxu0 0.0
    %2623 = vmatpush1.msra.mxu0 0.0
    %2624 = vmatprep.subr.mxu0 0.0
    %2625 = vmatpush1.msra.mxu0 0.0
    %2626 = vmatprep.subr.mxu0 0.0
    %2627 = vmatpush1.msra.mxu0 0.0
    %2628 = vmatprep.subr.mxu0 0.0
    %2629 = vmatpush1.msra.mxu0 0.0
    %2630 = vmatprep.subr.mxu0 0.0
    %2631 = vmatpush1.msra.mxu0 0.0
    %2632 = vmatprep.subr.mxu0 0.0
    %2633 = vmatpush1.msra.mxu0 0.0
    %2634 = vmatprep.subr.mxu0 0.0
    %2635 = vmatpush1.msra.mxu0 0.0
    %2636 = vmatprep.subr.mxu0 0.0
    %2637 = vmatpush1.msra.mxu0 0.0
    %2638 = vmatprep.subr.mxu0 0.0
    %2639 = vmatpush1.msra.mxu0 0.0
    %2640 = vmatprep.subr.mxu0 0.0
    %2641 = vmatpush1.msra.mxu0 0.0
    %2642 = vmatprep.subr.mxu0 0.0
    %2643 = vmatpush1.msra.mxu0 0.0
    %2644 = vmatprep.mubr.f32.mxu0 0.0
    %2645 = vmatmul.mubr.f32.gmra.mrb[0].mxu0 %v2556
    %v2646 = vpop.f32.mrb[0].mxu0
    %v2647 = vadd.f32 0.0, %v2646
    %v2648 = vpop.f32.mrb[0].mxu0
    %2649 = vmatprep.mubr.f32.mxu0 0.0
    %2650 = vmatmul.mubr.f32.gmra.mrb[0].mxu0 %v2557
    %v2651 = vpop.f32.mrb[0].mxu0
    %v2652 = vadd.f32 0.0, %v2651
    %v2653 = vpop.f32.mrb[0].mxu0
    %2654 = vmatprep.mubr.f32.mxu0 0.0
    %2655 = vmatmul.mubr.f32.gmra.mrb[0].mxu0 %v2558
    %v2656 = vpop.f32.mrb[0].mxu0
    %v2657 = vadd.f32 0.0, %v2656
    %v2658 = vpop.f32.mrb[0].mxu0
    %2659 = vmatprep.mubr.f32.mxu0 0.0
    %2660 = vmatmul.mubr.f32.gmra.mrb[0].mxu0 %v2559
    %v2661 = vpop.f32.mrb[0].mxu0
    %v2662 = vadd.f32 0.0, %v2661
    %v2663 = vpop.f32.mrb[0].mxu0
    %2664 = vmatprep.mubr.f32.mxu0 0.0
    %2665 = vmatmul.mubr.f32.gmra.mrb[0].mxu0 %v2560
    %v2666 = vpop.f32.mrb[0].mxu0
    %v2667 = vadd.f32 0.0, %v2666
    %v2668 = vpop.f32.mrb[0].mxu0
    %2669 = vmatprep.mubr.f32.mxu0 0.0
    %2670 = vmatmul.mubr.f32.gmra.mrb[0].mxu0 %v2561
    %v2671 = vpop.f32.mrb[0].mxu0
    %v2672 = vadd.f32 0.0, %v2671
    %v2673 = vpop.f32.mrb[0].mxu0
    %2674 = vmatprep.mubr.f32.mxu0 0.0
    %2675 = vmatmul.mubr.f32.gmra.mrb[0].mxu0 %v2562
    %v2676 = vpop.f32.mrb[0].mxu0
    %v2677 = vadd.f32 0.0, %v2676
    %v2678 = vpop.f32.mrb[0].mxu0
    %2679 = vmatprep.mubr.f32.mxu0 0.0
    %2680 = vmatmul.mubr.f32.gmra.mrb[0].mxu0 %v2563
    %v2681 = vpop.f32.mrb[0].mxu0
    %v2682 = vadd.f32 0.0, %v2681
    %v2683 = vpop.f32.mrb[0].mxu0
    %2684 = vdwg.mxu0
    %2685 = vst [vmem:[#allocation3 + $0x20] sm:$0xff] %v2647
    %2686 = vst [vmem:[#allocation3 + $0x48] sm:$0xff] %v2652
    %2687 = vst [vmem:[#allocation3 + $0x70] sm:$0xff] %v2657
    %2688 = vst [vmem:[#allocation3 + $0x98] sm:$0xff] %v2662
    %2689 = vst [vmem:[#allocation3 + $0xc0] sm:$0xff] %v2667
    %2690 = vst [vmem:[#allocation3 + $0xe8] sm:$0xff] %v2672
    %2691 = vst [vmem:[#allocation3 + $0x110] sm:$0xff] %v2677
    %2692 = vst [vmem:[#allocation3 + $0x138] sm:$0xff] %v2682
    %v2693 = vld [vmem:[#allocation3] sm:$0xff]
    %v2694 = vld [vmem:[#allocation3 + $0x8] sm:$0xff]
    %v2695 = vld [vmem:[#allocation3 + $0x10] sm:$0xff]
    %v2696 = vld [vmem:[#allocation3 + $0x18] sm:$0xff]
    %v2697 = vld [vmem:[#allocation3 + $0x20] sm:$0xff]
    %v2698 = vld [vmem:[#allocation3 + $0x28] sm:$0xff]
    %v2699 = vld [vmem:[#allocation3 + $0x30] sm:$0xff]
    %v2700 = vld [vmem:[#allocation3 + $0x38] sm:$0xff]
    %v2701 = vld [vmem:[#allocation3 + $0x40] sm:$0xff]
    %v2702 = vld [vmem:[#allocation3 + $0x48] sm:$0xff]
    %v2703 = vld [vmem:[#allocation3 + $0x50] sm:$0xff]
    %v2704 = vld [vmem:[#allocation3 + $0x58] sm:$0xff]
    %v2705 = vld [vmem:[#allocation3 + $0x60] sm:$0xff]
    %v2706 = vld [vmem:[#allocation3 + $0x68] sm:$0xff]
    %v2707 = vld [vmem:[#allocation3 + $0x70] sm:$0xff]
    %v2708 = vld [vmem:[#allocation3 + $0x78] sm:$0xff]
    %v2709 = vld [vmem:[#allocation3 + $0x80] sm:$0xff]
    %v2710 = vld [vmem:[#allocation3 + $0x88] sm:$0xff]
    %v2711 = vld [vmem:[#allocation3 + $0x90] sm:$0xff]
    %v2712 = vld [vmem:[#allocation3 + $0x98] sm:$0xff]
    %v2713 = vld [vmem:[#allocation3 + $0xa0] sm:$0xff]
    %v2714 = vld [vmem:[#allocation3 + $0xa8] sm:$0xff]
    %v2715 = vld [vmem:[#allocation3 + $0xb0] sm:$0xff]
    %v2716 = vld [vmem:[#allocation3 + $0xb8] sm:$0xff]
    %v2717 = vld [vmem:[#allocation3 + $0xc0] sm:$0xff]
    %v2718 = vld [vmem:[#allocation3 + $0xc8] sm:$0xff]
    %v2719 = vld [vmem:[#allocation3 + $0xd0] sm:$0xff]
    %v2720 = vld [vmem:[#allocation3 + $0xd8] sm:$0xff]
    %v2721 = vld [vmem:[#allocation3 + $0xe0] sm:$0xff]
    %v2722 = vld [vmem:[#allocation3 + $0xe8] sm:$0xff]
    %v2723 = vld [vmem:[#allocation3 + $0xf0] sm:$0xff]
    %v2724 = vld [vmem:[#allocation3 + $0xf8] sm:$0xff]
    %v2725 = vld [vmem:[#allocation3 + $0x100] sm:$0xff]
    %v2726 = vld [vmem:[#allocation3 + $0x108] sm:$0xff]
    %v2727 = vld [vmem:[#allocation3 + $0x110] sm:$0xff]
    %v2728 = vld [vmem:[#allocation3 + $0x118] sm:$0xff]
    %v2729 = vld [vmem:[#allocation3 + $0x120] sm:$0xff]
    %v2730 = vld [vmem:[#allocation3 + $0x128] sm:$0xff]
    %v2731 = vld [vmem:[#allocation3 + $0x130] sm:$0xff]
    %v2732 = vld [vmem:[#allocation3 + $0x138] sm:$0xff]
    %s2733 = scalar_lea.vmem [#allocation4], 1280
    %v2734 = vld [vmem:[%s2733] sm:$0xff]
    %v2735 = vld [vmem:[%s2733 + $0x8] sm:$0xff]
    %v2736 = vld [vmem:[%s2733 + $0x10] sm:$0xff]
    %v2737 = vld [vmem:[%s2733 + $0x18] sm:$0xff]
    %v2738 = vld [vmem:[%s2733 + $0x20] sm:$0xff]
    %v2739 = vld [vmem:[%s2733 + $0x28] sm:$0xff]
    %v2740 = vld [vmem:[%s2733 + $0x30] sm:$0xff]
    %v2741 = vld [vmem:[%s2733 + $0x38] sm:$0xff]
    %v2742 = vld [vmem:[%s2733 + $0x40] sm:$0xff]
    %v2743 = vld [vmem:[%s2733 + $0x48] sm:$0xff]
    %v2744 = vld [vmem:[%s2733 + $0x50] sm:$0xff]
    %v2745 = vld [vmem:[%s2733 + $0x58] sm:$0xff]
    %v2746 = vld [vmem:[%s2733 + $0x60] sm:$0xff]
    %v2747 = vld [vmem:[%s2733 + $0x68] sm:$0xff]
    %v2748 = vld [vmem:[%s2733 + $0x70] sm:$0xff]
    %v2749 = vld [vmem:[%s2733 + $0x78] sm:$0xff]
    %v2750 = vld [vmem:[%s2733 + $0x80] sm:$0xff]
    %v2751 = vld [vmem:[%s2733 + $0x88] sm:$0xff]
    %v2752 = vld [vmem:[%s2733 + $0x90] sm:$0xff]
    %v2753 = vld [vmem:[%s2733 + $0x98] sm:$0xff]
    %v2754 = vld [vmem:[%s2733 + $0xa0] sm:$0xff]
    %v2755 = vld [vmem:[%s2733 + $0xa8] sm:$0xff]
    %v2756 = vld [vmem:[%s2733 + $0xb0] sm:$0xff]
    %v2757 = vld [vmem:[%s2733 + $0xb8] sm:$0xff]
    %v2758 = vld [vmem:[%s2733 + $0xc0] sm:$0xff]
    %v2759 = vld [vmem:[%s2733 + $0xc8] sm:$0xff]
    %v2760 = vld [vmem:[%s2733 + $0xd0] sm:$0xff]
    %v2761 = vld [vmem:[%s2733 + $0xd8] sm:$0xff]
    %v2762 = vld [vmem:[%s2733 + $0xe0] sm:$0xff]
    %v2763 = vld [vmem:[%s2733 + $0xe8] sm:$0xff]
    %v2764 = vld [vmem:[%s2733 + $0xf0] sm:$0xff]
    %v2765 = vld [vmem:[%s2733 + $0xf8] sm:$0xff]
    %v2766 = vld [vmem:[%s2733 + $0x100] sm:$0xff]
    %v2767 = vld [vmem:[%s2733 + $0x108] sm:$0xff]
    %v2768 = vld [vmem:[%s2733 + $0x110] sm:$0xff]
    %v2769 = vld [vmem:[%s2733 + $0x118] sm:$0xff]
    %v2770 = vld [vmem:[%s2733 + $0x120] sm:$0xff]
    %v2771 = vld [vmem:[%s2733 + $0x128] sm:$0xff]
    %v2772 = vld [vmem:[%s2733 + $0x130] sm:$0xff]
    %v2773 = vld [vmem:[%s2733 + $0x138] sm:$0xff]
    %v2774 = vld [vmem:[%s2733 + $0x140] sm:$0xff]
    %v2775 = vld [vmem:[%s2733 + $0x148] sm:$0xff]
    %v2776 = vld [vmem:[%s2733 + $0x150] sm:$0xff]
    %v2777 = vld [vmem:[%s2733 + $0x158] sm:$0xff]
    %v2778 = vld [vmem:[%s2733 + $0x160] sm:$0xff]
    %v2779 = vld [vmem:[%s2733 + $0x168] sm:$0xff]
    %v2780 = vld [vmem:[%s2733 + $0x170] sm:$0xff]
    %v2781 = vld [vmem:[%s2733 + $0x178] sm:$0xff]
    %v2782 = vld [vmem:[%s2733 + $0x180] sm:$0xff]
    %v2783 = vld [vmem:[%s2733 + $0x188] sm:$0xff]
    %v2784 = vld [vmem:[%s2733 + $0x190] sm:$0xff]
    %v2785 = vld [vmem:[%s2733 + $0x198] sm:$0xff]
    %v2786 = vld [vmem:[%s2733 + $0x1a0] sm:$0xff]
    %v2787 = vld [vmem:[%s2733 + $0x1a8] sm:$0xff]
    %v2788 = vld [vmem:[%s2733 + $0x1b0] sm:$0xff]
    %v2789 = vld [vmem:[%s2733 + $0x1b8] sm:$0xff]
    %v2790 = vld [vmem:[%s2733 + $0x1c0] sm:$0xff]
    %v2791 = vld [vmem:[%s2733 + $0x1c8] sm:$0xff]
    %v2792 = vld [vmem:[%s2733 + $0x1d0] sm:$0xff]
    %v2793 = vld [vmem:[%s2733 + $0x1d8] sm:$0xff]
    %v2794 = vld [vmem:[%s2733 + $0x1e0] sm:$0xff]
    %v2795 = vld [vmem:[%s2733 + $0x1e8] sm:$0xff]
    %v2796 = vld [vmem:[%s2733 + $0x1f0] sm:$0xff]
    %v2797 = vld [vmem:[%s2733 + $0x1f8] sm:$0xff]
    %v2798 = vld [vmem:[%s2733 + $0x200] sm:$0xff]
    %v2799 = vld [vmem:[%s2733 + $0x208] sm:$0xff]
    %v2800 = vld [vmem:[%s2733 + $0x210] sm:$0xff]
    %v2801 = vld [vmem:[%s2733 + $0x218] sm:$0xff]
    %v2802 = vld [vmem:[%s2733 + $0x220] sm:$0xff]
    %v2803 = vld [vmem:[%s2733 + $0x228] sm:$0xff]
    %v2804 = vld [vmem:[%s2733 + $0x230] sm:$0xff]
    %v2805 = vld [vmem:[%s2733 + $0x238] sm:$0xff]
    %v2806 = vld [vmem:[%s2733 + $0x240] sm:$0xff]
    %v2807 = vld [vmem:[%s2733 + $0x248] sm:$0xff]
    %v2808 = vld [vmem:[%s2733 + $0x250] sm:$0xff]
    %v2809 = vld [vmem:[%s2733 + $0x258] sm:$0xff]
    %v2810 = vld [vmem:[%s2733 + $0x260] sm:$0xff]
    %v2811 = vld [vmem:[%s2733 + $0x268] sm:$0xff]
    %v2812 = vld [vmem:[%s2733 + $0x270] sm:$0xff]
    %v2813 = vld [vmem:[%s2733 + $0x278] sm:$0xff]
    %s2814 = scalar_lea.vmem %s3, 2
    %v2815 = vld [vmem:[%s2814] sm:$0x1]
    %v2817 = vlaneseq
    %v2818 = vshrl.u32 %v2817, 7
    %v2819 = vsub.s32 0, %v2818
    %v2820 = vrot.slane %v2815, %v2819
    %2822 = vmatprep.subr.mxu0 0.0
    %2823 = vmatpush1.msra.mxu0 %v2734
    %2824 = vmatprep.subr.mxu0 0.0
    %2825 = vmatpush1.msra.mxu0 %v2735
    %2826 = vmatprep.subr.mxu0 0.0
    %2827 = vmatpush1.msra.mxu0 %v2736
    %2828 = vmatprep.subr.mxu0 0.0
    %2829 = vmatpush1.msra.mxu0 %v2737
    %2830 = vmatprep.subr.mxu0 0.0
    %2831 = vmatpush1.msra.mxu0 %v2738
    %2832 = vmatprep.subr.mxu0 0.0
    %2833 = vmatpush1.msra.mxu0 %v2739
    %2834 = vmatprep.subr.mxu0 0.0
    %2835 = vmatpush1.msra.mxu0 %v2740
    %2836 = vmatprep.subr.mxu0 0.0
    %2837 = vmatpush1.msra.mxu0 %v2741
    %2838 = vmatprep.subr.mxu0 0.0
    %2839 = vmatpush1.msra.mxu0 %v2742
    %2840 = vmatprep.subr.mxu0 0.0
    %2841 = vmatpush1.msra.mxu0 %v2743
    %2842 = vmatprep.subr.mxu0 0.0
    %2843 = vmatpush1.msra.mxu0 %v2744
    %2844 = vmatprep.subr.mxu0 0.0
    %2845 = vmatpush1.msra.mxu0 %v2745
    %2846 = vmatprep.subr.mxu0 0.0
    %2847 = vmatpush1.msra.mxu0 %v2746
    %2848 = vmatprep.subr.mxu0 0.0
    %2849 = vmatpush1.msra.mxu0 %v2747
    %2850 = vmatprep.subr.mxu0 0.0
    %2851 = vmatpush1.msra.mxu0 %v2748
    %2852 = vmatprep.subr.mxu0 0.0
    %2853 = vmatpush1.msra.mxu0 %v2749
    %2854 = vmatprep.subr.mxu0 0.0
    %2855 = vmatpush1.msra.mxu0 %v2750
    %2856 = vmatprep.subr.mxu0 0.0
    %2857 = vmatpush1.msra.mxu0 %v2751
    %2858 = vmatprep.subr.mxu0 0.0
    %2859 = vmatpush1.msra.mxu0 %v2752
    %2860 = vmatprep.subr.mxu0 0.0
    %2861 = vmatpush1.msra.mxu0 %v2753
    %2862 = vmatprep.subr.mxu0 0.0
    %2863 = vmatpush1.msra.mxu0 %v2754
    %2864 = vmatprep.subr.mxu0 0.0
    %2865 = vmatpush1.msra.mxu0 %v2755
    %2866 = vmatprep.subr.mxu0 0.0
    %2867 = vmatpush1.msra.mxu0 %v2756
    %2868 = vmatprep.subr.mxu0 0.0
    %2869 = vmatpush1.msra.mxu0 %v2757
    %2870 = vmatprep.subr.mxu0 0.0
    %2871 = vmatpush1.msra.mxu0 %v2758
    %2872 = vmatprep.subr.mxu0 0.0
    %2873 = vmatpush1.msra.mxu0 %v2759
    %2874 = vmatprep.subr.mxu0 0.0
    %2875 = vmatpush1.msra.mxu0 %v2760
    %2876 = vmatprep.subr.mxu0 0.0
    %2877 = vmatpush1.msra.mxu0 %v2761
    %2878 = vmatprep.subr.mxu0 0.0
    %2879 = vmatpush1.msra.mxu0 %v2762
    %2880 = vmatprep.subr.mxu0 0.0
    %2881 = vmatpush1.msra.mxu0 %v2763
    %2882 = vmatprep.subr.mxu0 0.0
    %2883 = vmatpush1.msra.mxu0 %v2764
    %2884 = vmatprep.subr.mxu0 0.0
    %2885 = vmatpush1.msra.mxu0 %v2765
    %2886 = vmatprep.mubr.f32.mxu0 %v2694
    %2887 = vmatmul.mubr.f32.gmra.mrb[0].mxu0 %v2693
    %v2888 = vpop.f32.mrb[0].mxu0
    %v2889 = vadd.f32 %v2820, %v2888
    %v2890 = vpop.f32.mrb[0].mxu0
    %2891 = vmatprep.mubr.f32.mxu0 %v2699
    %2892 = vmatmul.mubr.f32.gmra.mrb[0].mxu0 %v2698
    %v2893 = vpop.f32.mrb[0].mxu0
    %v2894 = vadd.f32 %v2820, %v2893
    %v2895 = vpop.f32.mrb[0].mxu0
    %2896 = vmatprep.mubr.f32.mxu0 %v2704
    %2897 = vmatmul.mubr.f32.gmra.mrb[0].mxu0 %v2703
    %v2898 = vpop.f32.mrb[0].mxu0
    %v2899 = vadd.f32 %v2820, %v2898
    %v2900 = vpop.f32.mrb[0].mxu0
    %2901 = vmatprep.mubr.f32.mxu0 %v2709
    %2902 = vmatmul.mubr.f32.gmra.mrb[0].mxu0 %v2708
    %v2903 = vpop.f32.mrb[0].mxu0
    %v2904 = vadd.f32 %v2820, %v2903
    %v2905 = vpop.f32.mrb[0].mxu0
    %2906 = vmatprep.mubr.f32.mxu0 %v2714
    %2907 = vmatmul.mubr.f32.gmra.mrb[0].mxu0 %v2713
    %v2908 = vpop.f32.mrb[0].mxu0
    %v2909 = vadd.f32 %v2820, %v2908
    %v2910 = vpop.f32.mrb[0].mxu0
    %2911 = vmatprep.mubr.f32.mxu0 %v2719
    %2912 = vmatmul.mubr.f32.gmra.mrb[0].mxu0 %v2718
    %v2913 = vpop.f32.mrb[0].mxu0
    %v2914 = vadd.f32 %v2820, %v2913
    %v2915 = vpop.f32.mrb[0].mxu0
    %2916 = vmatprep.mubr.f32.mxu0 %v2724
    %2917 = vmatmul.mubr.f32.gmra.mrb[0].mxu0 %v2723
    %v2918 = vpop.f32.mrb[0].mxu0
    %v2919 = vadd.f32 %v2820, %v2918
    %v2920 = vpop.f32.mrb[0].mxu0
    %2921 = vmatprep.mubr.f32.mxu0 %v2729
    %2922 = vmatmul.mubr.f32.gmra.mrb[0].mxu0 %v2728
    %v2923 = vpop.f32.mrb[0].mxu0
    %v2924 = vadd.f32 %v2820, %v2923
    %v2925 = vpop.f32.mrb[0].mxu0
    %2926 = vdwg.mxu0
    %2927 = vmatprep.subr.mxu0 0.0
    %2928 = vmatpush1.msra.mxu0 %v2766
    %2929 = vmatprep.subr.mxu0 0.0
    %2930 = vmatpush1.msra.mxu0 %v2767
    %2931 = vmatprep.subr.mxu0 0.0
    %2932 = vmatpush1.msra.mxu0 %v2768
    %2933 = vmatprep.subr.mxu0 0.0
    %2934 = vmatpush1.msra.mxu0 %v2769
    %2935 = vmatprep.subr.mxu0 0.0
    %2936 = vmatpush1.msra.mxu0 %v2770
    %2937 = vmatprep.subr.mxu0 0.0
    %2938 = vmatpush1.msra.mxu0 %v2771
    %2939 = vmatprep.subr.mxu0 0.0
    %2940 = vmatpush1.msra.mxu0 %v2772
    %2941 = vmatprep.subr.mxu0 0.0
    %2942 = vmatpush1.msra.mxu0 %v2773
    %2943 = vmatprep.subr.mxu0 0.0
    %2944 = vmatpush1.msra.mxu0 %v2774
    %2945 = vmatprep.subr.mxu0 0.0
    %2946 = vmatpush1.msra.mxu0 %v2775
    %2947 = vmatprep.subr.mxu0 0.0
    %2948 = vmatpush1.msra.mxu0 %v2776
    %2949 = vmatprep.subr.mxu0 0.0
    %2950 = vmatpush1.msra.mxu0 %v2777
    %2951 = vmatprep.subr.mxu0 0.0
    %2952 = vmatpush1.msra.mxu0 %v2778
    %2953 = vmatprep.subr.mxu0 0.0
    %2954 = vmatpush1.msra.mxu0 %v2779
    %2955 = vmatprep.subr.mxu0 0.0
    %2956 = vmatpush1.msra.mxu0 %v2780
    %2957 = vmatprep.subr.mxu0 0.0
    %2958 = vmatpush1.msra.mxu0 %v2781
    %2959 = vmatprep.subr.mxu0 0.0
    %2960 = vmatpush1.msra.mxu0 %v2782
    %2961 = vmatprep.subr.mxu0 0.0
    %2962 = vmatpush1.msra.mxu0 %v2783
    %2963 = vmatprep.subr.mxu0 0.0
    %2964 = vmatpush1.msra.mxu0 %v2784
    %2965 = vmatprep.subr.mxu0 0.0
    %2966 = vmatpush1.msra.mxu0 %v2785
    %2967 = vmatprep.subr.mxu0 0.0
    %2968 = vmatpush1.msra.mxu0 %v2786
    %2969 = vmatprep.subr.mxu0 0.0
    %2970 = vmatpush1.msra.mxu0 %v2787
    %2971 = vmatprep.subr.mxu0 0.0
    %2972 = vmatpush1.msra.mxu0 %v2788
    %2973 = vmatprep.subr.mxu0 0.0
    %2974 = vmatpush1.msra.mxu0 %v2789
    %2975 = vmatprep.subr.mxu0 0.0
    %2976 = vmatpush1.msra.mxu0 %v2790
    %2977 = vmatprep.subr.mxu0 0.0
    %2978 = vmatpush1.msra.mxu0 %v2791
    %2979 = vmatprep.subr.mxu0 0.0
    %2980 = vmatpush1.msra.mxu0 %v2792
    %2981 = vmatprep.subr.mxu0 0.0
    %2982 = vmatpush1.msra.mxu0 %v2793
    %2983 = vmatprep.subr.mxu0 0.0
    %2984 = vmatpush1.msra.mxu0 %v2794
    %2985 = vmatprep.subr.mxu0 0.0
    %2986 = vmatpush1.msra.mxu0 %v2795
    %2987 = vmatprep.subr.mxu0 0.0
    %2988 = vmatpush1.msra.mxu0 %v2796
    %2989 = vmatprep.subr.mxu0 0.0
    %2990 = vmatpush1.msra.mxu0 %v2797
    %2991 = vmatprep.mubr.f32.mxu0 %v2696
    %2992 = vmatmul.mubr.f32.gmra.mrb[0].mxu0 %v2695
    %v2993 = vpop.f32.mrb[0].mxu0
    %v2994 = vadd.f32 %v2889, %v2993
    %v2995 = vpop.f32.mrb[0].mxu0
    %2996 = vmatprep.mubr.f32.mxu0 %v2701
    %2997 = vmatmul.mubr.f32.gmra.mrb[0].mxu0 %v2700
    %v2998 = vpop.f32.mrb[0].mxu0
    %v2999 = vadd.f32 %v2894, %v2998
    %v3000 = vpop.f32.mrb[0].mxu0
    %3001 = vmatprep.mubr.f32.mxu0 %v2706
    %3002 = vmatmul.mubr.f32.gmra.mrb[0].mxu0 %v2705
    %v3003 = vpop.f32.mrb[0].mxu0
    %v3004 = vadd.f32 %v2899, %v3003
    %v3005 = vpop.f32.mrb[0].mxu0
    %3006 = vmatprep.mubr.f32.mxu0 %v2711
    %3007 = vmatmul.mubr.f32.gmra.mrb[0].mxu0 %v2710
    %v3008 = vpop.f32.mrb[0].mxu0
    %v3009 = vadd.f32 %v2904, %v3008
    %v3010 = vpop.f32.mrb[0].mxu0
    %3011 = vmatprep.mubr.f32.mxu0 %v2716
    %3012 = vmatmul.mubr.f32.gmra.mrb[0].mxu0 %v2715
    %v3013 = vpop.f32.mrb[0].mxu0
    %v3014 = vadd.f32 %v2909, %v3013
    %v3015 = vpop.f32.mrb[0].mxu0
    %3016 = vmatprep.mubr.f32.mxu0 %v2721
    %3017 = vmatmul.mubr.f32.gmra.mrb[0].mxu0 %v2720
    %v3018 = vpop.f32.mrb[0].mxu0
    %v3019 = vadd.f32 %v2914, %v3018
    %v3020 = vpop.f32.mrb[0].mxu0
    %3021 = vmatprep.mubr.f32.mxu0 %v2726
    %3022 = vmatmul.mubr.f32.gmra.mrb[0].mxu0 %v2725
    %v3023 = vpop.f32.mrb[0].mxu0
    %v3024 = vadd.f32 %v2919, %v3023
    %v3025 = vpop.f32.mrb[0].mxu0
    %3026 = vmatprep.mubr.f32.mxu0 %v2731
    %3027 = vmatmul.mubr.f32.gmra.mrb[0].mxu0 %v2730
    %v3028 = vpop.f32.mrb[0].mxu0
    %v3029 = vadd.f32 %v2924, %v3028
    %v3030 = vpop.f32.mrb[0].mxu0
    %3031 = vdwg.mxu0
    %3032 = vmatprep.subr.mxu0 0.0
    %3033 = vmatpush1.msra.mxu0 %v2798
    %3034 = vmatprep.subr.mxu0 0.0
    %3035 = vmatpush1.msra.mxu0 %v2799
    %3036 = vmatprep.subr.mxu0 0.0
    %3037 = vmatpush1.msra.mxu0 %v2800
    %3038 = vmatprep.subr.mxu0 0.0
    %3039 = vmatpush1.msra.mxu0 %v2801
    %3040 = vmatprep.subr.mxu0 0.0
    %3041 = vmatpush1.msra.mxu0 %v2802
    %3042 = vmatprep.subr.mxu0 0.0
    %3043 = vmatpush1.msra.mxu0 %v2803
    %3044 = vmatprep.subr.mxu0 0.0
    %3045 = vmatpush1.msra.mxu0 %v2804
    %3046 = vmatprep.subr.mxu0 0.0
    %3047 = vmatpush1.msra.mxu0 %v2805
    %3048 = vmatprep.subr.mxu0 0.0
    %3049 = vmatpush1.msra.mxu0 %v2806
    %3050 = vmatprep.subr.mxu0 0.0
    %3051 = vmatpush1.msra.mxu0 %v2807
    %3052 = vmatprep.subr.mxu0 0.0
    %3053 = vmatpush1.msra.mxu0 %v2808
    %3054 = vmatprep.subr.mxu0 0.0
    %3055 = vmatpush1.msra.mxu0 %v2809
    %3056 = vmatprep.subr.mxu0 0.0
    %3057 = vmatpush1.msra.mxu0 %v2810
    %3058 = vmatprep.subr.mxu0 0.0
    %3059 = vmatpush1.msra.mxu0 %v2811
    %3060 = vmatprep.subr.mxu0 0.0
    %3061 = vmatpush1.msra.mxu0 %v2812
    %3062 = vmatprep.subr.mxu0 0.0
    %3063 = vmatpush1.msra.mxu0 %v2813
    %3064 = vmatprep.subr.mxu0 0.0
    %3065 = vmatpush1.msra.mxu0 0.0
    %3066 = vmatprep.subr.mxu0 0.0
    %3067 = vmatpush1.msra.mxu0 0.0
    %3068 = vmatprep.subr.mxu0 0.0
    %3069 = vmatpush1.msra.mxu0 0.0
    %3070 = vmatprep.subr.mxu0 0.0
    %3071 = vmatpush1.msra.mxu0 0.0
    %3072 = vmatprep.subr.mxu0 0.0
    %3073 = vmatpush1.msra.mxu0 0.0
    %3074 = vmatprep.subr.mxu0 0.0
    %3075 = vmatpush1.msra.mxu0 0.0
    %3076 = vmatprep.subr.mxu0 0.0
    %3077 = vmatpush1.msra.mxu0 0.0
    %3078 = vmatprep.subr.mxu0 0.0
    %3079 = vmatpush1.msra.mxu0 0.0
    %3080 = vmatprep.subr.mxu0 0.0
    %3081 = vmatpush1.msra.mxu0 0.0
    %3082 = vmatprep.subr.mxu0 0.0
    %3083 = vmatpush1.msra.mxu0 0.0
    %3084 = vmatprep.subr.mxu0 0.0
    %3085 = vmatpush1.msra.mxu0 0.0
    %3086 = vmatprep.subr.mxu0 0.0
    %3087 = vmatpush1.msra.mxu0 0.0
    %3088 = vmatprep.subr.mxu0 0.0
    %3089 = vmatpush1.msra.mxu0 0.0
    %3090 = vmatprep.subr.mxu0 0.0
    %3091 = vmatpush1.msra.mxu0 0.0
    %3092 = vmatprep.subr.mxu0 0.0
    %3093 = vmatpush1.msra.mxu0 0.0
    %3094 = vmatprep.subr.mxu0 0.0
    %3095 = vmatpush1.msra.mxu0 0.0
    %3096 = vmatprep.mubr.f32.mxu0 0.0
    %3097 = vmatmul.mubr.f32.gmra.mrb[0].mxu0 %v2697
    %v3098 = vpop.f32.mrb[0].mxu0
    %v3099 = vadd.f32 %v2994, %v3098
    %v3100 = vpop.f32.mrb[0].mxu0
    %3101 = vmatprep.mubr.f32.mxu0 0.0
    %3102 = vmatmul.mubr.f32.gmra.mrb[0].mxu0 %v2702
    %v3103 = vpop.f32.mrb[0].mxu0
    %v3104 = vadd.f32 %v2999, %v3103
    %v3105 = vpop.f32.mrb[0].mxu0
    %3106 = vmatprep.mubr.f32.mxu0 0.0
    %3107 = vmatmul.mubr.f32.gmra.mrb[0].mxu0 %v2707
    %v3108 = vpop.f32.mrb[0].mxu0
    %v3109 = vadd.f32 %v3004, %v3108
    %v3110 = vpop.f32.mrb[0].mxu0
    %3111 = vmatprep.mubr.f32.mxu0 0.0
    %3112 = vmatmul.mubr.f32.gmra.mrb[0].mxu0 %v2712
    %v3113 = vpop.f32.mrb[0].mxu0
    %v3114 = vadd.f32 %v3009, %v3113
    %v3115 = vpop.f32.mrb[0].mxu0
    %3116 = vmatprep.mubr.f32.mxu0 0.0
    %3117 = vmatmul.mubr.f32.gmra.mrb[0].mxu0 %v2717
    %v3118 = vpop.f32.mrb[0].mxu0
    %v3119 = vadd.f32 %v3014, %v3118
    %v3120 = vpop.f32.mrb[0].mxu0
    %3121 = vmatprep.mubr.f32.mxu0 0.0
    %3122 = vmatmul.mubr.f32.gmra.mrb[0].mxu0 %v2722
    %v3123 = vpop.f32.mrb[0].mxu0
    %v3124 = vadd.f32 %v3019, %v3123
    %v3125 = vpop.f32.mrb[0].mxu0
    %3126 = vmatprep.mubr.f32.mxu0 0.0
    %3127 = vmatmul.mubr.f32.gmra.mrb[0].mxu0 %v2727
    %v3128 = vpop.f32.mrb[0].mxu0
    %v3129 = vadd.f32 %v3024, %v3128
    %v3130 = vpop.f32.mrb[0].mxu0
    %3131 = vmatprep.mubr.f32.mxu0 0.0
    %3132 = vmatmul.mubr.f32.gmra.mrb[0].mxu0 %v2732
    %v3133 = vpop.f32.mrb[0].mxu0
    %v3134 = vadd.f32 %v3029, %v3133
    %v3135 = vpop.f32.mrb[0].mxu0
    %3136 = vdwg.mxu0
    %v3137 = vmul.f32 %v3099, 0.01
    %v3138 = vmul.f32 %v3104, 0.01
    %v3139 = vmul.f32 %v3109, 0.01
    %v3140 = vmul.f32 %v3114, 0.01
    %v3141 = vmul.f32 %v3119, 0.01
    %v3142 = vmul.f32 %v3124, 0.01
    %v3143 = vmul.f32 %v3129, 0.01
    %v3144 = vmul.f32 %v3134, 0.01
    %v3145 = vmax.f32 %v3099, %v3137
    %v3146 = vmax.f32 %v3104, %v3138
    %v3147 = vmax.f32 %v3109, %v3139
    %v3148 = vmax.f32 %v3114, %v3140
    %v3149 = vmax.f32 %v3119, %v3141
    %v3150 = vmax.f32 %v3124, %v3142
    %v3151 = vmax.f32 %v3129, %v3143
    %v3152 = vmax.f32 %v3134, %v3144
    %3153 = vst [vmem:[#allocation7] sm:$0xff] %v3145
    %3154 = vst [vmem:[#allocation7 + $0x8] sm:$0xff] %v3146
    %3155 = vst [vmem:[#allocation7 + $0x10] sm:$0xff] %v3147
    %3156 = vst [vmem:[#allocation7 + $0x18] sm:$0xff] %v3148
    %3157 = vst [vmem:[#allocation7 + $0x20] sm:$0xff] %v3149
    %3158 = vst [vmem:[#allocation7 + $0x28] sm:$0xff] %v3150
    %3159 = vst [vmem:[#allocation7 + $0x30] sm:$0xff] %v3151
    %3160 = vst [vmem:[#allocation7 + $0x38] sm:$0xff] %v3152
    // Predicated region
    $region22: #{rgcn_forward_pallas.1} parent=1 // pred_check
      _
    $region23: #{rgcn_forward_pallas.1} parent=1 // pred_check_branch
      %3162 = sbr.rel (0) target = $region25
    $region24: #{rgcn_forward_pallas.1} parent=1 // pred_region
      %s3164 = ssub.s32 1024, 1024
      %3165 = vsyncadd [#allocation6], %s3164
      %s3166 = sshll.u32 [#allocation7], 4
      %s3167 = int_to_ptr.vmem [resolvable:$true] %s3166
      %3172 = dma.vmem_to_hbm [thread:$0]  %s3167, 1024, %s4, [#allocation6], 128, 128, 8
    $region25: #{rgcn_forward_pallas.1} parent=1 // pred_fallthru
      _
    // Predicated region
    $region26: #{rgcn_forward_pallas.1} parent=1 // pred_check
      _
    $region27: #{rgcn_forward_pallas.1} parent=1 // pred_check_branch
      %3174 = sbr.rel (0) target = $region29
    $region28: #{rgcn_forward_pallas.1} parent=1 // pred_region
      %3175 = dma.done [#allocation6], 1024
    $region29: #{rgcn_forward_pallas.1} parent=1 // pred_fallthru
      _
    %3176 = vsyncpa [#allocation5], 1
    %3177 = vsyncpa [#allocation6], 1

</llo_original>
